<compile_context>
chip_gen: v5e
topology: v5e:2x2
jax: 0.10.0
libtpu: 0.0.40
codegen_flags: <defaults>
</compile_context>

<pallas_src>
import math
import functools

import jax
import jax.numpy as jnp
from jax.experimental import pallas as pl
from jax.experimental.pallas import tpu as pltpu


def _round_up(x, m):
    return (x + m - 1) // m * m


# ----------------------------- tiled linear (MXU) ---------------------------

def _linear_kernel(x_ref, w_ref, b_ref, o_ref, acc_ref, *, activation):
    @pl.when(pl.program_id(2) == 0)
    def _():
        acc_ref[...] = jnp.zeros_like(acc_ref)

    acc_ref[...] += jnp.dot(x_ref[...], w_ref[...],
                            preferred_element_type=jnp.float32)

    @pl.when(pl.program_id(2) == pl.num_programs(2) - 1)
    def _():
        y = acc_ref[...] + b_ref[...]
        if activation == "relu":
            y = jnp.maximum(y, 0.0)
        o_ref[...] = y.astype(o_ref.dtype)


def _linear_ln_kernel(x_ref, w_ref, b_ref, r_ref, g_ref, bt_ref, o_ref, acc_ref,
                      *, n_valid, eps, masked):
    """Matmul with LayerNorm(x@W + b + residual) fused into the final-K epilogue."""
    @pl.when(pl.program_id(2) == 0)
    def _():
        acc_ref[...] = jnp.zeros_like(acc_ref)

    acc_ref[...] += jnp.dot(x_ref[...], w_ref[...],
                            preferred_element_type=jnp.float32)

    @pl.when(pl.program_id(2) == pl.num_programs(2) - 1)
    def _():
        y = acc_ref[...] + b_ref[...] + r_ref[...]
        if masked:   # N padded to a 128-multiple: exclude pad columns from the stats
            col = jax.lax.broadcasted_iota(jnp.int32, y.shape, 1)
            msk = (col < n_valid).astype(jnp.float32)
            mu = jnp.sum(y * msk, axis=-1, keepdims=True) / n_valid
            d = (y - mu) * msk
        else:
            mu = jnp.mean(y, axis=-1, keepdims=True)
            d = y - mu
        var = jnp.sum(d * d, axis=-1, keepdims=True) / n_valid
        o = d * jax.lax.rsqrt(var + eps) * g_ref[...] + bt_ref[...]
        o_ref[...] = o.astype(o_ref.dtype)


_LN_FUSE_MAX_N = 2048   # fused add+LN epilogue needs the whole row in one N tile


def linear(x2d, w, b, *, activation=None, out_dtype=jnp.float32,
           residual=None, ln_gamma=None, ln_beta=None, ln_eps=1e-5):
    """y = act(x @ w + b), optionally fused with LayerNorm(y + residual).

    bf16 matmul operands (weights are expected to be pre-cast via prepare_params so the
    forward never re-reads/casts f32 weights), f32 VMEM accumulator, lane-dense tiles.
    Pads only when shapes are not already tile-aligned; slices back only when padded.
    """
    M, K = x2d.shape
    N = w.shape[1]
    fuse_ln = residual is not None

    tm = min(256, _round_up(M, 8))
    tk = min(512, _round_up(K, 128))
    if fuse_ln:
        tn = _round_up(N, 128)
        if tn > _LN_FUSE_MAX_N:
            # row too wide for one tile: plain matmul + standalone add+LN kernel
            y = linear(x2d, w, b, activation=activation, out_dtype=jnp.float32)
            return add_layer_norm(y, residual, ln_gamma, ln_beta, eps=ln_eps)
    else:
        tn = min(512, _round_up(N, 128))
    Mp, Kp, Np = _round_up(M, tm), _round_up(K, tk), _round_up(N, tn)

    xb = x2d if x2d.dtype == jnp.bfloat16 else x2d.astype(jnp.bfloat16)
    wb = w if w.dtype == jnp.bfloat16 else w.astype(jnp.bfloat16)
    if (Mp, Kp) != (M, K):
        xb = jnp.pad(xb, ((0, Mp - M), (0, Kp - K)))
    if (Kp, Np) != (K, N):
        wb = jnp.pad(wb, ((0, Kp - K), (0, Np - N)))
    bb = b.astype(jnp.float32)
    if Np != N:
        bb = jnp.pad(bb, (0, Np - N))
    bb = bb.reshape(1, Np)

    grid = (Mp // tm, Np // tn, Kp // tk)
    cparams = pltpu.CompilerParams(
        dimension_semantics=("parallel", "parallel", "arbitrary"))

    if fuse_ln:
        r = residual.astype(jnp.float32)
        if (Mp, Np) != (M, N):
            r = jnp.pad(r, ((0, Mp - M), (0, Np - N)))
        g = ln_gamma.astype(jnp.float32)
        bt = ln_beta.astype(jnp.float32)
        if Np != N:
            g = jnp.pad(g, (0, Np - N))
            bt = jnp.pad(bt, (0, Np - N))
        g = g.reshape(1, Np)
        bt = bt.reshape(1, Np)
        out = pl.pallas_call(
            functools.partial(_linear_ln_kernel, n_valid=N, eps=ln_eps,
                              masked=(Np != N)),
            out_shape=jax.ShapeDtypeStruct((Mp, Np), jnp.float32),
            grid=grid,
            in_specs=[
                pl.BlockSpec((tm, tk), lambda i, j, k: (i, k)),
                pl.BlockSpec((tk, tn), lambda i, j, k: (k, j)),
                pl.BlockSpec((1, tn), lambda i, j, k: (0, j)),
                pl.BlockSpec((tm, tn), lambda i, j, k: (i, j)),
                pl.BlockSpec((1, tn), lambda i, j, k: (0, j)),
                pl.BlockSpec((1, tn), lambda i, j, k: (0, j)),
            ],
            out_specs=pl.BlockSpec((tm, tn), lambda i, j, k: (i, j)),
            scratch_shapes=[pltpu.VMEM((tm, tn), jnp.float32)],
            compiler_params=cparams,
        )(xb, wb, bb, r, g, bt)
    else:
        out = pl.pallas_call(
            functools.partial(_linear_kernel, activation=activation),
            out_shape=jax.ShapeDtypeStruct((Mp, Np), out_dtype),
            grid=grid,
            in_specs=[
                pl.BlockSpec((tm, tk), lambda i, j, k: (i, k)),
                pl.BlockSpec((tk, tn), lambda i, j, k: (k, j)),
                pl.BlockSpec((1, tn), lambda i, j, k: (0, j)),
            ],
            out_specs=pl.BlockSpec((tm, tn), lambda i, j, k: (i, j)),
            scratch_shapes=[pltpu.VMEM((tm, tn), jnp.float32)],
            compiler_params=cparams,
        )(xb, wb, bb)

    if (Mp, Np) != (M, N):
        out = out[:M, :N]
    return out


# ---------------------- standalone add + LayerNorm (fallback) ----------------

def _add_layernorm_kernel(x_ref, r_ref, g_ref, b_ref, o_ref, *, eps):
    x = x_ref[...] + r_ref[...]
    mu = jnp.mean(x, axis=-1, keepdims=True)
    var = jnp.mean(jnp.square(x - mu), axis=-1, keepdims=True)
    o_ref[...] = (x - mu) * jax.lax.rsqrt(var + eps) * g_ref[...] + b_ref[...]


def add_layer_norm(x2d, res2d, gamma, beta, eps=1e-5):
    """LayerNorm(x + residual); only used when E does not fit a single N tile."""
    M, D = x2d.shape
    tm = min(256, _round_up(M, 8))
    Mp = _round_up(M, tm)
    x = x2d.astype(jnp.float32)
    r = res2d.astype(jnp.float32)
    if Mp != M:
        x = jnp.pad(x, ((0, Mp - M), (0, 0)))
        r = jnp.pad(r, ((0, Mp - M), (0, 0)))
    out = pl.pallas_call(
        functools.partial(_add_layernorm_kernel, eps=eps),
        out_shape=jax.ShapeDtypeStruct((Mp, D), jnp.float32),
        grid=(Mp // tm,),
        in_specs=[
            pl.BlockSpec((tm, D), lambda i: (i, 0)),
            pl.BlockSpec((tm, D), lambda i: (i, 0)),
            pl.BlockSpec((1, D), lambda i: (0, 0)),
            pl.BlockSpec((1, D), lambda i: (0, 0)),
        ],
        out_specs=pl.BlockSpec((tm, D), lambda i: (i, 0)),
        compiler_params=pltpu.CompilerParams(dimension_semantics=("parallel",)),
    )(x, r, gamma.reshape(1, D), beta.reshape(1, D))
    return out[:M] if Mp != M else out


# ----------------------- flash attention (online softmax) --------------------

_Q_TILE = 256    # rows of Q per grid step (second "parallel" axis; helps v7x's 2 TCs)
_KV_TILE = 512   # flash tile over keys/values; caps live softmax intermediates


def _flash_attn_kernel(q_ref, k_ref, v_ref, o_ref, m_ref, l_ref, acc_ref, *,
                       num_heads, head_dim, scale, causal, sk_valid, kv_padded):
    qi = pl.program_id(1)
    kv = pl.program_id(2)

    @pl.when(kv == 0)
    def _():
        m_ref[...] = jnp.full_like(m_ref, -jnp.inf)
        l_ref[...] = jnp.zeros_like(l_ref)
        acc_ref[...] = jnp.zeros_like(acc_ref)

    q = q_ref[0]                     # (Tq, E) bf16
    k = k_ref[0]                     # (Tk, E) bf16
    v = v_ref[0]                     # (Tk, E) bf16
    blk_q, blk_k = q.shape[0], k.shape[0]

    # single 2-D validity mask, shared across all heads (key padding + causal)
    valid = None
    if causal or kv_padded:
        col = jax.lax.broadcasted_iota(jnp.int32, (blk_q, blk_k), 1) + kv * blk_k
        valid = col < sk_valid
        if causal:
            row = jax.lax.broadcasted_iota(jnp.int32, (blk_q, blk_k), 0) + qi * blk_q
            valid = jnp.logical_and(valid, col <= row)

    for h in range(num_heads):       # static unroll: plain 2-D matmuls per head
        lo, hi = h * head_dim, (h + 1) * head_dim
        qh, kh, vh = q[:, lo:hi], k[:, lo:hi], v[:, lo:hi]
        s = jnp.einsum("qd,kd->qk", qh, kh,
                       preferred_element_type=jnp.float32) * scale
        if valid is not None:
            s = jnp.where(valid, s, -1e30)
        m_prev = m_ref[h]                                     # (Tq, 1) f32
        m_new = jnp.maximum(m_prev, jnp.max(s, axis=-1, keepdims=True))
        alpha = jnp.exp(m_prev - m_new)
        p = jnp.exp(s - m_new)                                # f32 softmax math
        l_ref[h] = alpha * l_ref[h] + jnp.sum(p, axis=-1, keepdims=True)
        acc_ref[h] = alpha * acc_ref[h] + jnp.dot(
            p.astype(vh.dtype), vh, preferred_element_type=jnp.float32)
        m_ref[h] = m_new

    @pl.when(kv == pl.num_programs(2) - 1)
    def _():
        for h in range(num_heads):
            lo, hi = h * head_dim, (h + 1) * head_dim
            inv = pl.reciprocal(l_ref[h], approx=True)
            o_ref[0, :, lo:hi] = (acc_ref[h] * inv).astype(o_ref.dtype)


def scaled_dot_attention(q, k, v, *, num_heads, causal):
    """q: (B, Sq, E) bf16, k/v: (B, Sk, E) bf16 -> (B, Sq, E) bf16.

    Flash-style: grid=(B, q_tiles, kv_tiles), kv axis is an online-softmax reduction
    with m/l/acc held in VMEM scratch.  Inputs/outputs stay in (B, S, E) layout, so no
    XLA transposes are needed around the kernel and the output store is lane-dense.
    """
    B, Sq, E = q.shape
    Sk = k.shape[1]
    Dh = E // num_heads
    scale = 1.0 / math.sqrt(Dh)

    tq = Sq if Sq <= _Q_TILE else _Q_TILE
    tk = Sk if Sk <= _KV_TILE else _KV_TILE
    Sqp, Skp = _round_up(Sq, tq), _round_up(Sk, tk)
    if Sqp != Sq:
        q = jnp.pad(q, ((0, 0), (0, Sqp - Sq), (0, 0)))
    if Skp != Sk:
        k = jnp.pad(k, ((0, 0), (0, Skp - Sk), (0, 0)))
        v = jnp.pad(v, ((0, 0), (0, Skp - Sk), (0, 0)))

    out = pl.pallas_call(
        functools.partial(_flash_attn_kernel, num_heads=num_heads, head_dim=Dh,
                          scale=scale, causal=causal, sk_valid=Sk,
                          kv_padded=(Skp != Sk)),
        out_shape=jax.ShapeDtypeStruct((B, Sqp, E), jnp.bfloat16),
        grid=(B, Sqp // tq, Skp // tk),
        in_specs=[
            pl.BlockSpec((1, tq, E), lambda b, i, j: (b, i, 0)),
            pl.BlockSpec((1, tk, E), lambda b, i, j: (b, j, 0)),
            pl.BlockSpec((1, tk, E), lambda b, i, j: (b, j, 0)),
        ],
        out_specs=pl.BlockSpec((1, tq, E), lambda b, i, j: (b, i, 0)),
        scratch_shapes=[
            pltpu.VMEM((num_heads, tq, 1), jnp.float32),   # running max
            pltpu.VMEM((num_heads, tq, 1), jnp.float32),   # running denom
            pltpu.VMEM((num_heads, tq, Dh), jnp.float32),  # running numerator
        ],
        compiler_params=pltpu.CompilerParams(
            dimension_semantics=("parallel", "parallel", "arbitrary")),
    )(q, k, v)
    return out[:, :Sq] if Sqp != Sq else out


# ---------------------------- attention contexts -----------------------------

def self_attention_context(x, p, num_heads, *, causal):
    B, S, E = x.shape
    # fused QKV projection: one weight stream / one pass over x, bf16 output.
    qkv = linear(x.reshape(B * S, E), p["w_qkv"], p["b_qkv"], out_dtype=jnp.bfloat16)
    qkv = qkv.reshape(B, S, 3, E)
    q, k, v = qkv[:, :, 0], qkv[:, :, 1], qkv[:, :, 2]
    return scaled_dot_attention(q, k, v, num_heads=num_heads, causal=causal)


def cross_attention_context(x_q, x_kv, p, num_heads):
    B, Sq, E = x_q.shape
    Sk = x_kv.shape[1]
    q = linear(x_q.reshape(B * Sq, E), p["w_q"], p["b_q"],
               out_dtype=jnp.bfloat16).reshape(B, Sq, E)
    kv = linear(x_kv.reshape(B * Sk, E), p["w_kv"], p["b_kv"],
                out_dtype=jnp.bfloat16).reshape(B, Sk, 2, E)
    k, v = kv[:, :, 0], kv[:, :, 1]
    return scaled_dot_attention(q, k, v, num_heads=num_heads, causal=False)


# ----------------------- encoder / decoder layers ---------------------------

def encoder_layer(x, p, num_heads):
    """Post-norm (norm_first=False) nn.TransformerEncoderLayer, ReLU FFN, eval mode."""
    B, S, E = x.shape
    x2d = x.reshape(B * S, E)
    ctx = self_attention_context(x, p["self_attn"], num_heads, causal=False)
    # out-projection fused with residual-add + LayerNorm1
    x2d = linear(ctx.reshape(B * S, E), p["self_attn"]["w_o"], p["self_attn"]["b_o"],
                 residual=x2d, ln_gamma=p["norm1_g"], ln_beta=p["norm1_b"])
    h = linear(x2d, p["lin1_w"], p["lin1_b"], activation="relu",
               out_dtype=jnp.bfloat16)
    # FFN second linear fused with residual-add + LayerNorm2
    x2d = linear(h, p["lin2_w"], p["lin2_b"],
                 residual=x2d, ln_gamma=p["norm2_g"], ln_beta=p["norm2_b"])
    return x2d.reshape(B, S, E)


def decoder_layer(x, memory, p, num_heads):
    """Post-norm nn.TransformerDecoderLayer with causal tgt_mask, eval mode."""
    B, S, E = x.shape
    x2d = x.reshape(B * S, E)
    sa = self_attention_context(x, p["self_attn"], num_heads, causal=True)
    x2d = linear(sa.reshape(B * S, E), p["self_attn"]["w_o"], p["self_attn"]["b_o"],
                 residual=x2d, ln_gamma=p["norm1_g"], ln_beta=p["norm1_b"])
    ca = cross_attention_context(x2d.reshape(B, S, E), memory,
                                 p["cross_attn"], num_heads)
    x2d = linear(ca.reshape(B * S, E), p["cross_attn"]["w_o"], p["cross_attn"]["b_o"],
                 residual=x2d, ln_gamma=p["norm2_g"], ln_beta=p["norm2_b"])
    h = linear(x2d, p["lin1_w"], p["lin1_b"], activation="relu",
               out_dtype=jnp.bfloat16)
    x2d = linear(h, p["lin2_w"], p["lin2_b"],
                 residual=x2d, ln_gamma=p["norm3_g"], ln_beta=p["norm3_b"])
    return x2d.reshape(B, S, E)


# ------------------------------ full forward --------------------------------

def transformer_captioning_forward(params, video_features, captions, *, num_heads):
    B, Sv, F = video_features.shape
    Sc = captions.shape[1]
    E = params["feature_proj_w"].shape[1]
    V = params["fc_out_w"].shape[1]

    # feature_proj + positional encoding (dropout = identity in eval mode)
    ve = linear(video_features.reshape(B * Sv, F),
                params["feature_proj_w"], params["feature_proj_b"]).reshape(B, Sv, E)
    ve = ve + params["pe"][:Sv][None, :, :]

    # encoder stack (TransformerEncoder(norm=None))
    memory = ve
    for lp in params["encoder_layers"]:
        memory = encoder_layer(memory, lp, num_heads)

    # embedding lookup (gather kept in plain JAX) + positional encoding
    ce = jnp.take(params["embedding"], captions, axis=0)
    ce = ce + params["pe"][:Sc][None, :, :]

    # decoder stack with causal self-attention mask
    x = ce
    for lp in params["decoder_layers"]:
        x = decoder_layer(x, memory, lp, num_heads)

    logits = linear(x.reshape(B * Sc, E),
                    params["fc_out_w"], params["fc_out_b"]).reshape(B, Sc, V)
    return logits


# --------------------------- parameter creation ------------------------------

def make_positional_encoding(max_len, d_model):
    position = jnp.arange(max_len, dtype=jnp.float32)[:, None]
    div_term = jnp.exp(jnp.arange(0, d_model, 2, dtype=jnp.float32)
                       * (-math.log(10000.0) / d_model))
    pe = jnp.zeros((max_len, d_model), jnp.float32)
    pe = pe.at[:, 0::2].set(jnp.sin(position * div_term))
    pe = pe.at[:, 1::2].set(jnp.cos(position * div_term))
    return pe


def init_params(key, *, feature_dim, vocab_size, embed_dim, num_layers,
                dim_feedforward, max_len):
    keys = iter(jax.random.split(key, 512))

    def dense(shape, scale=0.05):
        return jax.random.normal(next(keys), shape, jnp.float32) * scale

    def zeros(shape):
        return jnp.zeros(shape, jnp.float32)

    def ones(shape):
        return jnp.ones(shape, jnp.float32)

    def attn_self_params():
        # fused QKV weight stored as (in, 3*out); equivalent to PyTorch in_proj (transposed)
        return dict(
            w_qkv=dense((embed_dim, 3 * embed_dim)), b_qkv=zeros((3 * embed_dim,)),
            w_o=dense((embed_dim, embed_dim)), b_o=zeros((embed_dim,)),
        )

    def attn_cross_params():
        return dict(
            w_q=dense((embed_dim, embed_dim)), b_q=zeros((embed_dim,)),
            w_kv=dense((embed_dim, 2 * embed_dim)), b_kv=zeros((2 * embed_dim,)),
            w_o=dense((embed_dim, embed_dim)), b_o=zeros((embed_dim,)),
        )

    def enc_layer():
        return dict(
            self_attn=attn_self_params(),
            lin1_w=dense((embed_dim, dim_feedforward)), lin1_b=zeros((dim_feedforward,)),
            lin2_w=dense((dim_feedforward, embed_dim)), lin2_b=zeros((embed_dim,)),
            norm1_g=ones((embed_dim,)), norm1_b=zeros((embed_dim,)),
            norm2_g=ones((embed_dim,)), norm2_b=zeros((embed_dim,)),
        )

    def dec_layer():
        return dict(
            self_attn=attn_self_params(),
            cross_attn=attn_cross_params(),
            lin1_w=dense((embed_dim, dim_feedforward)), lin1_b=zeros((dim_feedforward,)),
            lin2_w=dense((dim_feedforward, embed_dim)), lin2_b=zeros((embed_dim,)),
            norm1_g=ones((embed_dim,)), norm1_b=zeros((embed_dim,)),
            norm2_g=ones((embed_dim,)), norm2_b=zeros((embed_dim,)),
            norm3_g=ones((embed_dim,)), norm3_b=zeros((embed_dim,)),
        )

    return dict(
        feature_proj_w=dense((feature_dim, embed_dim)),
        feature_proj_b=zeros((embed_dim,)),
        embedding=dense((vocab_size, embed_dim), scale=0.1),
        pe=make_positional_encoding(max_len, embed_dim),
        encoder_layers=[enc_layer() for _ in range(num_layers)],
        decoder_layers=[dec_layer() for _ in range(num_layers)],
        fc_out_w=dense((embed_dim, vocab_size)),
        fc_out_b=zeros((vocab_size,)),
    )


# One-time prep: pre-cast matmul weights to bf16 so the forward never re-reads the f32
# copies from HBM and re-casts them per call (biases, LN params, embedding, PE stay f32).
_BF16_KEYS = {"w_qkv", "w_q", "w_kv", "w_o",
              "lin1_w", "lin2_w", "feature_proj_w", "fc_out_w"}


def prepare_params(p):
    if isinstance(p, dict):
        return {k: (v.astype(jnp.bfloat16) if k in _BF16_KEYS else prepare_params(v))
                for k, v in p.items()}
    if isinstance(p, list):
        return [prepare_params(v) for v in p]
    return p


# ---------------------------------- main -------------------------------------

if __name__ == "__main__":
    # small test shapes consistent with the module's forward
    B, Sv, Sc = 2, 8, 8
    feature_dim, vocab_size = 64, 50
    embed_dim, num_heads, num_layers = 32, 4, 2
    dim_feedforward = 64          # PyTorch default is 2048; kept small for the test
    max_len = 100

    root = jax.random.PRNGKey(0)
    k_feat, k_cap, k_param = jax.random.split(root, 3)

    video_features = jax.random.normal(k_feat, (B, Sv, feature_dim), jnp.float32)
    captions = jax.random.randint(k_cap, (B, Sc), 0, vocab_size, dtype=jnp.int32)

    params = init_params(k_param,
                         feature_dim=feature_dim, vocab_size=vocab_size,
                         embed_dim=embed_dim, num_layers=num_layers,
                         dim_feedforward=dim_feedforward, max_len=max_len)
    params = prepare_params(params)   # one-time bf16 weight cast (outside the jit)

    fwd = jax.jit(functools.partial(transformer_captioning_forward,
                                    num_heads=num_heads))
    logits = fwd(params, video_features, captions)
    jax.block_until_ready(logits)

    assert logits.shape == (B, Sc, vocab_size), logits.shape
    assert logits.dtype == jnp.float32
    assert bool(jnp.all(jnp.isfinite(logits)))
    print("KERNEL_OK")
</pallas_src>

<mosaic_0001>
module attributes {stable_mosaic.version = 11 : i64} {
  func.func @_linear_kernel(%arg0: i32, %arg1: i32, %arg2: i32, %arg3: memref<16x128xbf16, #tpu.memory_space<vmem>>, %arg4: memref<128x128xbf16, #tpu.memory_space<vmem>>, %arg5: memref<1x128xf32, #tpu.memory_space<vmem>>, %arg6: memref<16x128xf32, #tpu.memory_space<vmem>>, %arg7: memref<16x128xf32, #tpu.memory_space<vmem>>) attributes {dimension_semantics = [#tpu.dimension_semantics<parallel>, #tpu.dimension_semantics<parallel>, #tpu.dimension_semantics<arbitrary>], iteration_bounds = array<i64: 1, 1, 1>, scalar_prefetch = 0 : i64, scratch_operands = 1 : i64, tpu.core_type = #tpu.core_type<tc>, window_params = [{transform_indices = @transform_0, window_bounds = array<i64: 16, 128>}, {transform_indices = @transform_1, window_bounds = array<i64: 128, 128>}, {transform_indices = @transform_2, window_bounds = array<i64: 1, 128>}, {transform_indices = @transform_3, window_bounds = array<i64: 16, 128>}]} {
    %c0_i32 = arith.constant 0 : i32
    %0 = arith.cmpi eq, %arg2, %c0_i32 : i32
    %1 = arith.extui %0 : i1 to i32
    %c0_i32_0 = arith.constant 0 : i32
    %2 = arith.cmpi ne, %1, %c0_i32_0 : i32
    scf.if %2 {
      %cst_10 = arith.constant 0.000000e+00 : f32
      %12 = vector.broadcast %cst_10 : f32 to vector<16x128xf32>
      %c0_11 = arith.constant 0 : index
      %c0_12 = arith.constant 0 : index
      %13 = vector.load %arg7[%c0_11, %c0_12] : memref<16x128xf32, #tpu.memory_space<vmem>>, vector<16x128xf32>
      tpu.vector_store %arg7[%c0_11, %c0_12], %12 {strides = array<i32>} : memref<16x128xf32, #tpu.memory_space<vmem>>, vector<16x128xf32>,
    } else {
    }
    %c0 = arith.constant 0 : index
    %c0_1 = arith.constant 0 : index
    %3 = vector.load %arg7[%c0, %c0_1] : memref<16x128xf32, #tpu.memory_space<vmem>>, vector<16x128xf32>
    %c0_2 = arith.constant 0 : index
    %c0_3 = arith.constant 0 : index
    %4 = vector.load %arg3[%c0_2, %c0_3] : memref<16x128xbf16, #tpu.memory_space<vmem>>, vector<16x128xbf16>
    %c0_4 = arith.constant 0 : index
    %c0_5 = arith.constant 0 : index
    %5 = vector.load %arg4[%c0_4, %c0_5] : memref<128x128xbf16, #tpu.memory_space<vmem>>, vector<128x128xbf16>
    %cst = arith.constant dense<0.000000e+00> : vector<16x128xf32>
    %6 = tpu.matmul %4, %5, %cst {dimension_numbers = #tpu.dot_dimension_numbers<[1], [0], [0], [1], [0, 0, 1, 1], [], []>} : vector<16x128xbf16>, vector<128x128xbf16>, vector<16x128xf32> -> vector<16x128xf32>
    %7 = arith.addf %3, %6 : vector<16x128xf32>
    %c0_6 = arith.constant 0 : index
    %c0_7 = arith.constant 0 : index
    %8 = vector.load %arg7[%c0_6, %c0_7] : memref<16x128xf32, #tpu.memory_space<vmem>>, vector<16x128xf32>
    tpu.vector_store %arg7[%c0_6, %c0_7], %7 {strides = array<i32>} : memref<16x128xf32, #tpu.memory_space<vmem>>, vector<16x128xf32>,
    %c0_i32_8 = arith.constant 0 : i32
    %9 = arith.cmpi eq, %arg2, %c0_i32_8 : i32
    %10 = arith.extui %9 : i1 to i32
    %c0_i32_9 = arith.constant 0 : i32
    %11 = arith.cmpi ne, %10, %c0_i32_9 : i32
    scf.if %11 {
      %c0_10 = arith.constant 0 : index
      %c0_11 = arith.constant 0 : index
      %12 = vector.load %arg7[%c0_10, %c0_11] : memref<16x128xf32, #tpu.memory_space<vmem>>, vector<16x128xf32>
      %c0_12 = arith.constant 0 : index
      %c0_13 = arith.constant 0 : index
      %13 = vector.load %arg5[%c0_12, %c0_13] : memref<1x128xf32, #tpu.memory_space<vmem>>, vector<1x128xf32>
      %14 = vector.broadcast %13 : vector<1x128xf32> to vector<16x128xf32>
      %15 = arith.addf %12, %14 : vector<16x128xf32>
      %c0_14 = arith.constant 0 : index
      %c0_15 = arith.constant 0 : index
      %16 = vector.load %arg6[%c0_14, %c0_15] : memref<16x128xf32, #tpu.memory_space<vmem>>, vector<16x128xf32>
      tpu.vector_store %arg6[%c0_14, %c0_15], %15 {strides = array<i32>} : memref<16x128xf32, #tpu.memory_space<vmem>>, vector<16x128xf32>,
    } else {
    }
    return
  }
  func.func @transform_0(%arg0: i32, %arg1: i32, %arg2: i32) -> (i32, i32) {
    %c0_i32 = arith.constant 0 : i32
    return %arg0, %arg2 : i32, i32
  }
  func.func @transform_1(%arg0: i32, %arg1: i32, %arg2: i32) -> (i32, i32) {
    %c0_i32 = arith.constant 0 : i32
    return %arg2, %arg1 : i32, i32
  }
  func.func @transform_2(%arg0: i32, %arg1: i32, %arg2: i32) -> (i32, i32) {
    %c0_i32 = arith.constant 0 : i32
    %c0_i32_0 = arith.constant 0 : i32
    return %c0_i32, %arg1 : i32, i32
  }
  func.func @transform_3(%arg0: i32, %arg1: i32, %arg2: i32) -> (i32, i32) {
    %c0_i32 = arith.constant 0 : i32
    return %arg0, %arg1 : i32, i32
  }
}

module attributes {stable_mosaic.version = 11 : i64} {
  func.func @_linear_kernel(%arg0: i32, %arg1: i32, %arg2: i32, %arg3: memref<16x128xbf16, #tpu.memory_space<vmem>>, %arg4: memref<128x128xbf16, #tpu.memory_space<vmem>>, %arg5: memref<1x128xf32, #tpu.memory_space<vmem>>, %arg6: memref<16x128xbf16, #tpu.memory_space<vmem>>, %arg7: memref<16x128xf32, #tpu.memory_space<vmem>>) attributes {dimension_semantics = [#tpu.dimension_semantics<parallel>, #tpu.dimension_semantics<parallel>, #tpu.dimension_semantics<arbitrary>], iteration_bounds = array<i64: 1, 1, 1>, scalar_prefetch = 0 : i64, scratch_operands = 1 : i64, tpu.core_type = #tpu.core_type<tc>, window_params = [{transform_indices = @transform_0, window_bounds = array<i64: 16, 128>}, {transform_indices = @transform_1, window_bounds = array<i64: 128, 128>}, {transform_indices = @transform_2, window_bounds = array<i64: 1, 128>}, {transform_indices = @transform_3, window_bounds = array<i64: 16, 128>}]} {
    %c0_i32 = arith.constant 0 : i32
    %0 = arith.cmpi eq, %arg2, %c0_i32 : i32
    %1 = arith.extui %0 : i1 to i32
    %c0_i32_0 = arith.constant 0 : i32
    %2 = arith.cmpi ne, %1, %c0_i32_0 : i32
    scf.if %2 {
      %cst_10 = arith.constant 0.000000e+00 : f32
      %12 = vector.broadcast %cst_10 : f32 to vector<16x128xf32>
      %c0_11 = arith.constant 0 : index
      %c0_12 = arith.constant 0 : index
      %13 = vector.load %arg7[%c0_11, %c0_12] : memref<16x128xf32, #tpu.memory_space<vmem>>, vector<16x128xf32>
      tpu.vector_store %arg7[%c0_11, %c0_12], %12 {strides = array<i32>} : memref<16x128xf32, #tpu.memory_space<vmem>>, vector<16x128xf32>,
    } else {
    }
    %c0 = arith.constant 0 : index
    %c0_1 = arith.constant 0 : index
    %3 = vector.load %arg7[%c0, %c0_1] : memref<16x128xf32, #tpu.memory_space<vmem>>, vector<16x128xf32>
    %c0_2 = arith.constant 0 : index
    %c0_3 = arith.constant 0 : index
    %4 = vector.load %arg3[%c0_2, %c0_3] : memref<16x128xbf16, #tpu.memory_space<vmem>>, vector<16x128xbf16>
    %c0_4 = arith.constant 0 : index
    %c0_5 = arith.constant 0 : index
    %5 = vector.load %arg4[%c0_4, %c0_5] : memref<128x128xbf16, #tpu.memory_space<vmem>>, vector<128x128xbf16>
    %cst = arith.constant dense<0.000000e+00> : vector<16x128xf32>
    %6 = tpu.matmul %4, %5, %cst {dimension_numbers = #tpu.dot_dimension_numbers<[1], [0], [0], [1], [0, 0, 1, 1], [], []>} : vector<16x128xbf16>, vector<128x128xbf16>, vector<16x128xf32> -> vector<16x128xf32>
    %7 = arith.addf %3, %6 : vector<16x128xf32>
    %c0_6 = arith.constant 0 : index
    %c0_7 = arith.constant 0 : index
    %8 = vector.load %arg7[%c0_6, %c0_7] : memref<16x128xf32, #tpu.memory_space<vmem>>, vector<16x128xf32>
    tpu.vector_store %arg7[%c0_6, %c0_7], %7 {strides = array<i32>} : memref<16x128xf32, #tpu.memory_space<vmem>>, vector<16x128xf32>,
    %c0_i32_8 = arith.constant 0 : i32
    %9 = arith.cmpi eq, %arg2, %c0_i32_8 : i32
    %10 = arith.extui %9 : i1 to i32
    %c0_i32_9 = arith.constant 0 : i32
    %11 = arith.cmpi ne, %10, %c0_i32_9 : i32
    scf.if %11 {
      %c0_10 = arith.constant 0 : index
      %c0_11 = arith.constant 0 : index
      %12 = vector.load %arg7[%c0_10, %c0_11] : memref<16x128xf32, #tpu.memory_space<vmem>>, vector<16x128xf32>
      %c0_12 = arith.constant 0 : index
      %c0_13 = arith.constant 0 : index
      %13 = vector.load %arg5[%c0_12, %c0_13] : memref<1x128xf32, #tpu.memory_space<vmem>>, vector<1x128xf32>
      %14 = vector.broadcast %13 : vector<1x128xf32> to vector<16x128xf32>
      %15 = arith.addf %12, %14 : vector<16x128xf32>
      %16 = arith.truncf %15 : vector<16x128xf32> to vector<16x128xbf16>
      %c0_14 = arith.constant 0 : index
      %c0_15 = arith.constant 0 : index
      %17 = vector.load %arg6[%c0_14, %c0_15] : memref<16x128xbf16, #tpu.memory_space<vmem>>, vector<16x128xbf16>
      tpu.vector_store %arg6[%c0_14, %c0_15], %16 {strides = array<i32>} : memref<16x128xbf16, #tpu.memory_space<vmem>>, vector<16x128xbf16>,
    } else {
    }
    return
  }
  func.func @transform_0(%arg0: i32, %arg1: i32, %arg2: i32) -> (i32, i32) {
    %c0_i32 = arith.constant 0 : i32
    return %arg0, %arg2 : i32, i32
  }
  func.func @transform_1(%arg0: i32, %arg1: i32, %arg2: i32) -> (i32, i32) {
    %c0_i32 = arith.constant 0 : i32
    return %arg2, %arg1 : i32, i32
  }
  func.func @transform_2(%arg0: i32, %arg1: i32, %arg2: i32) -> (i32, i32) {
    %c0_i32 = arith.constant 0 : i32
    %c0_i32_0 = arith.constant 0 : i32
    return %c0_i32, %arg1 : i32, i32
  }
  func.func @transform_3(%arg0: i32, %arg1: i32, %arg2: i32) -> (i32, i32) {
    %c0_i32 = arith.constant 0 : i32
    return %arg0, %arg1 : i32, i32
  }
}

module attributes {stable_mosaic.version = 11 : i64} {
  func.func @_flash_attn_kernel(%arg0: i32, %arg1: i32, %arg2: i32, %arg3: memref<1x8x32xbf16, #tpu.memory_space<vmem>>, %arg4: memref<1x8x32xbf16, #tpu.memory_space<vmem>>, %arg5: memref<1x8x32xbf16, #tpu.memory_space<vmem>>, %arg6: memref<1x8x32xbf16, #tpu.memory_space<vmem>>, %arg7: memref<4x8x1xf32, #tpu.memory_space<vmem>>, %arg8: memref<4x8x1xf32, #tpu.memory_space<vmem>>, %arg9: memref<4x8x8xf32, #tpu.memory_space<vmem>>) attributes {dimension_semantics = [#tpu.dimension_semantics<parallel>, #tpu.dimension_semantics<parallel>, #tpu.dimension_semantics<arbitrary>], iteration_bounds = array<i64: 2, 1, 1>, scalar_prefetch = 0 : i64, scratch_operands = 3 : i64, tpu.core_type = #tpu.core_type<tc>, window_params = [{transform_indices = @transform_0, window_bounds = array<i64: 1, 8, 32>}, {transform_indices = @transform_1, window_bounds = array<i64: 1, 8, 32>}, {transform_indices = @transform_2, window_bounds = array<i64: 1, 8, 32>}, {transform_indices = @transform_3, window_bounds = array<i64: 1, 8, 32>}]} {
    %c0_i32 = arith.constant 0 : i32
    %0 = arith.cmpi eq, %arg2, %c0_i32 : i32
    %1 = arith.extui %0 : i1 to i32
    %c0_i32_0 = arith.constant 0 : i32
    %2 = arith.cmpi ne, %1, %c0_i32_0 : i32
    scf.if %2 {
      %cst_105 = arith.constant 0xFF800000 : f32
      %184 = vector.broadcast %cst_105 : f32 to vector<4x8x1xf32>
      %c0_106 = arith.constant 0 : index
      %c0_107 = arith.constant 0 : index
      %c0_108 = arith.constant 0 : index
      %185 = vector.load %arg7[%c0_106, %c0_107, %c0_108] : memref<4x8x1xf32, #tpu.memory_space<vmem>>, vector<4x8x1xf32>
      tpu.vector_store %arg7[%c0_106, %c0_107, %c0_108], %184 {strides = array<i32>} : memref<4x8x1xf32, #tpu.memory_space<vmem>>, vector<4x8x1xf32>,
      %cst_109 = arith.constant 0.000000e+00 : f32
      %186 = vector.broadcast %cst_109 : f32 to vector<4x8x1xf32>
      %c0_110 = arith.constant 0 : index
      %c0_111 = arith.constant 0 : index
      %c0_112 = arith.constant 0 : index
      %187 = vector.load %arg8[%c0_110, %c0_111, %c0_112] : memref<4x8x1xf32, #tpu.memory_space<vmem>>, vector<4x8x1xf32>
      tpu.vector_store %arg8[%c0_110, %c0_111, %c0_112], %186 {strides = array<i32>} : memref<4x8x1xf32, #tpu.memory_space<vmem>>, vector<4x8x1xf32>,
      %cst_113 = arith.constant 0.000000e+00 : f32
      %188 = vector.broadcast %cst_113 : f32 to vector<4x8x8xf32>
      %c0_114 = arith.constant 0 : index
      %c0_115 = arith.constant 0 : index
      %c0_116 = arith.constant 0 : index
      %189 = vector.load %arg9[%c0_114, %c0_115, %c0_116] : memref<4x8x8xf32, #tpu.memory_space<vmem>>, vector<4x8x8xf32>
      tpu.vector_store %arg9[%c0_114, %c0_115, %c0_116], %188 {strides = array<i32>} : memref<4x8x8xf32, #tpu.memory_space<vmem>>, vector<4x8x8xf32>,
    } else {
    }
    %c0 = arith.constant 0 : index
    %c0_1 = arith.constant 0 : index
    %c0_2 = arith.constant 0 : index
    %3 = vector.load %arg3[%c0, %c0_1, %c0_2] : memref<1x8x32xbf16, #tpu.memory_space<vmem>>, vector<1x8x32xbf16>
    %4 = vector.shape_cast %3 : vector<1x8x32xbf16> to vector<8x32xbf16>
    %c0_3 = arith.constant 0 : index
    %c0_4 = arith.constant 0 : index
    %c0_5 = arith.constant 0 : index
    %5 = vector.load %arg4[%c0_3, %c0_4, %c0_5] : memref<1x8x32xbf16, #tpu.memory_space<vmem>>, vector<1x8x32xbf16>
    %6 = vector.shape_cast %5 : vector<1x8x32xbf16> to vector<8x32xbf16>
    %c0_6 = arith.constant 0 : index
    %c0_7 = arith.constant 0 : index
    %c0_8 = arith.constant 0 : index
    %7 = vector.load %arg5[%c0_6, %c0_7, %c0_8] : memref<1x8x32xbf16, #tpu.memory_space<vmem>>, vector<1x8x32xbf16>
    %8 = vector.shape_cast %7 : vector<1x8x32xbf16> to vector<8x32xbf16>
    %9 = tpu.iota {dimensions = array<i32: 1>} : vector<8x8xi32>
    %c8_i32 = arith.constant 8 : i32
    %10 = arith.muli %arg2, %c8_i32 : i32
    %11 = vector.broadcast %10 : i32 to vector<8x8xi32>
    %12 = arith.addi %9, %11 : vector<8x8xi32>
    %c8_i32_9 = arith.constant 8 : i32
    %13 = vector.broadcast %c8_i32_9 : i32 to vector<8x8xi32>
    %14 = arith.cmpi slt, %12, %13 : vector<8x8xi32>
    %15 = tpu.iota {dimensions = array<i32: 0>} : vector<8x8xi32>
    %c8_i32_10 = arith.constant 8 : i32
    %16 = arith.muli %arg1, %c8_i32_10 : i32
    %17 = vector.broadcast %16 : i32 to vector<8x8xi32>
    %18 = arith.addi %15, %17 : vector<8x8xi32>
    %19 = arith.cmpi sle, %12, %18 : vector<8x8xi32>
    %20 = arith.andi %14, %19 : vector<8x8xi1>
    %21 = vector.extract_strided_slice %4 {offsets = [0, 0], sizes = [8, 8], strides = [1, 1]} : vector<8x32xbf16> to vector<8x8xbf16>
    %22 = vector.extract_strided_slice %6 {offsets = [0, 0], sizes = [8, 8], strides = [1, 1]} : vector<8x32xbf16> to vector<8x8xbf16>
    %23 = vector.extract_strided_slice %8 {offsets = [0, 0], sizes = [8, 8], strides = [1, 1]} : vector<8x32xbf16> to vector<8x8xbf16>
    "tpu.trace_start"() <{level = 10 : i32, message = "qd,kd->qk"}> : () -> ()
    %cst = arith.constant dense<0.000000e+00> : vector<8x8xf32>
    %24 = tpu.matmul %21, %22, %cst {dimension_numbers = #tpu.dot_dimension_numbers<[1], [1], [0], [0], [0, 0, 1, 0], [], []>} : vector<8x8xbf16>, vector<8x8xbf16>, vector<8x8xf32> -> vector<8x8xf32>
    "tpu.trace_stop"() : () -> ()
    %cst_11 = arith.constant 0.353553385 : f32
    %25 = vector.broadcast %cst_11 : f32 to vector<8x8xf32>
    %26 = arith.mulf %24, %25 : vector<8x8xf32>
    %cst_12 = arith.constant -1.000000e+30 : f32
    %27 = vector.broadcast %cst_12 : f32 to vector<8x8xf32>
    %28 = arith.select %20, %26, %27 : vector<8x8xi1>, vector<8x8xf32>
    %c0_13 = arith.constant 0 : index
    %c0_14 = arith.constant 0 : index
    %c0_15 = arith.constant 0 : index
    %29 = vector.load %arg7[%c0_13, %c0_14, %c0_15] : memref<4x8x1xf32, #tpu.memory_space<vmem>>, vector<1x8x1xf32>
    %30 = vector.shape_cast %29 : vector<1x8x1xf32> to vector<8x1xf32>
    %cst_16 = arith.constant dense<0xFF800000> : vector<8xf32>
    %31 = vector.multi_reduction <maximumf>, %28, %cst_16 [1] : vector<8x8xf32> to vector<8xf32>
    %32 = vector.shape_cast %31 : vector<8xf32> to vector<8x1xf32>
    %33 = arith.maximumf %30, %32 : vector<8x1xf32>
    %34 = arith.subf %30, %33 : vector<8x1xf32>
    %35 = math.exp %34 : vector<8x1xf32>
    %36 = vector.broadcast %33 : vector<8x1xf32> to vector<8x8xf32>
    %37 = arith.subf %28, %36 : vector<8x8xf32>
    %38 = math.exp %37 : vector<8x8xf32>
    %c0_17 = arith.constant 0 : index
    %c0_18 = arith.constant 0 : index
    %c0_19 = arith.constant 0 : index
    %39 = vector.load %arg8[%c0_17, %c0_18, %c0_19] : memref<4x8x1xf32, #tpu.memory_space<vmem>>, vector<1x8x1xf32>
    %40 = vector.shape_cast %39 : vector<1x8x1xf32> to vector<8x1xf32>
    %41 = arith.mulf %35, %40 : vector<8x1xf32>
    %cst_20 = arith.constant dense<0.000000e+00> : vector<8xf32>
    %42 = vector.multi_reduction <add>, %38, %cst_20 [1] : vector<8x8xf32> to vector<8xf32>
    %43 = vector.shape_cast %42 : vector<8xf32> to vector<8x1xf32>
    %44 = arith.addf %41, %43 : vector<8x1xf32>
    %c0_21 = arith.constant 0 : index
    %c0_22 = arith.constant 0 : index
    %c0_23 = arith.constant 0 : index
    %45 = vector.load %arg8[%c0_21, %c0_22, %c0_23] : memref<4x8x1xf32, #tpu.memory_space<vmem>>, vector<1x8x1xf32>
    %46 = vector.shape_cast %45 : vector<1x8x1xf32> to vector<8x1xf32>
    %47 = vector.shape_cast %44 : vector<8x1xf32> to vector<1x8x1xf32>
    tpu.vector_store %arg8[%c0_21, %c0_22, %c0_23], %47 {strides = array<i32>} : memref<4x8x1xf32, #tpu.memory_space<vmem>>, vector<1x8x1xf32>,
    %c0_24 = arith.constant 0 : index
    %c0_25 = arith.constant 0 : index
    %c0_26 = arith.constant 0 : index
    %48 = vector.load %arg9[%c0_24, %c0_25, %c0_26] : memref<4x8x8xf32, #tpu.memory_space<vmem>>, vector<1x8x8xf32>
    %49 = vector.shape_cast %48 : vector<1x8x8xf32> to vector<8x8xf32>
    %50 = vector.broadcast %35 : vector<8x1xf32> to vector<8x8xf32>
    %51 = arith.mulf %50, %49 : vector<8x8xf32>
    %52 = arith.truncf %38 : vector<8x8xf32> to vector<8x8xbf16>
    %cst_27 = arith.constant dense<0.000000e+00> : vector<8x8xf32>
    %53 = tpu.matmul %52, %23, %cst_27 {dimension_numbers = #tpu.dot_dimension_numbers<[1], [0], [0], [1], [0, 0, 1, 1], [], []>} : vector<8x8xbf16>, vector<8x8xbf16>, vector<8x8xf32> -> vector<8x8xf32>
    %54 = arith.addf %51, %53 : vector<8x8xf32>
    %c0_28 = arith.constant 0 : index
    %c0_29 = arith.constant 0 : index
    %c0_30 = arith.constant 0 : index
    %55 = vector.load %arg9[%c0_28, %c0_29, %c0_30] : memref<4x8x8xf32, #tpu.memory_space<vmem>>, vector<1x8x8xf32>
    %56 = vector.shape_cast %55 : vector<1x8x8xf32> to vector<8x8xf32>
    %57 = vector.shape_cast %54 : vector<8x8xf32> to vector<1x8x8xf32>
    tpu.vector_store %arg9[%c0_28, %c0_29, %c0_30], %57 {strides = array<i32>} : memref<4x8x8xf32, #tpu.memory_space<vmem>>, vector<1x8x8xf32>,
    %c0_31 = arith.constant 0 : index
    %c0_32 = arith.constant 0 : index
    %c0_33 = arith.constant 0 : index
    %58 = vector.load %arg7[%c0_31, %c0_32, %c0_33] : memref<4x8x1xf32, #tpu.memory_space<vmem>>, vector<1x8x1xf32>
    %59 = vector.shape_cast %58 : vector<1x8x1xf32> to vector<8x1xf32>
    %60 = vector.shape_cast %33 : vector<8x1xf32> to vector<1x8x1xf32>
    tpu.vector_store %arg7[%c0_31, %c0_32, %c0_33], %60 {strides = array<i32>} : memref<4x8x1xf32, #tpu.memory_space<vmem>>, vector<1x8x1xf32>,
    %61 = vector.extract_strided_slice %4 {offsets = [0, 8], sizes = [8, 8], strides = [1, 1]} : vector<8x32xbf16> to vector<8x8xbf16>
    %62 = vector.extract_strided_slice %6 {offsets = [0, 8], sizes = [8, 8], strides = [1, 1]} : vector<8x32xbf16> to vector<8x8xbf16>
    %63 = vector.extract_strided_slice %8 {offsets = [0, 8], sizes = [8, 8], strides = [1, 1]} : vector<8x32xbf16> to vector<8x8xbf16>
    "tpu.trace_start"() <{level = 10 : i32, message = "qd,kd->qk"}> : () -> ()
    %cst_34 = arith.constant dense<0.000000e+00> : vector<8x8xf32>
    %64 = tpu.matmul %61, %62, %cst_34 {dimension_numbers = #tpu.dot_dimension_numbers<[1], [1], [0], [0], [0, 0, 1, 0], [], []>} : vector<8x8xbf16>, vector<8x8xbf16>, vector<8x8xf32> -> vector<8x8xf32>
    "tpu.trace_stop"() : () -> ()
    %cst_35 = arith.constant 0.353553385 : f32
    %65 = vector.broadcast %cst_35 : f32 to vector<8x8xf32>
    %66 = arith.mulf %64, %65 : vector<8x8xf32>
    %cst_36 = arith.constant -1.000000e+30 : f32
    %67 = vector.broadcast %cst_36 : f32 to vector<8x8xf32>
    %68 = arith.select %20, %66, %67 : vector<8x8xi1>, vector<8x8xf32>
    %c1 = arith.constant 1 : index
    %c0_37 = arith.constant 0 : index
    %c0_38 = arith.constant 0 : index
    %69 = vector.load %arg7[%c1, %c0_37, %c0_38] : memref<4x8x1xf32, #tpu.memory_space<vmem>>, vector<1x8x1xf32>
    %70 = vector.shape_cast %69 : vector<1x8x1xf32> to vector<8x1xf32>
    %cst_39 = arith.constant dense<0xFF800000> : vector<8xf32>
    %71 = vector.multi_reduction <maximumf>, %68, %cst_39 [1] : vector<8x8xf32> to vector<8xf32>
    %72 = vector.shape_cast %71 : vector<8xf32> to vector<8x1xf32>
    %73 = arith.maximumf %70, %72 : vector<8x1xf32>
    %74 = arith.subf %70, %73 : vector<8x1xf32>
    %75 = math.exp %74 : vector<8x1xf32>
    %76 = vector.broadcast %73 : vector<8x1xf32> to vector<8x8xf32>
    %77 = arith.subf %68, %76 : vector<8x8xf32>
    %78 = math.exp %77 : vector<8x8xf32>
    %c1_40 = arith.constant 1 : index
    %c0_41 = arith.constant 0 : index
    %c0_42 = arith.constant 0 : index
    %79 = vector.load %arg8[%c1_40, %c0_41, %c0_42] : memref<4x8x1xf32, #tpu.memory_space<vmem>>, vector<1x8x1xf32>
    %80 = vector.shape_cast %79 : vector<1x8x1xf32> to vector<8x1xf32>
    %81 = arith.mulf %75, %80 : vector<8x1xf32>
    %cst_43 = arith.constant dense<0.000000e+00> : vector<8xf32>
    %82 = vector.multi_reduction <add>, %78, %cst_43 [1] : vector<8x8xf32> to vector<8xf32>
    %83 = vector.shape_cast %82 : vector<8xf32> to vector<8x1xf32>
    %84 = arith.addf %81, %83 : vector<8x1xf32>
    %c1_44 = arith.constant 1 : index
    %c0_45 = arith.constant 0 : index
    %c0_46 = arith.constant 0 : index
    %85 = vector.load %arg8[%c1_44, %c0_45, %c0_46] : memref<4x8x1xf32, #tpu.memory_space<vmem>>, vector<1x8x1xf32>
    %86 = vector.shape_cast %85 : vector<1x8x1xf32> to vector<8x1xf32>
    %87 = vector.shape_cast %84 : vector<8x1xf32> to vector<1x8x1xf32>
    tpu.vector_store %arg8[%c1_44, %c0_45, %c0_46], %87 {strides = array<i32>} : memref<4x8x1xf32, #tpu.memory_space<vmem>>, vector<1x8x1xf32>,
    %c1_47 = arith.constant 1 : index
    %c0_48 = arith.constant 0 : index
    %c0_49 = arith.constant 0 : index
    %88 = vector.load %arg9[%c1_47, %c0_48, %c0_49] : memref<4x8x8xf32, #tpu.memory_space<vmem>>, vector<1x8x8xf32>
    %89 = vector.shape_cast %88 : vector<1x8x8xf32> to vector<8x8xf32>
    %90 = vector.broadcast %75 : vector<8x1xf32> to vector<8x8xf32>
    %91 = arith.mulf %90, %89 : vector<8x8xf32>
    %92 = arith.truncf %78 : vector<8x8xf32> to vector<8x8xbf16>
    %cst_50 = arith.constant dense<0.000000e+00> : vector<8x8xf32>
    %93 = tpu.matmul %92, %63, %cst_50 {dimension_numbers = #tpu.dot_dimension_numbers<[1], [0], [0], [1], [0, 0, 1, 1], [], []>} : vector<8x8xbf16>, vector<8x8xbf16>, vector<8x8xf32> -> vector<8x8xf32>
    %94 = arith.addf %91, %93 : vector<8x8xf32>
    %c1_51 = arith.constant 1 : index
    %c0_52 = arith.constant 0 : index
    %c0_53 = arith.constant 0 : index
    %95 = vector.load %arg9[%c1_51, %c0_52, %c0_53] : memref<4x8x8xf32, #tpu.memory_space<vmem>>, vector<1x8x8xf32>
    %96 = vector.shape_cast %95 : vector<1x8x8xf32> to vector<8x8xf32>
    %97 = vector.shape_cast %94 : vector<8x8xf32> to vector<1x8x8xf32>
    tpu.vector_store %arg9[%c1_51, %c0_52, %c0_53], %97 {strides = array<i32>} : memref<4x8x8xf32, #tpu.memory_space<vmem>>, vector<1x8x8xf32>,
    %c1_54 = arith.constant 1 : index
    %c0_55 = arith.constant 0 : index
    %c0_56 = arith.constant 0 : index
    %98 = vector.load %arg7[%c1_54, %c0_55, %c0_56] : memref<4x8x1xf32, #tpu.memory_space<vmem>>, vector<1x8x1xf32>
    %99 = vector.shape_cast %98 : vector<1x8x1xf32> to vector<8x1xf32>
    %100 = vector.shape_cast %73 : vector<8x1xf32> to vector<1x8x1xf32>
    tpu.vector_store %arg7[%c1_54, %c0_55, %c0_56], %100 {strides = array<i32>} : memref<4x8x1xf32, #tpu.memory_space<vmem>>, vector<1x8x1xf32>,
    %101 = vector.extract_strided_slice %4 {offsets = [0, 16], sizes = [8, 8], strides = [1, 1]} : vector<8x32xbf16> to vector<8x8xbf16>
    %102 = vector.extract_strided_slice %6 {offsets = [0, 16], sizes = [8, 8], strides = [1, 1]} : vector<8x32xbf16> to vector<8x8xbf16>
    %103 = vector.extract_strided_slice %8 {offsets = [0, 16], sizes = [8, 8], strides = [1, 1]} : vector<8x32xbf16> to vector<8x8xbf16>
    "tpu.trace_start"() <{level = 10 : i32, message = "qd,kd->qk"}> : () -> ()
    %cst_57 = arith.constant dense<0.000000e+00> : vector<8x8xf32>
    %104 = tpu.matmul %101, %102, %cst_57 {dimension_numbers = #tpu.dot_dimension_numbers<[1], [1], [0], [0], [0, 0, 1, 0], [], []>} : vector<8x8xbf16>, vector<8x8xbf16>, vector<8x8xf32> -> vector<8x8xf32>
    "tpu.trace_stop"() : () -> ()
    %cst_58 = arith.constant 0.353553385 : f32
    %105 = vector.broadcast %cst_58 : f32 to vector<8x8xf32>
    %106 = arith.mulf %104, %105 : vector<8x8xf32>
    %cst_59 = arith.constant -1.000000e+30 : f32
    %107 = vector.broadcast %cst_59 : f32 to vector<8x8xf32>
    %108 = arith.select %20, %106, %107 : vector<8x8xi1>, vector<8x8xf32>
    %c2 = arith.constant 2 : index
    %c0_60 = arith.constant 0 : index
    %c0_61 = arith.constant 0 : index
    %109 = vector.load %arg7[%c2, %c0_60, %c0_61] : memref<4x8x1xf32, #tpu.memory_space<vmem>>, vector<1x8x1xf32>
    %110 = vector.shape_cast %109 : vector<1x8x1xf32> to vector<8x1xf32>
    %cst_62 = arith.constant dense<0xFF800000> : vector<8xf32>
    %111 = vector.multi_reduction <maximumf>, %108, %cst_62 [1] : vector<8x8xf32> to vector<8xf32>
    %112 = vector.shape_cast %111 : vector<8xf32> to vector<8x1xf32>
    %113 = arith.maximumf %110, %112 : vector<8x1xf32>
    %114 = arith.subf %110, %113 : vector<8x1xf32>
    %115 = math.exp %114 : vector<8x1xf32>
    %116 = vector.broadcast %113 : vector<8x1xf32> to vector<8x8xf32>
    %117 = arith.subf %108, %116 : vector<8x8xf32>
    %118 = math.exp %117 : vector<8x8xf32>
    %c2_63 = arith.constant 2 : index
    %c0_64 = arith.constant 0 : index
    %c0_65 = arith.constant 0 : index
    %119 = vector.load %arg8[%c2_63, %c0_64, %c0_65] : memref<4x8x1xf32, #tpu.memory_space<vmem>>, vector<1x8x1xf32>
    %120 = vector.shape_cast %119 : vector<1x8x1xf32> to vector<8x1xf32>
    %121 = arith.mulf %115, %120 : vector<8x1xf32>
    %cst_66 = arith.constant dense<0.000000e+00> : vector<8xf32>
    %122 = vector.multi_reduction <add>, %118, %cst_66 [1] : vector<8x8xf32> to vector<8xf32>
    %123 = vector.shape_cast %122 : vector<8xf32> to vector<8x1xf32>
    %124 = arith.addf %121, %123 : vector<8x1xf32>
    %c2_67 = arith.constant 2 : index
    %c0_68 = arith.constant 0 : index
    %c0_69 = arith.constant 0 : index
    %125 = vector.load %arg8[%c2_67, %c0_68, %c0_69] : memref<4x8x1xf32, #tpu.memory_space<vmem>>, vector<1x8x1xf32>
    %126 = vector.shape_cast %125 : vector<1x8x1xf32> to vector<8x1xf32>
    %127 = vector.shape_cast %124 : vector<8x1xf32> to vector<1x8x1xf32>
    tpu.vector_store %arg8[%c2_67, %c0_68, %c0_69], %127 {strides = array<i32>} : memref<4x8x1xf32, #tpu.memory_space<vmem>>, vector<1x8x1xf32>,
    %c2_70 = arith.constant 2 : index
    %c0_71 = arith.constant 0 : index
    %c0_72 = arith.constant 0 : index
    %128 = vector.load %arg9[%c2_70, %c0_71, %c0_72] : memref<4x8x8xf32, #tpu.memory_space<vmem>>, vector<1x8x8xf32>
    %129 = vector.shape_cast %128 : vector<1x8x8xf32> to vector<8x8xf32>
    %130 = vector.broadcast %115 : vector<8x1xf32> to vector<8x8xf32>
    %131 = arith.mulf %130, %129 : vector<8x8xf32>
    %132 = arith.truncf %118 : vector<8x8xf32> to vector<8x8xbf16>
    %cst_73 = arith.constant dense<0.000000e+00> : vector<8x8xf32>
    %133 = tpu.matmul %132, %103, %cst_73 {dimension_numbers = #tpu.dot_dimension_numbers<[1], [0], [0], [1], [0, 0, 1, 1], [], []>} : vector<8x8xbf16>, vector<8x8xbf16>, vector<8x8xf32> -> vector<8x8xf32>
    %134 = arith.addf %131, %133 : vector<8x8xf32>
    %c2_74 = arith.constant 2 : index
    %c0_75 = arith.constant 0 : index
    %c0_76 = arith.constant 0 : index
    %135 = vector.load %arg9[%c2_74, %c0_75, %c0_76] : memref<4x8x8xf32, #tpu.memory_space<vmem>>, vector<1x8x8xf32>
    %136 = vector.shape_cast %135 : vector<1x8x8xf32> to vector<8x8xf32>
    %137 = vector.shape_cast %134 : vector<8x8xf32> to vector<1x8x8xf32>
    tpu.vector_store %arg9[%c2_74, %c0_75, %c0_76], %137 {strides = array<i32>} : memref<4x8x8xf32, #tpu.memory_space<vmem>>, vector<1x8x8xf32>,
    %c2_77 = arith.constant 2 : index
    %c0_78 = arith.constant 0 : index
    %c0_79 = arith.constant 0 : index
    %138 = vector.load %arg7[%c2_77, %c0_78, %c0_79] : memref<4x8x1xf32, #tpu.memory_space<vmem>>, vector<1x8x1xf32>
    %139 = vector.shape_cast %138 : vector<1x8x1xf32> to vector<8x1xf32>
    %140 = vector.shape_cast %113 : vector<8x1xf32> to vector<1x8x1xf32>
    tpu.vector_store %arg7[%c2_77, %c0_78, %c0_79], %140 {strides = array<i32>} : memref<4x8x1xf32, #tpu.memory_space<vmem>>, vector<1x8x1xf32>,
    %141 = vector.extract_strided_slice %4 {offsets = [0, 24], sizes = [8, 8], strides = [1, 1]} : vector<8x32xbf16> to vector<8x8xbf16>
    %142 = vector.extract_strided_slice %6 {offsets = [0, 24], sizes = [8, 8], strides = [1, 1]} : vector<8x32xbf16> to vector<8x8xbf16>
    %143 = vector.extract_strided_slice %8 {offsets = [0, 24], sizes = [8, 8], strides = [1, 1]} : vector<8x32xbf16> to vector<8x8xbf16>
    "tpu.trace_start"() <{level = 10 : i32, message = "qd,kd->qk"}> : () -> ()
    %cst_80 = arith.constant dense<0.000000e+00> : vector<8x8xf32>
    %144 = tpu.matmul %141, %142, %cst_80 {dimension_numbers = #tpu.dot_dimension_numbers<[1], [1], [0], [0], [0, 0, 1, 0], [], []>} : vector<8x8xbf16>, vector<8x8xbf16>, vector<8x8xf32> -> vector<8x8xf32>
    "tpu.trace_stop"() : () -> ()
    %cst_81 = arith.constant 0.353553385 : f32
    %145 = vector.broadcast %cst_81 : f32 to vector<8x8xf32>
    %146 = arith.mulf %144, %145 : vector<8x8xf32>
    %cst_82 = arith.constant -1.000000e+30 : f32
    %147 = vector.broadcast %cst_82 : f32 to vector<8x8xf32>
    %148 = arith.select %20, %146, %147 : vector<8x8xi1>, vector<8x8xf32>
    %c3 = arith.constant 3 : index
    %c0_83 = arith.constant 0 : index
    %c0_84 = arith.constant 0 : index
    %149 = vector.load %arg7[%c3, %c0_83, %c0_84] : memref<4x8x1xf32, #tpu.memory_space<vmem>>, vector<1x8x1xf32>
    %150 = vector.shape_cast %149 : vector<1x8x1xf32> to vector<8x1xf32>
    %cst_85 = arith.constant dense<0xFF800000> : vector<8xf32>
    %151 = vector.multi_reduction <maximumf>, %148, %cst_85 [1] : vector<8x8xf32> to vector<8xf32>
    %152 = vector.shape_cast %151 : vector<8xf32> to vector<8x1xf32>
    %153 = arith.maximumf %150, %152 : vector<8x1xf32>
    %154 = arith.subf %150, %153 : vector<8x1xf32>
    %155 = math.exp %154 : vector<8x1xf32>
    %156 = vector.broadcast %153 : vector<8x1xf32> to vector<8x8xf32>
    %157 = arith.subf %148, %156 : vector<8x8xf32>
    %158 = math.exp %157 : vector<8x8xf32>
    %c3_86 = arith.constant 3 : index
    %c0_87 = arith.constant 0 : index
    %c0_88 = arith.constant 0 : index
    %159 = vector.load %arg8[%c3_86, %c0_87, %c0_88] : memref<4x8x1xf32, #tpu.memory_space<vmem>>, vector<1x8x1xf32>
    %160 = vector.shape_cast %159 : vector<1x8x1xf32> to vector<8x1xf32>
    %161 = arith.mulf %155, %160 : vector<8x1xf32>
    %cst_89 = arith.constant dense<0.000000e+00> : vector<8xf32>
    %162 = vector.multi_reduction <add>, %158, %cst_89 [1] : vector<8x8xf32> to vector<8xf32>
    %163 = vector.shape_cast %162 : vector<8xf32> to vector<8x1xf32>
    %164 = arith.addf %161, %163 : vector<8x1xf32>
    %c3_90 = arith.constant 3 : index
    %c0_91 = arith.constant 0 : index
    %c0_92 = arith.constant 0 : index
    %165 = vector.load %arg8[%c3_90, %c0_91, %c0_92] : memref<4x8x1xf32, #tpu.memory_space<vmem>>, vector<1x8x1xf32>
    %166 = vector.shape_cast %165 : vector<1x8x1xf32> to vector<8x1xf32>
    %167 = vector.shape_cast %164 : vector<8x1xf32> to vector<1x8x1xf32>
    tpu.vector_store %arg8[%c3_90, %c0_91, %c0_92], %167 {strides = array<i32>} : memref<4x8x1xf32, #tpu.memory_space<vmem>>, vector<1x8x1xf32>,
    %c3_93 = arith.constant 3 : index
    %c0_94 = arith.constant 0 : index
    %c0_95 = arith.constant 0 : index
    %168 = vector.load %arg9[%c3_93, %c0_94, %c0_95] : memref<4x8x8xf32, #tpu.memory_space<vmem>>, vector<1x8x8xf32>
    %169 = vector.shape_cast %168 : vector<1x8x8xf32> to vector<8x8xf32>
    %170 = vector.broadcast %155 : vector<8x1xf32> to vector<8x8xf32>
    %171 = arith.mulf %170, %169 : vector<8x8xf32>
    %172 = arith.truncf %158 : vector<8x8xf32> to vector<8x8xbf16>
    %cst_96 = arith.constant dense<0.000000e+00> : vector<8x8xf32>
    %173 = tpu.matmul %172, %143, %cst_96 {dimension_numbers = #tpu.dot_dimension_numbers<[1], [0], [0], [1], [0, 0, 1, 1], [], []>} : vector<8x8xbf16>, vector<8x8xbf16>, vector<8x8xf32> -> vector<8x8xf32>
    %174 = arith.addf %171, %173 : vector<8x8xf32>
    %c3_97 = arith.constant 3 : index
    %c0_98 = arith.constant 0 : index
    %c0_99 = arith.constant 0 : index
    %175 = vector.load %arg9[%c3_97, %c0_98, %c0_99] : memref<4x8x8xf32, #tpu.memory_space<vmem>>, vector<1x8x8xf32>
    %176 = vector.shape_cast %175 : vector<1x8x8xf32> to vector<8x8xf32>
    %177 = vector.shape_cast %174 : vector<8x8xf32> to vector<1x8x8xf32>
    tpu.vector_store %arg9[%c3_97, %c0_98, %c0_99], %177 {strides = array<i32>} : memref<4x8x8xf32, #tpu.memory_space<vmem>>, vector<1x8x8xf32>,
    %c3_100 = arith.constant 3 : index
    %c0_101 = arith.constant 0 : index
    %c0_102 = arith.constant 0 : index
    %178 = vector.load %arg7[%c3_100, %c0_101, %c0_102] : memref<4x8x1xf32, #tpu.memory_space<vmem>>, vector<1x8x1xf32>
    %179 = vector.shape_cast %178 : vector<1x8x1xf32> to vector<8x1xf32>
    %180 = vector.shape_cast %153 : vector<8x1xf32> to vector<1x8x1xf32>
    tpu.vector_store %arg7[%c3_100, %c0_101, %c0_102], %180 {strides = array<i32>} : memref<4x8x1xf32, #tpu.memory_space<vmem>>, vector<1x8x1xf32>,
    %c0_i32_103 = arith.constant 0 : i32
    %181 = arith.cmpi eq, %arg2, %c0_i32_103 : i32
    %182 = arith.extui %181 : i1 to i32
    %c0_i32_104 = arith.constant 0 : i32
    %183 = arith.cmpi ne, %182, %c0_i32_104 : i32
    scf.if %183 {
      %c0_105 = arith.constant 0 : index
      %c0_106 = arith.constant 0 : index
      %c0_107 = arith.constant 0 : index
      %184 = vector.load %arg8[%c0_105, %c0_106, %c0_107] : memref<4x8x1xf32, #tpu.memory_space<vmem>>, vector<1x8x1xf32>
      %185 = vector.shape_cast %184 : vector<1x8x1xf32> to vector<8x1xf32>
      %186 = tpu.reciprocal %185 {approx = true} : vector<8x1xf32> -> vector<8x1xf32>
      %c0_108 = arith.constant 0 : index
      %c0_109 = arith.constant 0 : index
      %c0_110 = arith.constant 0 : index
      %187 = vector.load %arg9[%c0_108, %c0_109, %c0_110] : memref<4x8x8xf32, #tpu.memory_space<vmem>>, vector<1x8x8xf32>
      %188 = vector.shape_cast %187 : vector<1x8x8xf32> to vector<8x8xf32>
      %189 = vector.broadcast %186 : vector<8x1xf32> to vector<8x8xf32>
      %190 = arith.mulf %188, %189 : vector<8x8xf32>
      %191 = arith.truncf %190 : vector<8x8xf32> to vector<8x8xbf16>
      %c0_111 = arith.constant 0 : index
      %c0_112 = arith.constant 0 : index
      %c0_113 = arith.constant 0 : index
      %192 = vector.load %arg6[%c0_111, %c0_112, %c0_113] : memref<1x8x32xbf16, #tpu.memory_space<vmem>>, vector<1x8x8xbf16>
      %193 = vector.shape_cast %192 : vector<1x8x8xbf16> to vector<8x8xbf16>
      %194 = vector.shape_cast %191 : vector<8x8xbf16> to vector<1x8x8xbf16>
      tpu.vector_store %arg6[%c0_111, %c0_112, %c0_113], %194 {strides = array<i32>} : memref<1x8x32xbf16, #tpu.memory_space<vmem>>, vector<1x8x8xbf16>,
      %c1_114 = arith.constant 1 : index
      %c0_115 = arith.constant 0 : index
      %c0_116 = arith.constant 0 : index
      %195 = vector.load %arg8[%c1_114, %c0_115, %c0_116] : memref<4x8x1xf32, #tpu.memory_space<vmem>>, vector<1x8x1xf32>
      %196 = vector.shape_cast %195 : vector<1x8x1xf32> to vector<8x1xf32>
      %197 = tpu.reciprocal %196 {approx = true} : vector<8x1xf32> -> vector<8x1xf32>
      %c1_117 = arith.constant 1 : index
      %c0_118 = arith.constant 0 : index
      %c0_119 = arith.constant 0 : index
      %198 = vector.load %arg9[%c1_117, %c0_118, %c0_119] : memref<4x8x8xf32, #tpu.memory_space<vmem>>, vector<1x8x8xf32>
      %199 = vector.shape_cast %198 : vector<1x8x8xf32> to vector<8x8xf32>
      %200 = vector.broadcast %197 : vector<8x1xf32> to vector<8x8xf32>
      %201 = arith.mulf %199, %200 : vector<8x8xf32>
      %202 = arith.truncf %201 : vector<8x8xf32> to vector<8x8xbf16>
      %c0_120 = arith.constant 0 : index
      %c0_121 = arith.constant 0 : index
      %c8 = arith.constant 8 : index
      %203 = vector.load %arg6[%c0_120, %c0_121, %c8] : memref<1x8x32xbf16, #tpu.memory_space<vmem>>, vector<1x8x8xbf16>
      %204 = vector.shape_cast %203 : vector<1x8x8xbf16> to vector<8x8xbf16>
      %205 = vector.shape_cast %202 : vector<8x8xbf16> to vector<1x8x8xbf16>
      tpu.vector_store %arg6[%c0_120, %c0_121, %c8], %205 {strides = array<i32>} : memref<1x8x32xbf16, #tpu.memory_space<vmem>>, vector<1x8x8xbf16>,
      %c2_122 = arith.constant 2 : index
      %c0_123 = arith.constant 0 : index
      %c0_124 = arith.constant 0 : index
      %206 = vector.load %arg8[%c2_122, %c0_123, %c0_124] : memref<4x8x1xf32, #tpu.memory_space<vmem>>, vector<1x8x1xf32>
      %207 = vector.shape_cast %206 : vector<1x8x1xf32> to vector<8x1xf32>
      %208 = tpu.reciprocal %207 {approx = true} : vector<8x1xf32> -> vector<8x1xf32>
      %c2_125 = arith.constant 2 : index
      %c0_126 = arith.constant 0 : index
      %c0_127 = arith.constant 0 : index
      %209 = vector.load %arg9[%c2_125, %c0_126, %c0_127] : memref<4x8x8xf32, #tpu.memory_space<vmem>>, vector<1x8x8xf32>
      %210 = vector.shape_cast %209 : vector<1x8x8xf32> to vector<8x8xf32>
      %211 = vector.broadcast %208 : vector<8x1xf32> to vector<8x8xf32>
      %212 = arith.mulf %210, %211 : vector<8x8xf32>
      %213 = arith.truncf %212 : vector<8x8xf32> to vector<8x8xbf16>
      %c0_128 = arith.constant 0 : index
      %c0_129 = arith.constant 0 : index
      %c16 = arith.constant 16 : index
      %214 = vector.load %arg6[%c0_128, %c0_129, %c16] : memref<1x8x32xbf16, #tpu.memory_space<vmem>>, vector<1x8x8xbf16>
      %215 = vector.shape_cast %214 : vector<1x8x8xbf16> to vector<8x8xbf16>
      %216 = vector.shape_cast %213 : vector<8x8xbf16> to vector<1x8x8xbf16>
      tpu.vector_store %arg6[%c0_128, %c0_129, %c16], %216 {strides = array<i32>} : memref<1x8x32xbf16, #tpu.memory_space<vmem>>, vector<1x8x8xbf16>,
      %c3_130 = arith.constant 3 : index
      %c0_131 = arith.constant 0 : index
      %c0_132 = arith.constant 0 : index
      %217 = vector.load %arg8[%c3_130, %c0_131, %c0_132] : memref<4x8x1xf32, #tpu.memory_space<vmem>>, vector<1x8x1xf32>
      %218 = vector.shape_cast %217 : vector<1x8x1xf32> to vector<8x1xf32>
      %219 = tpu.reciprocal %218 {approx = true} : vector<8x1xf32> -> vector<8x1xf32>
      %c3_133 = arith.constant 3 : index
      %c0_134 = arith.constant 0 : index
      %c0_135 = arith.constant 0 : index
      %220 = vector.load %arg9[%c3_133, %c0_134, %c0_135] : memref<4x8x8xf32, #tpu.memory_space<vmem>>, vector<1x8x8xf32>
      %221 = vector.shape_cast %220 : vector<1x8x8xf32> to vector<8x8xf32>
      %222 = vector.broadcast %219 : vector<8x1xf32> to vector<8x8xf32>
      %223 = arith.mulf %221, %222 : vector<8x8xf32>
      %224 = arith.truncf %223 : vector<8x8xf32> to vector<8x8xbf16>
      %c0_136 = arith.constant 0 : index
      %c0_137 = arith.constant 0 : index
      %c24 = arith.constant 24 : index
      %225 = vector.load %arg6[%c0_136, %c0_137, %c24] : memref<1x8x32xbf16, #tpu.memory_space<vmem>>, vector<1x8x8xbf16>
      %226 = vector.shape_cast %225 : vector<1x8x8xbf16> to vector<8x8xbf16>
      %227 = vector.shape_cast %224 : vector<8x8xbf16> to vector<1x8x8xbf16>
      tpu.vector_store %arg6[%c0_136, %c0_137, %c24], %227 {strides = array<i32>} : memref<1x8x32xbf16, #tpu.memory_space<vmem>>, vector<1x8x8xbf16>,
    } else {
    }
    return
  }
  func.func @transform_0(%arg0: i32, %arg1: i32, %arg2: i32) -> (i32, i32, i32) {
    %c0_i32 = arith.constant 0 : i32
    %c0_i32_0 = arith.constant 0 : i32
    return %arg0, %arg1, %c0_i32 : i32, i32, i32
  }
  func.func @transform_1(%arg0: i32, %arg1: i32, %arg2: i32) -> (i32, i32, i32) {
    %c0_i32 = arith.constant 0 : i32
    %c0_i32_0 = arith.constant 0 : i32
    return %arg0, %arg2, %c0_i32 : i32, i32, i32
  }
  func.func @transform_2(%arg0: i32, %arg1: i32, %arg2: i32) -> (i32, i32, i32) {
    %c0_i32 = arith.constant 0 : i32
    %c0_i32_0 = arith.constant 0 : i32
    return %arg0, %arg2, %c0_i32 : i32, i32, i32
  }
  func.func @transform_3(%arg0: i32, %arg1: i32, %arg2: i32) -> (i32, i32, i32) {
    %c0_i32 = arith.constant 0 : i32
    %c0_i32_0 = arith.constant 0 : i32
    return %arg0, %arg1, %c0_i32 : i32, i32, i32
  }
}

module attributes {stable_mosaic.version = 11 : i64} {
  func.func @_linear_ln_kernel(%arg0: i32, %arg1: i32, %arg2: i32, %arg3: memref<16x128xbf16, #tpu.memory_space<vmem>>, %arg4: memref<128x128xbf16, #tpu.memory_space<vmem>>, %arg5: memref<1x128xf32, #tpu.memory_space<vmem>>, %arg6: memref<16x128xf32, #tpu.memory_space<vmem>>, %arg7: memref<1x128xf32, #tpu.memory_space<vmem>>, %arg8: memref<1x128xf32, #tpu.memory_space<vmem>>, %arg9: memref<16x128xf32, #tpu.memory_space<vmem>>, %arg10: memref<16x128xf32, #tpu.memory_space<vmem>>) attributes {dimension_semantics = [#tpu.dimension_semantics<parallel>, #tpu.dimension_semantics<parallel>, #tpu.dimension_semantics<arbitrary>], iteration_bounds = array<i64: 1, 1, 1>, scalar_prefetch = 0 : i64, scratch_operands = 1 : i64, tpu.core_type = #tpu.core_type<tc>, window_params = [{transform_indices = @transform_0, window_bounds = array<i64: 16, 128>}, {transform_indices = @transform_1, window_bounds = array<i64: 128, 128>}, {transform_indices = @transform_2, window_bounds = array<i64: 1, 128>}, {transform_indices = @transform_3, window_bounds = array<i64: 16, 128>}, {transform_indices = @transform_4, window_bounds = array<i64: 1, 128>}, {transform_indices = @transform_5, window_bounds = array<i64: 1, 128>}, {transform_indices = @transform_6, window_bounds = array<i64: 16, 128>}]} {
    %c0_i32 = arith.constant 0 : i32
    %0 = arith.cmpi eq, %arg2, %c0_i32 : i32
    %1 = arith.extui %0 : i1 to i32
    %c0_i32_0 = arith.constant 0 : i32
    %2 = arith.cmpi ne, %1, %c0_i32_0 : i32
    scf.if %2 {
      %cst_10 = arith.constant 0.000000e+00 : f32
      %12 = vector.broadcast %cst_10 : f32 to vector<16x128xf32>
      %c0_11 = arith.constant 0 : index
      %c0_12 = arith.constant 0 : index
      %13 = vector.load %arg10[%c0_11, %c0_12] : memref<16x128xf32, #tpu.memory_space<vmem>>, vector<16x128xf32>
      tpu.vector_store %arg10[%c0_11, %c0_12], %12 {strides = array<i32>} : memref<16x128xf32, #tpu.memory_space<vmem>>, vector<16x128xf32>,
    } else {
    }
    %c0 = arith.constant 0 : index
    %c0_1 = arith.constant 0 : index
    %3 = vector.load %arg10[%c0, %c0_1] : memref<16x128xf32, #tpu.memory_space<vmem>>, vector<16x128xf32>
    %c0_2 = arith.constant 0 : index
    %c0_3 = arith.constant 0 : index
    %4 = vector.load %arg3[%c0_2, %c0_3] : memref<16x128xbf16, #tpu.memory_space<vmem>>, vector<16x128xbf16>
    %c0_4 = arith.constant 0 : index
    %c0_5 = arith.constant 0 : index
    %5 = vector.load %arg4[%c0_4, %c0_5] : memref<128x128xbf16, #tpu.memory_space<vmem>>, vector<128x128xbf16>
    %cst = arith.constant dense<0.000000e+00> : vector<16x128xf32>
    %6 = tpu.matmul %4, %5, %cst {dimension_numbers = #tpu.dot_dimension_numbers<[1], [0], [0], [1], [0, 0, 1, 1], [], []>} : vector<16x128xbf16>, vector<128x128xbf16>, vector<16x128xf32> -> vector<16x128xf32>
    %7 = arith.addf %3, %6 : vector<16x128xf32>
    %c0_6 = arith.constant 0 : index
    %c0_7 = arith.constant 0 : index
    %8 = vector.load %arg10[%c0_6, %c0_7] : memref<16x128xf32, #tpu.memory_space<vmem>>, vector<16x128xf32>
    tpu.vector_store %arg10[%c0_6, %c0_7], %7 {strides = array<i32>} : memref<16x128xf32, #tpu.memory_space<vmem>>, vector<16x128xf32>,
    %c0_i32_8 = arith.constant 0 : i32
    %9 = arith.cmpi eq, %arg2, %c0_i32_8 : i32
    %10 = arith.extui %9 : i1 to i32
    %c0_i32_9 = arith.constant 0 : i32
    %11 = arith.cmpi ne, %10, %c0_i32_9 : i32
    scf.if %11 {
      %c0_10 = arith.constant 0 : index
      %c0_11 = arith.constant 0 : index
      %12 = vector.load %arg10[%c0_10, %c0_11] : memref<16x128xf32, #tpu.memory_space<vmem>>, vector<16x128xf32>
      %c0_12 = arith.constant 0 : index
      %c0_13 = arith.constant 0 : index
      %13 = vector.load %arg5[%c0_12, %c0_13] : memref<1x128xf32, #tpu.memory_space<vmem>>, vector<1x128xf32>
      %14 = vector.broadcast %13 : vector<1x128xf32> to vector<16x128xf32>
      %15 = arith.addf %12, %14 : vector<16x128xf32>
      %c0_14 = arith.constant 0 : index
      %c0_15 = arith.constant 0 : index
      %16 = vector.load %arg6[%c0_14, %c0_15] : memref<16x128xf32, #tpu.memory_space<vmem>>, vector<16x128xf32>
      %17 = arith.addf %15, %16 : vector<16x128xf32>
      %18 = tpu.iota {dimensions = array<i32: 1>} : vector<16x128xi32>
      %c32_i32 = arith.constant 32 : i32
      %19 = vector.broadcast %c32_i32 : i32 to vector<16x128xi32>
      %20 = arith.cmpi slt, %18, %19 : vector<16x128xi32>
      %21 = arith.extui %20 : vector<16x128xi1> to vector<16x128xi32>
      %22 = arith.sitofp %21 : vector<16x128xi32> to vector<16x128xf32>
      %23 = arith.mulf %17, %22 : vector<16x128xf32>
      %cst_16 = arith.constant dense<0.000000e+00> : vector<16xf32>
      %24 = vector.multi_reduction <add>, %23, %cst_16 [1] : vector<16x128xf32> to vector<16xf32>
      %25 = vector.shape_cast %24 : vector<16xf32> to vector<16x1xf32>
      %cst_17 = arith.constant 3.200000e+01 : f32
      %26 = vector.broadcast %cst_17 : f32 to vector<16x1xf32>
      %27 = arith.divf %25, %26 : vector<16x1xf32>
      %28 = vector.broadcast %27 : vector<16x1xf32> to vector<16x128xf32>
      %29 = arith.subf %17, %28 : vector<16x128xf32>
      %30 = arith.mulf %29, %22 : vector<16x128xf32>
      %31 = arith.mulf %30, %30 : vector<16x128xf32>
      %cst_18 = arith.constant dense<0.000000e+00> : vector<16xf32>
      %32 = vector.multi_reduction <add>, %31, %cst_18 [1] : vector<16x128xf32> to vector<16xf32>
      %33 = vector.shape_cast %32 : vector<16xf32> to vector<16x1xf32>
      %cst_19 = arith.constant 3.200000e+01 : f32
      %34 = vector.broadcast %cst_19 : f32 to vector<16x1xf32>
      %35 = arith.divf %33, %34 : vector<16x1xf32>
      %cst_20 = arith.constant 9.99999974E-6 : f32
      %36 = vector.broadcast %cst_20 : f32 to vector<16x1xf32>
      %37 = arith.addf %35, %36 : vector<16x1xf32>
      %38 = math.rsqrt %37 : vector<16x1xf32>
      %39 = vector.broadcast %38 : vector<16x1xf32> to vector<16x128xf32>
      %40 = arith.mulf %30, %39 : vector<16x128xf32>
      %c0_21 = arith.constant 0 : index
      %c0_22 = arith.constant 0 : index
      %41 = vector.load %arg7[%c0_21, %c0_22] : memref<1x128xf32, #tpu.memory_space<vmem>>, vector<1x128xf32>
      %42 = vector.broadcast %41 : vector<1x128xf32> to vector<16x128xf32>
      %43 = arith.mulf %40, %42 : vector<16x128xf32>
      %c0_23 = arith.constant 0 : index
      %c0_24 = arith.constant 0 : index
      %44 = vector.load %arg8[%c0_23, %c0_24] : memref<1x128xf32, #tpu.memory_space<vmem>>, vector<1x128xf32>
      %45 = vector.broadcast %44 : vector<1x128xf32> to vector<16x128xf32>
      %46 = arith.addf %43, %45 : vector<16x128xf32>
      %c0_25 = arith.constant 0 : index
      %c0_26 = arith.constant 0 : index
      %47 = vector.load %arg9[%c0_25, %c0_26] : memref<16x128xf32, #tpu.memory_space<vmem>>, vector<16x128xf32>
      tpu.vector_store %arg9[%c0_25, %c0_26], %46 {strides = array<i32>} : memref<16x128xf32, #tpu.memory_space<vmem>>, vector<16x128xf32>,
    } else {
    }
    return
  }
  func.func @transform_0(%arg0: i32, %arg1: i32, %arg2: i32) -> (i32, i32) {
    %c0_i32 = arith.constant 0 : i32
    return %arg0, %arg2 : i32, i32
  }
  func.func @transform_1(%arg0: i32, %arg1: i32, %arg2: i32) -> (i32, i32) {
    %c0_i32 = arith.constant 0 : i32
    return %arg2, %arg1 : i32, i32
  }
  func.func @transform_2(%arg0: i32, %arg1: i32, %arg2: i32) -> (i32, i32) {
    %c0_i32 = arith.constant 0 : i32
    %c0_i32_0 = arith.constant 0 : i32
    return %c0_i32, %arg1 : i32, i32
  }
  func.func @transform_3(%arg0: i32, %arg1: i32, %arg2: i32) -> (i32, i32) {
    %c0_i32 = arith.constant 0 : i32
    return %arg0, %arg1 : i32, i32
  }
  func.func @transform_4(%arg0: i32, %arg1: i32, %arg2: i32) -> (i32, i32) {
    %c0_i32 = arith.constant 0 : i32
    %c0_i32_0 = arith.constant 0 : i32
    return %c0_i32, %arg1 : i32, i32
  }
  func.func @transform_5(%arg0: i32, %arg1: i32, %arg2: i32) -> (i32, i32) {
    %c0_i32 = arith.constant 0 : i32
    %c0_i32_0 = arith.constant 0 : i32
    return %c0_i32, %arg1 : i32, i32
  }
  func.func @transform_6(%arg0: i32, %arg1: i32, %arg2: i32) -> (i32, i32) {
    %c0_i32 = arith.constant 0 : i32
    return %arg0, %arg1 : i32, i32
  }
}

module attributes {stable_mosaic.version = 11 : i64} {
  func.func @_flash_attn_kernel(%arg0: i32, %arg1: i32, %arg2: i32, %arg3: memref<1x8x32xbf16, #tpu.memory_space<vmem>>, %arg4: memref<1x8x32xbf16, #tpu.memory_space<vmem>>, %arg5: memref<1x8x32xbf16, #tpu.memory_space<vmem>>, %arg6: memref<1x8x32xbf16, #tpu.memory_space<vmem>>, %arg7: memref<4x8x1xf32, #tpu.memory_space<vmem>>, %arg8: memref<4x8x1xf32, #tpu.memory_space<vmem>>, %arg9: memref<4x8x8xf32, #tpu.memory_space<vmem>>) attributes {dimension_semantics = [#tpu.dimension_semantics<parallel>, #tpu.dimension_semantics<parallel>, #tpu.dimension_semantics<arbitrary>], iteration_bounds = array<i64: 2, 1, 1>, scalar_prefetch = 0 : i64, scratch_operands = 3 : i64, tpu.core_type = #tpu.core_type<tc>, window_params = [{transform_indices = @transform_0, window_bounds = array<i64: 1, 8, 32>}, {transform_indices = @transform_1, window_bounds = array<i64: 1, 8, 32>}, {transform_indices = @transform_2, window_bounds = array<i64: 1, 8, 32>}, {transform_indices = @transform_3, window_bounds = array<i64: 1, 8, 32>}]} {
    %c0_i32 = arith.constant 0 : i32
    %0 = arith.cmpi eq, %arg2, %c0_i32 : i32
    %1 = arith.extui %0 : i1 to i32
    %c0_i32_0 = arith.constant 0 : i32
    %2 = arith.cmpi ne, %1, %c0_i32_0 : i32
    scf.if %2 {
      %cst_99 = arith.constant 0xFF800000 : f32
      %164 = vector.broadcast %cst_99 : f32 to vector<4x8x1xf32>
      %c0_100 = arith.constant 0 : index
      %c0_101 = arith.constant 0 : index
      %c0_102 = arith.constant 0 : index
      %165 = vector.load %arg7[%c0_100, %c0_101, %c0_102] : memref<4x8x1xf32, #tpu.memory_space<vmem>>, vector<4x8x1xf32>
      tpu.vector_store %arg7[%c0_100, %c0_101, %c0_102], %164 {strides = array<i32>} : memref<4x8x1xf32, #tpu.memory_space<vmem>>, vector<4x8x1xf32>,
      %cst_103 = arith.constant 0.000000e+00 : f32
      %166 = vector.broadcast %cst_103 : f32 to vector<4x8x1xf32>
      %c0_104 = arith.constant 0 : index
      %c0_105 = arith.constant 0 : index
      %c0_106 = arith.constant 0 : index
      %167 = vector.load %arg8[%c0_104, %c0_105, %c0_106] : memref<4x8x1xf32, #tpu.memory_space<vmem>>, vector<4x8x1xf32>
      tpu.vector_store %arg8[%c0_104, %c0_105, %c0_106], %166 {strides = array<i32>} : memref<4x8x1xf32, #tpu.memory_space<vmem>>, vector<4x8x1xf32>,
      %cst_107 = arith.constant 0.000000e+00 : f32
      %168 = vector.broadcast %cst_107 : f32 to vector<4x8x8xf32>
      %c0_108 = arith.constant 0 : index
      %c0_109 = arith.constant 0 : index
      %c0_110 = arith.constant 0 : index
      %169 = vector.load %arg9[%c0_108, %c0_109, %c0_110] : memref<4x8x8xf32, #tpu.memory_space<vmem>>, vector<4x8x8xf32>
      tpu.vector_store %arg9[%c0_108, %c0_109, %c0_110], %168 {strides = array<i32>} : memref<4x8x8xf32, #tpu.memory_space<vmem>>, vector<4x8x8xf32>,
    } else {
    }
    %c0 = arith.constant 0 : index
    %c0_1 = arith.constant 0 : index
    %c0_2 = arith.constant 0 : index
    %3 = vector.load %arg3[%c0, %c0_1, %c0_2] : memref<1x8x32xbf16, #tpu.memory_space<vmem>>, vector<1x8x32xbf16>
    %4 = vector.shape_cast %3 : vector<1x8x32xbf16> to vector<8x32xbf16>
    %c0_3 = arith.constant 0 : index
    %c0_4 = arith.constant 0 : index
    %c0_5 = arith.constant 0 : index
    %5 = vector.load %arg4[%c0_3, %c0_4, %c0_5] : memref<1x8x32xbf16, #tpu.memory_space<vmem>>, vector<1x8x32xbf16>
    %6 = vector.shape_cast %5 : vector<1x8x32xbf16> to vector<8x32xbf16>
    %c0_6 = arith.constant 0 : index
    %c0_7 = arith.constant 0 : index
    %c0_8 = arith.constant 0 : index
    %7 = vector.load %arg5[%c0_6, %c0_7, %c0_8] : memref<1x8x32xbf16, #tpu.memory_space<vmem>>, vector<1x8x32xbf16>
    %8 = vector.shape_cast %7 : vector<1x8x32xbf16> to vector<8x32xbf16>
    %9 = vector.extract_strided_slice %4 {offsets = [0, 0], sizes = [8, 8], strides = [1, 1]} : vector<8x32xbf16> to vector<8x8xbf16>
    %10 = vector.extract_strided_slice %6 {offsets = [0, 0], sizes = [8, 8], strides = [1, 1]} : vector<8x32xbf16> to vector<8x8xbf16>
    %11 = vector.extract_strided_slice %8 {offsets = [0, 0], sizes = [8, 8], strides = [1, 1]} : vector<8x32xbf16> to vector<8x8xbf16>
    "tpu.trace_start"() <{level = 10 : i32, message = "qd,kd->qk"}> : () -> ()
    %cst = arith.constant dense<0.000000e+00> : vector<8x8xf32>
    %12 = tpu.matmul %9, %10, %cst {dimension_numbers = #tpu.dot_dimension_numbers<[1], [1], [0], [0], [0, 0, 1, 0], [], []>} : vector<8x8xbf16>, vector<8x8xbf16>, vector<8x8xf32> -> vector<8x8xf32>
    "tpu.trace_stop"() : () -> ()
    %cst_9 = arith.constant 0.353553385 : f32
    %13 = vector.broadcast %cst_9 : f32 to vector<8x8xf32>
    %14 = arith.mulf %12, %13 : vector<8x8xf32>
    %c0_10 = arith.constant 0 : index
    %c0_11 = arith.constant 0 : index
    %c0_12 = arith.constant 0 : index
    %15 = vector.load %arg7[%c0_10, %c0_11, %c0_12] : memref<4x8x1xf32, #tpu.memory_space<vmem>>, vector<1x8x1xf32>
    %16 = vector.shape_cast %15 : vector<1x8x1xf32> to vector<8x1xf32>
    %cst_13 = arith.constant dense<0xFF800000> : vector<8xf32>
    %17 = vector.multi_reduction <maximumf>, %14, %cst_13 [1] : vector<8x8xf32> to vector<8xf32>
    %18 = vector.shape_cast %17 : vector<8xf32> to vector<8x1xf32>
    %19 = arith.maximumf %16, %18 : vector<8x1xf32>
    %20 = arith.subf %16, %19 : vector<8x1xf32>
    %21 = math.exp %20 : vector<8x1xf32>
    %22 = vector.broadcast %19 : vector<8x1xf32> to vector<8x8xf32>
    %23 = arith.subf %14, %22 : vector<8x8xf32>
    %24 = math.exp %23 : vector<8x8xf32>
    %c0_14 = arith.constant 0 : index
    %c0_15 = arith.constant 0 : index
    %c0_16 = arith.constant 0 : index
    %25 = vector.load %arg8[%c0_14, %c0_15, %c0_16] : memref<4x8x1xf32, #tpu.memory_space<vmem>>, vector<1x8x1xf32>
    %26 = vector.shape_cast %25 : vector<1x8x1xf32> to vector<8x1xf32>
    %27 = arith.mulf %21, %26 : vector<8x1xf32>
    %cst_17 = arith.constant dense<0.000000e+00> : vector<8xf32>
    %28 = vector.multi_reduction <add>, %24, %cst_17 [1] : vector<8x8xf32> to vector<8xf32>
    %29 = vector.shape_cast %28 : vector<8xf32> to vector<8x1xf32>
    %30 = arith.addf %27, %29 : vector<8x1xf32>
    %c0_18 = arith.constant 0 : index
    %c0_19 = arith.constant 0 : index
    %c0_20 = arith.constant 0 : index
    %31 = vector.load %arg8[%c0_18, %c0_19, %c0_20] : memref<4x8x1xf32, #tpu.memory_space<vmem>>, vector<1x8x1xf32>
    %32 = vector.shape_cast %31 : vector<1x8x1xf32> to vector<8x1xf32>
    %33 = vector.shape_cast %30 : vector<8x1xf32> to vector<1x8x1xf32>
    tpu.vector_store %arg8[%c0_18, %c0_19, %c0_20], %33 {strides = array<i32>} : memref<4x8x1xf32, #tpu.memory_space<vmem>>, vector<1x8x1xf32>,
    %c0_21 = arith.constant 0 : index
    %c0_22 = arith.constant 0 : index
    %c0_23 = arith.constant 0 : index
    %34 = vector.load %arg9[%c0_21, %c0_22, %c0_23] : memref<4x8x8xf32, #tpu.memory_space<vmem>>, vector<1x8x8xf32>
    %35 = vector.shape_cast %34 : vector<1x8x8xf32> to vector<8x8xf32>
    %36 = vector.broadcast %21 : vector<8x1xf32> to vector<8x8xf32>
    %37 = arith.mulf %36, %35 : vector<8x8xf32>
    %38 = arith.truncf %24 : vector<8x8xf32> to vector<8x8xbf16>
    %cst_24 = arith.constant dense<0.000000e+00> : vector<8x8xf32>
    %39 = tpu.matmul %38, %11, %cst_24 {dimension_numbers = #tpu.dot_dimension_numbers<[1], [0], [0], [1], [0, 0, 1, 1], [], []>} : vector<8x8xbf16>, vector<8x8xbf16>, vector<8x8xf32> -> vector<8x8xf32>
    %40 = arith.addf %37, %39 : vector<8x8xf32>
    %c0_25 = arith.constant 0 : index
    %c0_26 = arith.constant 0 : index
    %c0_27 = arith.constant 0 : index
    %41 = vector.load %arg9[%c0_25, %c0_26, %c0_27] : memref<4x8x8xf32, #tpu.memory_space<vmem>>, vector<1x8x8xf32>
    %42 = vector.shape_cast %41 : vector<1x8x8xf32> to vector<8x8xf32>
    %43 = vector.shape_cast %40 : vector<8x8xf32> to vector<1x8x8xf32>
    tpu.vector_store %arg9[%c0_25, %c0_26, %c0_27], %43 {strides = array<i32>} : memref<4x8x8xf32, #tpu.memory_space<vmem>>, vector<1x8x8xf32>,
    %c0_28 = arith.constant 0 : index
    %c0_29 = arith.constant 0 : index
    %c0_30 = arith.constant 0 : index
    %44 = vector.load %arg7[%c0_28, %c0_29, %c0_30] : memref<4x8x1xf32, #tpu.memory_space<vmem>>, vector<1x8x1xf32>
    %45 = vector.shape_cast %44 : vector<1x8x1xf32> to vector<8x1xf32>
    %46 = vector.shape_cast %19 : vector<8x1xf32> to vector<1x8x1xf32>
    tpu.vector_store %arg7[%c0_28, %c0_29, %c0_30], %46 {strides = array<i32>} : memref<4x8x1xf32, #tpu.memory_space<vmem>>, vector<1x8x1xf32>,
    %47 = vector.extract_strided_slice %4 {offsets = [0, 8], sizes = [8, 8], strides = [1, 1]} : vector<8x32xbf16> to vector<8x8xbf16>
    %48 = vector.extract_strided_slice %6 {offsets = [0, 8], sizes = [8, 8], strides = [1, 1]} : vector<8x32xbf16> to vector<8x8xbf16>
    %49 = vector.extract_strided_slice %8 {offsets = [0, 8], sizes = [8, 8], strides = [1, 1]} : vector<8x32xbf16> to vector<8x8xbf16>
    "tpu.trace_start"() <{level = 10 : i32, message = "qd,kd->qk"}> : () -> ()
    %cst_31 = arith.constant dense<0.000000e+00> : vector<8x8xf32>
    %50 = tpu.matmul %47, %48, %cst_31 {dimension_numbers = #tpu.dot_dimension_numbers<[1], [1], [0], [0], [0, 0, 1, 0], [], []>} : vector<8x8xbf16>, vector<8x8xbf16>, vector<8x8xf32> -> vector<8x8xf32>
    "tpu.trace_stop"() : () -> ()
    %cst_32 = arith.constant 0.353553385 : f32
    %51 = vector.broadcast %cst_32 : f32 to vector<8x8xf32>
    %52 = arith.mulf %50, %51 : vector<8x8xf32>
    %c1 = arith.constant 1 : index
    %c0_33 = arith.constant 0 : index
    %c0_34 = arith.constant 0 : index
    %53 = vector.load %arg7[%c1, %c0_33, %c0_34] : memref<4x8x1xf32, #tpu.memory_space<vmem>>, vector<1x8x1xf32>
    %54 = vector.shape_cast %53 : vector<1x8x1xf32> to vector<8x1xf32>
    %cst_35 = arith.constant dense<0xFF800000> : vector<8xf32>
    %55 = vector.multi_reduction <maximumf>, %52, %cst_35 [1] : vector<8x8xf32> to vector<8xf32>
    %56 = vector.shape_cast %55 : vector<8xf32> to vector<8x1xf32>
    %57 = arith.maximumf %54, %56 : vector<8x1xf32>
    %58 = arith.subf %54, %57 : vector<8x1xf32>
    %59 = math.exp %58 : vector<8x1xf32>
    %60 = vector.broadcast %57 : vector<8x1xf32> to vector<8x8xf32>
    %61 = arith.subf %52, %60 : vector<8x8xf32>
    %62 = math.exp %61 : vector<8x8xf32>
    %c1_36 = arith.constant 1 : index
    %c0_37 = arith.constant 0 : index
    %c0_38 = arith.constant 0 : index
    %63 = vector.load %arg8[%c1_36, %c0_37, %c0_38] : memref<4x8x1xf32, #tpu.memory_space<vmem>>, vector<1x8x1xf32>
    %64 = vector.shape_cast %63 : vector<1x8x1xf32> to vector<8x1xf32>
    %65 = arith.mulf %59, %64 : vector<8x1xf32>
    %cst_39 = arith.constant dense<0.000000e+00> : vector<8xf32>
    %66 = vector.multi_reduction <add>, %62, %cst_39 [1] : vector<8x8xf32> to vector<8xf32>
    %67 = vector.shape_cast %66 : vector<8xf32> to vector<8x1xf32>
    %68 = arith.addf %65, %67 : vector<8x1xf32>
    %c1_40 = arith.constant 1 : index
    %c0_41 = arith.constant 0 : index
    %c0_42 = arith.constant 0 : index
    %69 = vector.load %arg8[%c1_40, %c0_41, %c0_42] : memref<4x8x1xf32, #tpu.memory_space<vmem>>, vector<1x8x1xf32>
    %70 = vector.shape_cast %69 : vector<1x8x1xf32> to vector<8x1xf32>
    %71 = vector.shape_cast %68 : vector<8x1xf32> to vector<1x8x1xf32>
    tpu.vector_store %arg8[%c1_40, %c0_41, %c0_42], %71 {strides = array<i32>} : memref<4x8x1xf32, #tpu.memory_space<vmem>>, vector<1x8x1xf32>,
    %c1_43 = arith.constant 1 : index
    %c0_44 = arith.constant 0 : index
    %c0_45 = arith.constant 0 : index
    %72 = vector.load %arg9[%c1_43, %c0_44, %c0_45] : memref<4x8x8xf32, #tpu.memory_space<vmem>>, vector<1x8x8xf32>
    %73 = vector.shape_cast %72 : vector<1x8x8xf32> to vector<8x8xf32>
    %74 = vector.broadcast %59 : vector<8x1xf32> to vector<8x8xf32>
    %75 = arith.mulf %74, %73 : vector<8x8xf32>
    %76 = arith.truncf %62 : vector<8x8xf32> to vector<8x8xbf16>
    %cst_46 = arith.constant dense<0.000000e+00> : vector<8x8xf32>
    %77 = tpu.matmul %76, %49, %cst_46 {dimension_numbers = #tpu.dot_dimension_numbers<[1], [0], [0], [1], [0, 0, 1, 1], [], []>} : vector<8x8xbf16>, vector<8x8xbf16>, vector<8x8xf32> -> vector<8x8xf32>
    %78 = arith.addf %75, %77 : vector<8x8xf32>
    %c1_47 = arith.constant 1 : index
    %c0_48 = arith.constant 0 : index
    %c0_49 = arith.constant 0 : index
    %79 = vector.load %arg9[%c1_47, %c0_48, %c0_49] : memref<4x8x8xf32, #tpu.memory_space<vmem>>, vector<1x8x8xf32>
    %80 = vector.shape_cast %79 : vector<1x8x8xf32> to vector<8x8xf32>
    %81 = vector.shape_cast %78 : vector<8x8xf32> to vector<1x8x8xf32>
    tpu.vector_store %arg9[%c1_47, %c0_48, %c0_49], %81 {strides = array<i32>} : memref<4x8x8xf32, #tpu.memory_space<vmem>>, vector<1x8x8xf32>,
    %c1_50 = arith.constant 1 : index
    %c0_51 = arith.constant 0 : index
    %c0_52 = arith.constant 0 : index
    %82 = vector.load %arg7[%c1_50, %c0_51, %c0_52] : memref<4x8x1xf32, #tpu.memory_space<vmem>>, vector<1x8x1xf32>
    %83 = vector.shape_cast %82 : vector<1x8x1xf32> to vector<8x1xf32>
    %84 = vector.shape_cast %57 : vector<8x1xf32> to vector<1x8x1xf32>
    tpu.vector_store %arg7[%c1_50, %c0_51, %c0_52], %84 {strides = array<i32>} : memref<4x8x1xf32, #tpu.memory_space<vmem>>, vector<1x8x1xf32>,
    %85 = vector.extract_strided_slice %4 {offsets = [0, 16], sizes = [8, 8], strides = [1, 1]} : vector<8x32xbf16> to vector<8x8xbf16>
    %86 = vector.extract_strided_slice %6 {offsets = [0, 16], sizes = [8, 8], strides = [1, 1]} : vector<8x32xbf16> to vector<8x8xbf16>
    %87 = vector.extract_strided_slice %8 {offsets = [0, 16], sizes = [8, 8], strides = [1, 1]} : vector<8x32xbf16> to vector<8x8xbf16>
    "tpu.trace_start"() <{level = 10 : i32, message = "qd,kd->qk"}> : () -> ()
    %cst_53 = arith.constant dense<0.000000e+00> : vector<8x8xf32>
    %88 = tpu.matmul %85, %86, %cst_53 {dimension_numbers = #tpu.dot_dimension_numbers<[1], [1], [0], [0], [0, 0, 1, 0], [], []>} : vector<8x8xbf16>, vector<8x8xbf16>, vector<8x8xf32> -> vector<8x8xf32>
    "tpu.trace_stop"() : () -> ()
    %cst_54 = arith.constant 0.353553385 : f32
    %89 = vector.broadcast %cst_54 : f32 to vector<8x8xf32>
    %90 = arith.mulf %88, %89 : vector<8x8xf32>
    %c2 = arith.constant 2 : index
    %c0_55 = arith.constant 0 : index
    %c0_56 = arith.constant 0 : index
    %91 = vector.load %arg7[%c2, %c0_55, %c0_56] : memref<4x8x1xf32, #tpu.memory_space<vmem>>, vector<1x8x1xf32>
    %92 = vector.shape_cast %91 : vector<1x8x1xf32> to vector<8x1xf32>
    %cst_57 = arith.constant dense<0xFF800000> : vector<8xf32>
    %93 = vector.multi_reduction <maximumf>, %90, %cst_57 [1] : vector<8x8xf32> to vector<8xf32>
    %94 = vector.shape_cast %93 : vector<8xf32> to vector<8x1xf32>
    %95 = arith.maximumf %92, %94 : vector<8x1xf32>
    %96 = arith.subf %92, %95 : vector<8x1xf32>
    %97 = math.exp %96 : vector<8x1xf32>
    %98 = vector.broadcast %95 : vector<8x1xf32> to vector<8x8xf32>
    %99 = arith.subf %90, %98 : vector<8x8xf32>
    %100 = math.exp %99 : vector<8x8xf32>
    %c2_58 = arith.constant 2 : index
    %c0_59 = arith.constant 0 : index
    %c0_60 = arith.constant 0 : index
    %101 = vector.load %arg8[%c2_58, %c0_59, %c0_60] : memref<4x8x1xf32, #tpu.memory_space<vmem>>, vector<1x8x1xf32>
    %102 = vector.shape_cast %101 : vector<1x8x1xf32> to vector<8x1xf32>
    %103 = arith.mulf %97, %102 : vector<8x1xf32>
    %cst_61 = arith.constant dense<0.000000e+00> : vector<8xf32>
    %104 = vector.multi_reduction <add>, %100, %cst_61 [1] : vector<8x8xf32> to vector<8xf32>
    %105 = vector.shape_cast %104 : vector<8xf32> to vector<8x1xf32>
    %106 = arith.addf %103, %105 : vector<8x1xf32>
    %c2_62 = arith.constant 2 : index
    %c0_63 = arith.constant 0 : index
    %c0_64 = arith.constant 0 : index
    %107 = vector.load %arg8[%c2_62, %c0_63, %c0_64] : memref<4x8x1xf32, #tpu.memory_space<vmem>>, vector<1x8x1xf32>
    %108 = vector.shape_cast %107 : vector<1x8x1xf32> to vector<8x1xf32>
    %109 = vector.shape_cast %106 : vector<8x1xf32> to vector<1x8x1xf32>
    tpu.vector_store %arg8[%c2_62, %c0_63, %c0_64], %109 {strides = array<i32>} : memref<4x8x1xf32, #tpu.memory_space<vmem>>, vector<1x8x1xf32>,
    %c2_65 = arith.constant 2 : index
    %c0_66 = arith.constant 0 : index
    %c0_67 = arith.constant 0 : index
    %110 = vector.load %arg9[%c2_65, %c0_66, %c0_67] : memref<4x8x8xf32, #tpu.memory_space<vmem>>, vector<1x8x8xf32>
    %111 = vector.shape_cast %110 : vector<1x8x8xf32> to vector<8x8xf32>
    %112 = vector.broadcast %97 : vector<8x1xf32> to vector<8x8xf32>
    %113 = arith.mulf %112, %111 : vector<8x8xf32>
    %114 = arith.truncf %100 : vector<8x8xf32> to vector<8x8xbf16>
    %cst_68 = arith.constant dense<0.000000e+00> : vector<8x8xf32>
    %115 = tpu.matmul %114, %87, %cst_68 {dimension_numbers = #tpu.dot_dimension_numbers<[1], [0], [0], [1], [0, 0, 1, 1], [], []>} : vector<8x8xbf16>, vector<8x8xbf16>, vector<8x8xf32> -> vector<8x8xf32>
    %116 = arith.addf %113, %115 : vector<8x8xf32>
    %c2_69 = arith.constant 2 : index
    %c0_70 = arith.constant 0 : index
    %c0_71 = arith.constant 0 : index
    %117 = vector.load %arg9[%c2_69, %c0_70, %c0_71] : memref<4x8x8xf32, #tpu.memory_space<vmem>>, vector<1x8x8xf32>
    %118 = vector.shape_cast %117 : vector<1x8x8xf32> to vector<8x8xf32>
    %119 = vector.shape_cast %116 : vector<8x8xf32> to vector<1x8x8xf32>
    tpu.vector_store %arg9[%c2_69, %c0_70, %c0_71], %119 {strides = array<i32>} : memref<4x8x8xf32, #tpu.memory_space<vmem>>, vector<1x8x8xf32>,
    %c2_72 = arith.constant 2 : index
    %c0_73 = arith.constant 0 : index
    %c0_74 = arith.constant 0 : index
    %120 = vector.load %arg7[%c2_72, %c0_73, %c0_74] : memref<4x8x1xf32, #tpu.memory_space<vmem>>, vector<1x8x1xf32>
    %121 = vector.shape_cast %120 : vector<1x8x1xf32> to vector<8x1xf32>
    %122 = vector.shape_cast %95 : vector<8x1xf32> to vector<1x8x1xf32>
    tpu.vector_store %arg7[%c2_72, %c0_73, %c0_74], %122 {strides = array<i32>} : memref<4x8x1xf32, #tpu.memory_space<vmem>>, vector<1x8x1xf32>,
    %123 = vector.extract_strided_slice %4 {offsets = [0, 24], sizes = [8, 8], strides = [1, 1]} : vector<8x32xbf16> to vector<8x8xbf16>
    %124 = vector.extract_strided_slice %6 {offsets = [0, 24], sizes = [8, 8], strides = [1, 1]} : vector<8x32xbf16> to vector<8x8xbf16>
    %125 = vector.extract_strided_slice %8 {offsets = [0, 24], sizes = [8, 8], strides = [1, 1]} : vector<8x32xbf16> to vector<8x8xbf16>
    "tpu.trace_start"() <{level = 10 : i32, message = "qd,kd->qk"}> : () -> ()
    %cst_75 = arith.constant dense<0.000000e+00> : vector<8x8xf32>
    %126 = tpu.matmul %123, %124, %cst_75 {dimension_numbers = #tpu.dot_dimension_numbers<[1], [1], [0], [0], [0, 0, 1, 0], [], []>} : vector<8x8xbf16>, vector<8x8xbf16>, vector<8x8xf32> -> vector<8x8xf32>
    "tpu.trace_stop"() : () -> ()
    %cst_76 = arith.constant 0.353553385 : f32
    %127 = vector.broadcast %cst_76 : f32 to vector<8x8xf32>
    %128 = arith.mulf %126, %127 : vector<8x8xf32>
    %c3 = arith.constant 3 : index
    %c0_77 = arith.constant 0 : index
    %c0_78 = arith.constant 0 : index
    %129 = vector.load %arg7[%c3, %c0_77, %c0_78] : memref<4x8x1xf32, #tpu.memory_space<vmem>>, vector<1x8x1xf32>
    %130 = vector.shape_cast %129 : vector<1x8x1xf32> to vector<8x1xf32>
    %cst_79 = arith.constant dense<0xFF800000> : vector<8xf32>
    %131 = vector.multi_reduction <maximumf>, %128, %cst_79 [1] : vector<8x8xf32> to vector<8xf32>
    %132 = vector.shape_cast %131 : vector<8xf32> to vector<8x1xf32>
    %133 = arith.maximumf %130, %132 : vector<8x1xf32>
    %134 = arith.subf %130, %133 : vector<8x1xf32>
    %135 = math.exp %134 : vector<8x1xf32>
    %136 = vector.broadcast %133 : vector<8x1xf32> to vector<8x8xf32>
    %137 = arith.subf %128, %136 : vector<8x8xf32>
    %138 = math.exp %137 : vector<8x8xf32>
    %c3_80 = arith.constant 3 : index
    %c0_81 = arith.constant 0 : index
    %c0_82 = arith.constant 0 : index
    %139 = vector.load %arg8[%c3_80, %c0_81, %c0_82] : memref<4x8x1xf32, #tpu.memory_space<vmem>>, vector<1x8x1xf32>
    %140 = vector.shape_cast %139 : vector<1x8x1xf32> to vector<8x1xf32>
    %141 = arith.mulf %135, %140 : vector<8x1xf32>
    %cst_83 = arith.constant dense<0.000000e+00> : vector<8xf32>
    %142 = vector.multi_reduction <add>, %138, %cst_83 [1] : vector<8x8xf32> to vector<8xf32>
    %143 = vector.shape_cast %142 : vector<8xf32> to vector<8x1xf32>
    %144 = arith.addf %141, %143 : vector<8x1xf32>
    %c3_84 = arith.constant 3 : index
    %c0_85 = arith.constant 0 : index
    %c0_86 = arith.constant 0 : index
    %145 = vector.load %arg8[%c3_84, %c0_85, %c0_86] : memref<4x8x1xf32, #tpu.memory_space<vmem>>, vector<1x8x1xf32>
    %146 = vector.shape_cast %145 : vector<1x8x1xf32> to vector<8x1xf32>
    %147 = vector.shape_cast %144 : vector<8x1xf32> to vector<1x8x1xf32>
    tpu.vector_store %arg8[%c3_84, %c0_85, %c0_86], %147 {strides = array<i32>} : memref<4x8x1xf32, #tpu.memory_space<vmem>>, vector<1x8x1xf32>,
    %c3_87 = arith.constant 3 : index
    %c0_88 = arith.constant 0 : index
    %c0_89 = arith.constant 0 : index
    %148 = vector.load %arg9[%c3_87, %c0_88, %c0_89] : memref<4x8x8xf32, #tpu.memory_space<vmem>>, vector<1x8x8xf32>
    %149 = vector.shape_cast %148 : vector<1x8x8xf32> to vector<8x8xf32>
    %150 = vector.broadcast %135 : vector<8x1xf32> to vector<8x8xf32>
    %151 = arith.mulf %150, %149 : vector<8x8xf32>
    %152 = arith.truncf %138 : vector<8x8xf32> to vector<8x8xbf16>
    %cst_90 = arith.constant dense<0.000000e+00> : vector<8x8xf32>
    %153 = tpu.matmul %152, %125, %cst_90 {dimension_numbers = #tpu.dot_dimension_numbers<[1], [0], [0], [1], [0, 0, 1, 1], [], []>} : vector<8x8xbf16>, vector<8x8xbf16>, vector<8x8xf32> -> vector<8x8xf32>
    %154 = arith.addf %151, %153 : vector<8x8xf32>
    %c3_91 = arith.constant 3 : index
    %c0_92 = arith.constant 0 : index
    %c0_93 = arith.constant 0 : index
    %155 = vector.load %arg9[%c3_91, %c0_92, %c0_93] : memref<4x8x8xf32, #tpu.memory_space<vmem>>, vector<1x8x8xf32>
    %156 = vector.shape_cast %155 : vector<1x8x8xf32> to vector<8x8xf32>
    %157 = vector.shape_cast %154 : vector<8x8xf32> to vector<1x8x8xf32>
    tpu.vector_store %arg9[%c3_91, %c0_92, %c0_93], %157 {strides = array<i32>} : memref<4x8x8xf32, #tpu.memory_space<vmem>>, vector<1x8x8xf32>,
    %c3_94 = arith.constant 3 : index
    %c0_95 = arith.constant 0 : index
    %c0_96 = arith.constant 0 : index
    %158 = vector.load %arg7[%c3_94, %c0_95, %c0_96] : memref<4x8x1xf32, #tpu.memory_space<vmem>>, vector<1x8x1xf32>
    %159 = vector.shape_cast %158 : vector<1x8x1xf32> to vector<8x1xf32>
    %160 = vector.shape_cast %133 : vector<8x1xf32> to vector<1x8x1xf32>
    tpu.vector_store %arg7[%c3_94, %c0_95, %c0_96], %160 {strides = array<i32>} : memref<4x8x1xf32, #tpu.memory_space<vmem>>, vector<1x8x1xf32>,
    %c0_i32_97 = arith.constant 0 : i32
    %161 = arith.cmpi eq, %arg2, %c0_i32_97 : i32
    %162 = arith.extui %161 : i1 to i32
    %c0_i32_98 = arith.constant 0 : i32
    %163 = arith.cmpi ne, %162, %c0_i32_98 : i32
    scf.if %163 {
      %c0_99 = arith.constant 0 : index
      %c0_100 = arith.constant 0 : index
      %c0_101 = arith.constant 0 : index
      %164 = vector.load %arg8[%c0_99, %c0_100, %c0_101] : memref<4x8x1xf32, #tpu.memory_space<vmem>>, vector<1x8x1xf32>
      %165 = vector.shape_cast %164 : vector<1x8x1xf32> to vector<8x1xf32>
      %166 = tpu.reciprocal %165 {approx = true} : vector<8x1xf32> -> vector<8x1xf32>
      %c0_102 = arith.constant 0 : index
      %c0_103 = arith.constant 0 : index
      %c0_104 = arith.constant 0 : index
      %167 = vector.load %arg9[%c0_102, %c0_103, %c0_104] : memref<4x8x8xf32, #tpu.memory_space<vmem>>, vector<1x8x8xf32>
      %168 = vector.shape_cast %167 : vector<1x8x8xf32> to vector<8x8xf32>
      %169 = vector.broadcast %166 : vector<8x1xf32> to vector<8x8xf32>
      %170 = arith.mulf %168, %169 : vector<8x8xf32>
      %171 = arith.truncf %170 : vector<8x8xf32> to vector<8x8xbf16>
      %c0_105 = arith.constant 0 : index
      %c0_106 = arith.constant 0 : index
      %c0_107 = arith.constant 0 : index
      %172 = vector.load %arg6[%c0_105, %c0_106, %c0_107] : memref<1x8x32xbf16, #tpu.memory_space<vmem>>, vector<1x8x8xbf16>
      %173 = vector.shape_cast %172 : vector<1x8x8xbf16> to vector<8x8xbf16>
      %174 = vector.shape_cast %171 : vector<8x8xbf16> to vector<1x8x8xbf16>
      tpu.vector_store %arg6[%c0_105, %c0_106, %c0_107], %174 {strides = array<i32>} : memref<1x8x32xbf16, #tpu.memory_space<vmem>>, vector<1x8x8xbf16>,
      %c1_108 = arith.constant 1 : index
      %c0_109 = arith.constant 0 : index
      %c0_110 = arith.constant 0 : index
      %175 = vector.load %arg8[%c1_108, %c0_109, %c0_110] : memref<4x8x1xf32, #tpu.memory_space<vmem>>, vector<1x8x1xf32>
      %176 = vector.shape_cast %175 : vector<1x8x1xf32> to vector<8x1xf32>
      %177 = tpu.reciprocal %176 {approx = true} : vector<8x1xf32> -> vector<8x1xf32>
      %c1_111 = arith.constant 1 : index
      %c0_112 = arith.constant 0 : index
      %c0_113 = arith.constant 0 : index
      %178 = vector.load %arg9[%c1_111, %c0_112, %c0_113] : memref<4x8x8xf32, #tpu.memory_space<vmem>>, vector<1x8x8xf32>
      %179 = vector.shape_cast %178 : vector<1x8x8xf32> to vector<8x8xf32>
      %180 = vector.broadcast %177 : vector<8x1xf32> to vector<8x8xf32>
      %181 = arith.mulf %179, %180 : vector<8x8xf32>
      %182 = arith.truncf %181 : vector<8x8xf32> to vector<8x8xbf16>
      %c0_114 = arith.constant 0 : index
      %c0_115 = arith.constant 0 : index
      %c8 = arith.constant 8 : index
      %183 = vector.load %arg6[%c0_114, %c0_115, %c8] : memref<1x8x32xbf16, #tpu.memory_space<vmem>>, vector<1x8x8xbf16>
      %184 = vector.shape_cast %183 : vector<1x8x8xbf16> to vector<8x8xbf16>
      %185 = vector.shape_cast %182 : vector<8x8xbf16> to vector<1x8x8xbf16>
      tpu.vector_store %arg6[%c0_114, %c0_115, %c8], %185 {strides = array<i32>} : memref<1x8x32xbf16, #tpu.memory_space<vmem>>, vector<1x8x8xbf16>,
      %c2_116 = arith.constant 2 : index
      %c0_117 = arith.constant 0 : index
      %c0_118 = arith.constant 0 : index
      %186 = vector.load %arg8[%c2_116, %c0_117, %c0_118] : memref<4x8x1xf32, #tpu.memory_space<vmem>>, vector<1x8x1xf32>
      %187 = vector.shape_cast %186 : vector<1x8x1xf32> to vector<8x1xf32>
      %188 = tpu.reciprocal %187 {approx = true} : vector<8x1xf32> -> vector<8x1xf32>
      %c2_119 = arith.constant 2 : index
      %c0_120 = arith.constant 0 : index
      %c0_121 = arith.constant 0 : index
      %189 = vector.load %arg9[%c2_119, %c0_120, %c0_121] : memref<4x8x8xf32, #tpu.memory_space<vmem>>, vector<1x8x8xf32>
      %190 = vector.shape_cast %189 : vector<1x8x8xf32> to vector<8x8xf32>
      %191 = vector.broadcast %188 : vector<8x1xf32> to vector<8x8xf32>
      %192 = arith.mulf %190, %191 : vector<8x8xf32>
      %193 = arith.truncf %192 : vector<8x8xf32> to vector<8x8xbf16>
      %c0_122 = arith.constant 0 : index
      %c0_123 = arith.constant 0 : index
      %c16 = arith.constant 16 : index
      %194 = vector.load %arg6[%c0_122, %c0_123, %c16] : memref<1x8x32xbf16, #tpu.memory_space<vmem>>, vector<1x8x8xbf16>
      %195 = vector.shape_cast %194 : vector<1x8x8xbf16> to vector<8x8xbf16>
      %196 = vector.shape_cast %193 : vector<8x8xbf16> to vector<1x8x8xbf16>
      tpu.vector_store %arg6[%c0_122, %c0_123, %c16], %196 {strides = array<i32>} : memref<1x8x32xbf16, #tpu.memory_space<vmem>>, vector<1x8x8xbf16>,
      %c3_124 = arith.constant 3 : index
      %c0_125 = arith.constant 0 : index
      %c0_126 = arith.constant 0 : index
      %197 = vector.load %arg8[%c3_124, %c0_125, %c0_126] : memref<4x8x1xf32, #tpu.memory_space<vmem>>, vector<1x8x1xf32>
      %198 = vector.shape_cast %197 : vector<1x8x1xf32> to vector<8x1xf32>
      %199 = tpu.reciprocal %198 {approx = true} : vector<8x1xf32> -> vector<8x1xf32>
      %c3_127 = arith.constant 3 : index
      %c0_128 = arith.constant 0 : index
      %c0_129 = arith.constant 0 : index
      %200 = vector.load %arg9[%c3_127, %c0_128, %c0_129] : memref<4x8x8xf32, #tpu.memory_space<vmem>>, vector<1x8x8xf32>
      %201 = vector.shape_cast %200 : vector<1x8x8xf32> to vector<8x8xf32>
      %202 = vector.broadcast %199 : vector<8x1xf32> to vector<8x8xf32>
      %203 = arith.mulf %201, %202 : vector<8x8xf32>
      %204 = arith.truncf %203 : vector<8x8xf32> to vector<8x8xbf16>
      %c0_130 = arith.constant 0 : index
      %c0_131 = arith.constant 0 : index
      %c24 = arith.constant 24 : index
      %205 = vector.load %arg6[%c0_130, %c0_131, %c24] : memref<1x8x32xbf16, #tpu.memory_space<vmem>>, vector<1x8x8xbf16>
      %206 = vector.shape_cast %205 : vector<1x8x8xbf16> to vector<8x8xbf16>
      %207 = vector.shape_cast %204 : vector<8x8xbf16> to vector<1x8x8xbf16>
      tpu.vector_store %arg6[%c0_130, %c0_131, %c24], %207 {strides = array<i32>} : memref<1x8x32xbf16, #tpu.memory_space<vmem>>, vector<1x8x8xbf16>,
    } else {
    }
    return
  }
  func.func @transform_0(%arg0: i32, %arg1: i32, %arg2: i32) -> (i32, i32, i32) {
    %c0_i32 = arith.constant 0 : i32
    %c0_i32_0 = arith.constant 0 : i32
    return %arg0, %arg1, %c0_i32 : i32, i32, i32
  }
  func.func @transform_1(%arg0: i32, %arg1: i32, %arg2: i32) -> (i32, i32, i32) {
    %c0_i32 = arith.constant 0 : i32
    %c0_i32_0 = arith.constant 0 : i32
    return %arg0, %arg2, %c0_i32 : i32, i32, i32
  }
  func.func @transform_2(%arg0: i32, %arg1: i32, %arg2: i32) -> (i32, i32, i32) {
    %c0_i32 = arith.constant 0 : i32
    %c0_i32_0 = arith.constant 0 : i32
    return %arg0, %arg2, %c0_i32 : i32, i32, i32
  }
  func.func @transform_3(%arg0: i32, %arg1: i32, %arg2: i32) -> (i32, i32, i32) {
    %c0_i32 = arith.constant 0 : i32
    %c0_i32_0 = arith.constant 0 : i32
    return %arg0, %arg1, %c0_i32 : i32, i32, i32
  }
}

module attributes {stable_mosaic.version = 11 : i64} {
  func.func @_linear_kernel(%arg0: i32, %arg1: i32, %arg2: i32, %arg3: memref<16x128xbf16, #tpu.memory_space<vmem>>, %arg4: memref<128x128xbf16, #tpu.memory_space<vmem>>, %arg5: memref<1x128xf32, #tpu.memory_space<vmem>>, %arg6: memref<16x128xbf16, #tpu.memory_space<vmem>>, %arg7: memref<16x128xf32, #tpu.memory_space<vmem>>) attributes {dimension_semantics = [#tpu.dimension_semantics<parallel>, #tpu.dimension_semantics<parallel>, #tpu.dimension_semantics<arbitrary>], iteration_bounds = array<i64: 1, 1, 1>, scalar_prefetch = 0 : i64, scratch_operands = 1 : i64, tpu.core_type = #tpu.core_type<tc>, window_params = [{transform_indices = @transform_0, window_bounds = array<i64: 16, 128>}, {transform_indices = @transform_1, window_bounds = array<i64: 128, 128>}, {transform_indices = @transform_2, window_bounds = array<i64: 1, 128>}, {transform_indices = @transform_3, window_bounds = array<i64: 16, 128>}]} {
    %c0_i32 = arith.constant 0 : i32
    %0 = arith.cmpi eq, %arg2, %c0_i32 : i32
    %1 = arith.extui %0 : i1 to i32
    %c0_i32_0 = arith.constant 0 : i32
    %2 = arith.cmpi ne, %1, %c0_i32_0 : i32
    scf.if %2 {
      %cst_10 = arith.constant 0.000000e+00 : f32
      %12 = vector.broadcast %cst_10 : f32 to vector<16x128xf32>
      %c0_11 = arith.constant 0 : index
      %c0_12 = arith.constant 0 : index
      %13 = vector.load %arg7[%c0_11, %c0_12] : memref<16x128xf32, #tpu.memory_space<vmem>>, vector<16x128xf32>
      tpu.vector_store %arg7[%c0_11, %c0_12], %12 {strides = array<i32>} : memref<16x128xf32, #tpu.memory_space<vmem>>, vector<16x128xf32>,
    } else {
    }
    %c0 = arith.constant 0 : index
    %c0_1 = arith.constant 0 : index
    %3 = vector.load %arg7[%c0, %c0_1] : memref<16x128xf32, #tpu.memory_space<vmem>>, vector<16x128xf32>
    %c0_2 = arith.constant 0 : index
    %c0_3 = arith.constant 0 : index
    %4 = vector.load %arg3[%c0_2, %c0_3] : memref<16x128xbf16, #tpu.memory_space<vmem>>, vector<16x128xbf16>
    %c0_4 = arith.constant 0 : index
    %c0_5 = arith.constant 0 : index
    %5 = vector.load %arg4[%c0_4, %c0_5] : memref<128x128xbf16, #tpu.memory_space<vmem>>, vector<128x128xbf16>
    %cst = arith.constant dense<0.000000e+00> : vector<16x128xf32>
    %6 = tpu.matmul %4, %5, %cst {dimension_numbers = #tpu.dot_dimension_numbers<[1], [0], [0], [1], [0, 0, 1, 1], [], []>} : vector<16x128xbf16>, vector<128x128xbf16>, vector<16x128xf32> -> vector<16x128xf32>
    %7 = arith.addf %3, %6 : vector<16x128xf32>
    %c0_6 = arith.constant 0 : index
    %c0_7 = arith.constant 0 : index
    %8 = vector.load %arg7[%c0_6, %c0_7] : memref<16x128xf32, #tpu.memory_space<vmem>>, vector<16x128xf32>
    tpu.vector_store %arg7[%c0_6, %c0_7], %7 {strides = array<i32>} : memref<16x128xf32, #tpu.memory_space<vmem>>, vector<16x128xf32>,
    %c0_i32_8 = arith.constant 0 : i32
    %9 = arith.cmpi eq, %arg2, %c0_i32_8 : i32
    %10 = arith.extui %9 : i1 to i32
    %c0_i32_9 = arith.constant 0 : i32
    %11 = arith.cmpi ne, %10, %c0_i32_9 : i32
    scf.if %11 {
      %c0_10 = arith.constant 0 : index
      %c0_11 = arith.constant 0 : index
      %12 = vector.load %arg7[%c0_10, %c0_11] : memref<16x128xf32, #tpu.memory_space<vmem>>, vector<16x128xf32>
      %c0_12 = arith.constant 0 : index
      %c0_13 = arith.constant 0 : index
      %13 = vector.load %arg5[%c0_12, %c0_13] : memref<1x128xf32, #tpu.memory_space<vmem>>, vector<1x128xf32>
      %14 = vector.broadcast %13 : vector<1x128xf32> to vector<16x128xf32>
      %15 = arith.addf %12, %14 : vector<16x128xf32>
      %cst_14 = arith.constant 0.000000e+00 : f32
      %16 = vector.broadcast %cst_14 : f32 to vector<16x128xf32>
      %17 = arith.maximumf %15, %16 : vector<16x128xf32>
      %18 = arith.truncf %17 : vector<16x128xf32> to vector<16x128xbf16>
      %c0_15 = arith.constant 0 : index
      %c0_16 = arith.constant 0 : index
      %19 = vector.load %arg6[%c0_15, %c0_16] : memref<16x128xbf16, #tpu.memory_space<vmem>>, vector<16x128xbf16>
      tpu.vector_store %arg6[%c0_15, %c0_16], %18 {strides = array<i32>} : memref<16x128xbf16, #tpu.memory_space<vmem>>, vector<16x128xbf16>,
    } else {
    }
    return
  }
  func.func @transform_0(%arg0: i32, %arg1: i32, %arg2: i32) -> (i32, i32) {
    %c0_i32 = arith.constant 0 : i32
    return %arg0, %arg2 : i32, i32
  }
  func.func @transform_1(%arg0: i32, %arg1: i32, %arg2: i32) -> (i32, i32) {
    %c0_i32 = arith.constant 0 : i32
    return %arg2, %arg1 : i32, i32
  }
  func.func @transform_2(%arg0: i32, %arg1: i32, %arg2: i32) -> (i32, i32) {
    %c0_i32 = arith.constant 0 : i32
    %c0_i32_0 = arith.constant 0 : i32
    return %c0_i32, %arg1 : i32, i32
  }
  func.func @transform_3(%arg0: i32, %arg1: i32, %arg2: i32) -> (i32, i32) {
    %c0_i32 = arith.constant 0 : i32
    return %arg0, %arg1 : i32, i32
  }
}

</mosaic_0001>

<llo_original>
// kernel: transformer_captioning_forward.30
$region0: #{transformer_captioning_forward.30}
  #allocation0 [shape = 'u32[]', space=smem, size = 0x4, offset = 0x4, fixed_abs, tag = 'smem constant byte address 0x4 - core index']
  #allocation1 [shape = 'u32[72,128]{1,0:T(1,128)}', space=vmem, size = 0x9000, scoped, tag = 'internal scratch']
  #allocation2 [shape = 'f32[16,128]{1,0:T(8,128)}', space=vmem, size = 0x2000, scoped, tag = 'scratch operand']
  %s0 = inlined_call_operand.vmem [shape: bf16[16,128], index: 0, kind: input, shape index: {}]
  %s1 = inlined_call_operand.vmem [shape: bf16[128,128], index: 1, kind: input, shape index: {}]
  %s2 = inlined_call_operand.vmem [shape: f32[1,128], index: 2, kind: input, shape index: {}]
  %s3 = inlined_call_operand.vmem [shape: f32[16,128], index: 3, kind: output, shape index: {}]
  %s4 = sld [smem:[#allocation0]]
  $region30: #{transformer_captioning_forward.30} parent=0
    _
  %s6 = ssub.s32 1, %s4
  %s7 = scalar_select 0, %s6, %s4
  // Predicated region
  $region2: #{transformer_captioning_forward.30} parent=0 // pred_check
    _
  $region3: #{transformer_captioning_forward.30} parent=0 // pred_check_branch
    %9 = sbr.rel (0) target = $region5
  $region4: #{transformer_captioning_forward.30} parent=0 // pred_region
    _
  $region5: #{transformer_captioning_forward.30} parent=0 // pred_fallthru
    _
  // Predicated region
  $region6: #{transformer_captioning_forward.30} parent=0 // pred_check
    _
  $region7: #{transformer_captioning_forward.30} parent=0 // pred_check_branch
    %11 = sbr.rel (0) target = $region9
  $region8: #{transformer_captioning_forward.30} parent=0 // pred_region
    _
  $region9: #{transformer_captioning_forward.30} parent=0 // pred_fallthru
    _
  // Predicated region
  $region10: #{transformer_captioning_forward.30} parent=0 // pred_check
    _
  $region11: #{transformer_captioning_forward.30} parent=0 // pred_check_branch
    %13 = sbr.rel (0) target = $region13
  $region12: #{transformer_captioning_forward.30} parent=0 // pred_region
    _
  $region13: #{transformer_captioning_forward.30} parent=0 // pred_fallthru
    _
  %p14 = scmp.eq.s32.totalorder 0, 0
  // Predicated region
  $region14: #{transformer_captioning_forward.30} parent=0 // pred_check
    %p15 = pneg %p14
  $region15: #{transformer_captioning_forward.30} parent=0 // pred_check_branch
    %17 = sbr.rel (%p15) target = $region17
  $region16: #{transformer_captioning_forward.30} parent=0 // pred_region
    %18 = vst [vmem:[#allocation2] sm:$0xff] 0.0
    %19 = vst [vmem:[#allocation2 + $0x8] sm:$0xff] 0.0
  $region17: #{transformer_captioning_forward.30} parent=0 // pred_fallthru
    _
  %v20 = vld [vmem:[#allocation2] sm:$0xff]
  %v21 = vld [vmem:[#allocation2 + $0x8] sm:$0xff]
  %v22 = vld [vmem:[%s0] sm:$0xf]
  %v23 = vld [vmem:[%s0 + $0x4] sm:$0xf]
  %v24 = vld [vmem:[%s1] sm:$0xf]
  %v25 = vld [vmem:[%s1 + $0x4] sm:$0xf]
  %v26 = vld [vmem:[%s1 + $0x8] sm:$0xf]
  %v27 = vld [vmem:[%s1 + $0xc] sm:$0xf]
  %v28 = vld [vmem:[%s1 + $0x10] sm:$0xf]
  %v29 = vld [vmem:[%s1 + $0x14] sm:$0xf]
  %v30 = vld [vmem:[%s1 + $0x18] sm:$0xf]
  %v31 = vld [vmem:[%s1 + $0x1c] sm:$0xf]
  %v32 = vld [vmem:[%s1 + $0x20] sm:$0xf]
  %v33 = vld [vmem:[%s1 + $0x24] sm:$0xf]
  %v34 = vld [vmem:[%s1 + $0x28] sm:$0xf]
  %v35 = vld [vmem:[%s1 + $0x2c] sm:$0xf]
  %v36 = vld [vmem:[%s1 + $0x30] sm:$0xf]
  %v37 = vld [vmem:[%s1 + $0x34] sm:$0xf]
  %v38 = vld [vmem:[%s1 + $0x38] sm:$0xf]
  %v39 = vld [vmem:[%s1 + $0x3c] sm:$0xf]
  %v42 = vunpack.c.l.b16 %v22
  %v43 = vunpack.c.l.b16 %v23
  %v44 = vpack.c.b16 %v43, %v42
  %v62 = vunpack.c.l.b16 %v24
  %v63 = vunpack.c.l.b16 %v25
  %v64 = vunpack.c.l.b16 %v26
  %v65 = vunpack.c.l.b16 %v27
  %v66 = vunpack.c.l.b16 %v28
  %v67 = vunpack.c.l.b16 %v29
  %v68 = vunpack.c.l.b16 %v30
  %v69 = vunpack.c.l.b16 %v31
  %v70 = vunpack.c.l.b16 %v32
  %v71 = vunpack.c.l.b16 %v33
  %v72 = vunpack.c.l.b16 %v34
  %v73 = vunpack.c.l.b16 %v35
  %v74 = vunpack.c.l.b16 %v36
  %v75 = vunpack.c.l.b16 %v37
  %v76 = vunpack.c.l.b16 %v38
  %v77 = vunpack.c.l.b16 %v39
  %v78 = vpack.c.b16 %v63, %v62
  %v79 = vpack.c.b16 %v65, %v64
  %v80 = vpack.c.b16 %v67, %v66
  %v81 = vpack.c.b16 %v69, %v68
  %v82 = vpack.c.b16 %v71, %v70
  %v83 = vpack.c.b16 %v73, %v72
  %v84 = vpack.c.b16 %v75, %v74
  %v85 = vpack.c.b16 %v77, %v76
  %94 = vmatpush.bf16.msra.mxu0 %v85
  %95 = vmatpush.bf16.msra.mxu0 %v84
  %96 = vmatpush.bf16.msra.mxu0 %v83
  %97 = vmatpush.bf16.msra.mxu0 %v82
  %98 = vmatpush.bf16.msra.mxu0 %v81
  %99 = vmatpush.bf16.msra.mxu0 %v80
  %100 = vmatpush.bf16.msra.mxu0 %v79
  %101 = vmatpush.bf16.msra.mxu0 %v78
  %102 = vmatmul.bf16.gmra.mxu0 %v44
  %v103 = vpop.f32.mrf.mxu0
  %v104 = vadd.f32 0.0, %v103
  %v105 = vpop.f32.mrf.mxu0
  %v106 = vadd.f32 0.0, %v105
  %107 = vdwg.mxu0
  %v108 = vadd.f32 %v20, %v104
  %v109 = vadd.f32 %v21, %v106
  %110 = vst [vmem:[#allocation2] sm:$0xff] %v108
  %111 = vst [vmem:[#allocation2 + $0x8] sm:$0xff] %v109
  // Predicated region
  $region18: #{transformer_captioning_forward.30} parent=0 // pred_check
    %p112 = pneg %p14
  $region19: #{transformer_captioning_forward.30} parent=0 // pred_check_branch
    %114 = sbr.rel (%p112) target = $region21
  $region20: #{transformer_captioning_forward.30} parent=0 // pred_region
    %v115 = vld [vmem:[#allocation2] sm:$0xff]
    %v116 = vld [vmem:[#allocation2 + $0x8] sm:$0xff]
    %v117 = vld [vmem:[%s2] sm:$0x1]
    %v119 = vperm.slane %v117, 0
    %v121 = vadd.f32 %v115, %v119
    %v122 = vadd.f32 %v116, %v119
    %123 = vst [vmem:[%s3] sm:$0xff] %v121
    %124 = vst [vmem:[%s3 + $0x8] sm:$0xff] %v122
  $region21: #{transformer_captioning_forward.30} parent=0 // pred_fallthru
    _
  // Predicated region
  $region22: #{transformer_captioning_forward.30} parent=0 // pred_check
    _
  $region23: #{transformer_captioning_forward.30} parent=0 // pred_check_branch
    %126 = sbr.rel (0) target = $region25
  $region24: #{transformer_captioning_forward.30} parent=0 // pred_region
    _
  $region25: #{transformer_captioning_forward.30} parent=0 // pred_fallthru
    _
  // Predicated region
  $region26: #{transformer_captioning_forward.30} parent=0 // pred_check
    _
  $region27: #{transformer_captioning_forward.30} parent=0 // pred_check_branch
    %128 = sbr.rel (0) target = $region29
  $region28: #{transformer_captioning_forward.30} parent=0 // pred_region
    _
  $region29: #{transformer_captioning_forward.30} parent=0 // pred_fallthru
    _

// kernel: transformer_captioning_forward.41
$region0: #{transformer_captioning_forward.41}
  #allocation0 [shape = 'u32[]', space=smem, size = 0x4, offset = 0x4, fixed_abs, tag = 'smem constant byte address 0x4 - core index']
  #allocation1 [shape = 'u32[72,128]{1,0:T(1,128)}', space=vmem, size = 0x9000, scoped, tag = 'internal scratch']
  #allocation2 [shape = 'f32[16,128]{1,0:T(8,128)}', space=vmem, size = 0x2000, scoped, tag = 'scratch operand']
  %s0 = inlined_call_operand.vmem [shape: bf16[16,128], index: 0, kind: input, shape index: {}]
  %s1 = inlined_call_operand.vmem [shape: bf16[128,128], index: 1, kind: input, shape index: {}]
  %s2 = inlined_call_operand.vmem [shape: f32[1,128], index: 2, kind: input, shape index: {}]
  %s3 = inlined_call_operand.vmem [shape: bf16[16,128], index: 3, kind: output, shape index: {}]
  %s4 = sld [smem:[#allocation0]]
  $region30: #{transformer_captioning_forward.41} parent=0
    _
  %s6 = ssub.s32 1, %s4
  %s7 = scalar_select 0, %s6, %s4
  // Predicated region
  $region2: #{transformer_captioning_forward.41} parent=0 // pred_check
    _
  $region3: #{transformer_captioning_forward.41} parent=0 // pred_check_branch
    %9 = sbr.rel (0) target = $region5
  $region4: #{transformer_captioning_forward.41} parent=0 // pred_region
    _
  $region5: #{transformer_captioning_forward.41} parent=0 // pred_fallthru
    _
  // Predicated region
  $region6: #{transformer_captioning_forward.41} parent=0 // pred_check
    _
  $region7: #{transformer_captioning_forward.41} parent=0 // pred_check_branch
    %11 = sbr.rel (0) target = $region9
  $region8: #{transformer_captioning_forward.41} parent=0 // pred_region
    _
  $region9: #{transformer_captioning_forward.41} parent=0 // pred_fallthru
    _
  // Predicated region
  $region10: #{transformer_captioning_forward.41} parent=0 // pred_check
    _
  $region11: #{transformer_captioning_forward.41} parent=0 // pred_check_branch
    %13 = sbr.rel (0) target = $region13
  $region12: #{transformer_captioning_forward.41} parent=0 // pred_region
    _
  $region13: #{transformer_captioning_forward.41} parent=0 // pred_fallthru
    _
  %p14 = scmp.eq.s32.totalorder 0, 0
  // Predicated region
  $region14: #{transformer_captioning_forward.41} parent=0 // pred_check
    %p15 = pneg %p14
  $region15: #{transformer_captioning_forward.41} parent=0 // pred_check_branch
    %17 = sbr.rel (%p15) target = $region17
  $region16: #{transformer_captioning_forward.41} parent=0 // pred_region
    %18 = vst [vmem:[#allocation2] sm:$0xff] 0.0
    %19 = vst [vmem:[#allocation2 + $0x8] sm:$0xff] 0.0
  $region17: #{transformer_captioning_forward.41} parent=0 // pred_fallthru
    _
  %v20 = vld [vmem:[#allocation2] sm:$0xff]
  %v21 = vld [vmem:[#allocation2 + $0x8] sm:$0xff]
  %v22 = vld [vmem:[%s0] sm:$0xf]
  %v23 = vld [vmem:[%s0 + $0x4] sm:$0xf]
  %v24 = vld [vmem:[%s1] sm:$0xf]
  %v25 = vld [vmem:[%s1 + $0x4] sm:$0xf]
  %v26 = vld [vmem:[%s1 + $0x8] sm:$0xf]
  %v27 = vld [vmem:[%s1 + $0xc] sm:$0xf]
  %v28 = vld [vmem:[%s1 + $0x10] sm:$0xf]
  %v29 = vld [vmem:[%s1 + $0x14] sm:$0xf]
  %v30 = vld [vmem:[%s1 + $0x18] sm:$0xf]
  %v31 = vld [vmem:[%s1 + $0x1c] sm:$0xf]
  %v32 = vld [vmem:[%s1 + $0x20] sm:$0xf]
  %v33 = vld [vmem:[%s1 + $0x24] sm:$0xf]
  %v34 = vld [vmem:[%s1 + $0x28] sm:$0xf]
  %v35 = vld [vmem:[%s1 + $0x2c] sm:$0xf]
  %v36 = vld [vmem:[%s1 + $0x30] sm:$0xf]
  %v37 = vld [vmem:[%s1 + $0x34] sm:$0xf]
  %v38 = vld [vmem:[%s1 + $0x38] sm:$0xf]
  %v39 = vld [vmem:[%s1 + $0x3c] sm:$0xf]
  %v42 = vunpack.c.l.b16 %v22
  %v43 = vunpack.c.l.b16 %v23
  %v44 = vpack.c.b16 %v43, %v42
  %v62 = vunpack.c.l.b16 %v24
  %v63 = vunpack.c.l.b16 %v25
  %v64 = vunpack.c.l.b16 %v26
  %v65 = vunpack.c.l.b16 %v27
  %v66 = vunpack.c.l.b16 %v28
  %v67 = vunpack.c.l.b16 %v29
  %v68 = vunpack.c.l.b16 %v30
  %v69 = vunpack.c.l.b16 %v31
  %v70 = vunpack.c.l.b16 %v32
  %v71 = vunpack.c.l.b16 %v33
  %v72 = vunpack.c.l.b16 %v34
  %v73 = vunpack.c.l.b16 %v35
  %v74 = vunpack.c.l.b16 %v36
  %v75 = vunpack.c.l.b16 %v37
  %v76 = vunpack.c.l.b16 %v38
  %v77 = vunpack.c.l.b16 %v39
  %v78 = vpack.c.b16 %v63, %v62
  %v79 = vpack.c.b16 %v65, %v64
  %v80 = vpack.c.b16 %v67, %v66
  %v81 = vpack.c.b16 %v69, %v68
  %v82 = vpack.c.b16 %v71, %v70
  %v83 = vpack.c.b16 %v73, %v72
  %v84 = vpack.c.b16 %v75, %v74
  %v85 = vpack.c.b16 %v77, %v76
  %94 = vmatpush.bf16.msra.mxu0 %v85
  %95 = vmatpush.bf16.msra.mxu0 %v84
  %96 = vmatpush.bf16.msra.mxu0 %v83
  %97 = vmatpush.bf16.msra.mxu0 %v82
  %98 = vmatpush.bf16.msra.mxu0 %v81
  %99 = vmatpush.bf16.msra.mxu0 %v80
  %100 = vmatpush.bf16.msra.mxu0 %v79
  %101 = vmatpush.bf16.msra.mxu0 %v78
  %102 = vmatmul.bf16.gmra.mxu0 %v44
  %v103 = vpop.f32.mrf.mxu0
  %v104 = vadd.f32 0.0, %v103
  %v105 = vpop.f32.mrf.mxu0
  %v106 = vadd.f32 0.0, %v105
  %107 = vdwg.mxu0
  %v108 = vadd.f32 %v20, %v104
  %v109 = vadd.f32 %v21, %v106
  %110 = vst [vmem:[#allocation2] sm:$0xff] %v108
  %111 = vst [vmem:[#allocation2 + $0x8] sm:$0xff] %v109
  // Predicated region
  $region18: #{transformer_captioning_forward.41} parent=0 // pred_check
    %p112 = pneg %p14
  $region19: #{transformer_captioning_forward.41} parent=0 // pred_check_branch
    %114 = sbr.rel (%p112) target = $region21
  $region20: #{transformer_captioning_forward.41} parent=0 // pred_region
    %v115 = vld [vmem:[#allocation2] sm:$0xff]
    %v116 = vld [vmem:[#allocation2 + $0x8] sm:$0xff]
    %v117 = vld [vmem:[%s2] sm:$0x1]
    %v119 = vperm.slane %v117, 0
    %v121 = vadd.f32 %v115, %v119
    %v122 = vadd.f32 %v116, %v119
    %v123 = vpack.c.bf16 %v121, %v121
    %v124 = vpack.c.bf16 %v122, %v122
    %125 = vst [vmem:[%s3] sm:$0xf] %v123
    %126 = vst [vmem:[%s3 + $0x4] sm:$0xf] %v124
  $region21: #{transformer_captioning_forward.41} parent=0 // pred_fallthru
    _
  // Predicated region
  $region22: #{transformer_captioning_forward.41} parent=0 // pred_check
    _
  $region23: #{transformer_captioning_forward.41} parent=0 // pred_check_branch
    %128 = sbr.rel (0) target = $region25
  $region24: #{transformer_captioning_forward.41} parent=0 // pred_region
    _
  $region25: #{transformer_captioning_forward.41} parent=0 // pred_fallthru
    _
  // Predicated region
  $region26: #{transformer_captioning_forward.41} parent=0 // pred_check
    _
  $region27: #{transformer_captioning_forward.41} parent=0 // pred_check_branch
    %130 = sbr.rel (0) target = $region29
  $region28: #{transformer_captioning_forward.41} parent=0 // pred_region
    _
  $region29: #{transformer_captioning_forward.41} parent=0 // pred_fallthru
    _

// kernel: transformer_captioning_forward.43
$region0: #{transformer_captioning_forward.43}
  #allocation0 [shape = 'u32[]', space=smem, size = 0x4, offset = 0x4, fixed_abs, tag = 'smem constant byte address 0x4 - core index']
  #allocation1 [shape = 'u32[72,128]{1,0:T(1,128)}', space=vmem, size = 0x9000, scoped, tag = 'internal scratch']
  #allocation2 [shape = 'f32[16,128]{1,0:T(8,128)}', space=vmem, size = 0x2000, scoped, tag = 'scratch operand']
  %s0 = inlined_call_operand.vmem [shape: bf16[16,128], index: 0, kind: input, shape index: {}]
  %s1 = inlined_call_operand.vmem [shape: bf16[128,128], index: 1, kind: input, shape index: {}]
  %s2 = inlined_call_operand.vmem [shape: f32[1,128], index: 2, kind: input, shape index: {}]
  %s3 = inlined_call_operand.vmem [shape: f32[16,128], index: 3, kind: input, shape index: {}]
  %s4 = inlined_call_operand.vmem [shape: f32[1,128], index: 4, kind: input, shape index: {}]
  %s5 = inlined_call_operand.vmem [shape: f32[1,128], index: 5, kind: input, shape index: {}]
  %s6 = inlined_call_operand.vmem [shape: f32[16,128], index: 6, kind: output, shape index: {}]
  %s7 = sld [smem:[#allocation0]]
  $region42: #{transformer_captioning_forward.43} parent=0
    _
  %s9 = ssub.s32 1, %s7
  %s10 = scalar_select 0, %s9, %s7
  // Predicated region
  $region2: #{transformer_captioning_forward.43} parent=0 // pred_check
    _
  $region3: #{transformer_captioning_forward.43} parent=0 // pred_check_branch
    %12 = sbr.rel (0) target = $region5
  $region4: #{transformer_captioning_forward.43} parent=0 // pred_region
    _
  $region5: #{transformer_captioning_forward.43} parent=0 // pred_fallthru
    _
  // Predicated region
  $region6: #{transformer_captioning_forward.43} parent=0 // pred_check
    _
  $region7: #{transformer_captioning_forward.43} parent=0 // pred_check_branch
    %14 = sbr.rel (0) target = $region9
  $region8: #{transformer_captioning_forward.43} parent=0 // pred_region
    _
  $region9: #{transformer_captioning_forward.43} parent=0 // pred_fallthru
    _
  // Predicated region
  $region10: #{transformer_captioning_forward.43} parent=0 // pred_check
    _
  $region11: #{transformer_captioning_forward.43} parent=0 // pred_check_branch
    %16 = sbr.rel (0) target = $region13
  $region12: #{transformer_captioning_forward.43} parent=0 // pred_region
    _
  $region13: #{transformer_captioning_forward.43} parent=0 // pred_fallthru
    _
  // Predicated region
  $region14: #{transformer_captioning_forward.43} parent=0 // pred_check
    _
  $region15: #{transformer_captioning_forward.43} parent=0 // pred_check_branch
    %18 = sbr.rel (0) target = $region17
  $region16: #{transformer_captioning_forward.43} parent=0 // pred_region
    _
  $region17: #{transformer_captioning_forward.43} parent=0 // pred_fallthru
    _
  // Predicated region
  $region18: #{transformer_captioning_forward.43} parent=0 // pred_check
    _
  $region19: #{transformer_captioning_forward.43} parent=0 // pred_check_branch
    %20 = sbr.rel (0) target = $region21
  $region20: #{transformer_captioning_forward.43} parent=0 // pred_region
    _
  $region21: #{transformer_captioning_forward.43} parent=0 // pred_fallthru
    _
  // Predicated region
  $region22: #{transformer_captioning_forward.43} parent=0 // pred_check
    _
  $region23: #{transformer_captioning_forward.43} parent=0 // pred_check_branch
    %22 = sbr.rel (0) target = $region25
  $region24: #{transformer_captioning_forward.43} parent=0 // pred_region
    _
  $region25: #{transformer_captioning_forward.43} parent=0 // pred_fallthru
    _
  %p23 = scmp.eq.s32.totalorder 0, 0
  // Predicated region
  $region26: #{transformer_captioning_forward.43} parent=0 // pred_check
    %p24 = pneg %p23
  $region27: #{transformer_captioning_forward.43} parent=0 // pred_check_branch
    %26 = sbr.rel (%p24) target = $region29
  $region28: #{transformer_captioning_forward.43} parent=0 // pred_region
    %27 = vst [vmem:[#allocation2] sm:$0xff] 0.0
    %28 = vst [vmem:[#allocation2 + $0x8] sm:$0xff] 0.0
  $region29: #{transformer_captioning_forward.43} parent=0 // pred_fallthru
    _
  %v29 = vld [vmem:[#allocation2] sm:$0xff]
  %v30 = vld [vmem:[#allocation2 + $0x8] sm:$0xff]
  %v31 = vld [vmem:[%s0] sm:$0xf]
  %v32 = vld [vmem:[%s0 + $0x4] sm:$0xf]
  %v33 = vld [vmem:[%s1] sm:$0xf]
  %v34 = vld [vmem:[%s1 + $0x4] sm:$0xf]
  %v35 = vld [vmem:[%s1 + $0x8] sm:$0xf]
  %v36 = vld [vmem:[%s1 + $0xc] sm:$0xf]
  %v37 = vld [vmem:[%s1 + $0x10] sm:$0xf]
  %v38 = vld [vmem:[%s1 + $0x14] sm:$0xf]
  %v39 = vld [vmem:[%s1 + $0x18] sm:$0xf]
  %v40 = vld [vmem:[%s1 + $0x1c] sm:$0xf]
  %v41 = vld [vmem:[%s1 + $0x20] sm:$0xf]
  %v42 = vld [vmem:[%s1 + $0x24] sm:$0xf]
  %v43 = vld [vmem:[%s1 + $0x28] sm:$0xf]
  %v44 = vld [vmem:[%s1 + $0x2c] sm:$0xf]
  %v45 = vld [vmem:[%s1 + $0x30] sm:$0xf]
  %v46 = vld [vmem:[%s1 + $0x34] sm:$0xf]
  %v47 = vld [vmem:[%s1 + $0x38] sm:$0xf]
  %v48 = vld [vmem:[%s1 + $0x3c] sm:$0xf]
  %v51 = vunpack.c.l.b16 %v31
  %v52 = vunpack.c.l.b16 %v32
  %v53 = vpack.c.b16 %v52, %v51
  %v71 = vunpack.c.l.b16 %v33
  %v72 = vunpack.c.l.b16 %v34
  %v73 = vunpack.c.l.b16 %v35
  %v74 = vunpack.c.l.b16 %v36
  %v75 = vunpack.c.l.b16 %v37
  %v76 = vunpack.c.l.b16 %v38
  %v77 = vunpack.c.l.b16 %v39
  %v78 = vunpack.c.l.b16 %v40
  %v79 = vunpack.c.l.b16 %v41
  %v80 = vunpack.c.l.b16 %v42
  %v81 = vunpack.c.l.b16 %v43
  %v82 = vunpack.c.l.b16 %v44
  %v83 = vunpack.c.l.b16 %v45
  %v84 = vunpack.c.l.b16 %v46
  %v85 = vunpack.c.l.b16 %v47
  %v86 = vunpack.c.l.b16 %v48
  %v87 = vpack.c.b16 %v72, %v71
  %v88 = vpack.c.b16 %v74, %v73
  %v89 = vpack.c.b16 %v76, %v75
  %v90 = vpack.c.b16 %v78, %v77
  %v91 = vpack.c.b16 %v80, %v79
  %v92 = vpack.c.b16 %v82, %v81
  %v93 = vpack.c.b16 %v84, %v83
  %v94 = vpack.c.b16 %v86, %v85
  %103 = vmatpush.bf16.msra.mxu0 %v94
  %104 = vmatpush.bf16.msra.mxu0 %v93
  %105 = vmatpush.bf16.msra.mxu0 %v92
  %106 = vmatpush.bf16.msra.mxu0 %v91
  %107 = vmatpush.bf16.msra.mxu0 %v90
  %108 = vmatpush.bf16.msra.mxu0 %v89
  %109 = vmatpush.bf16.msra.mxu0 %v88
  %110 = vmatpush.bf16.msra.mxu0 %v87
  %111 = vmatmul.bf16.gmra.mxu0 %v53
  %v112 = vpop.f32.mrf.mxu0
  %v113 = vadd.f32 0.0, %v112
  %v114 = vpop.f32.mrf.mxu0
  %v115 = vadd.f32 0.0, %v114
  %116 = vdwg.mxu0
  %v117 = vadd.f32 %v29, %v113
  %v118 = vadd.f32 %v30, %v115
  %119 = vst [vmem:[#allocation2] sm:$0xff] %v117
  %120 = vst [vmem:[#allocation2 + $0x8] sm:$0xff] %v118
  // Predicated region
  $region30: #{transformer_captioning_forward.43} parent=0 // pred_check
    %p121 = pneg %p23
  $region31: #{transformer_captioning_forward.43} parent=0 // pred_check_branch
    %123 = sbr.rel (%p121) target = $region33
  $region32: #{transformer_captioning_forward.43} parent=0 // pred_region
    %v124 = vld [vmem:[#allocation2] sm:$0xff]
    %v125 = vld [vmem:[#allocation2 + $0x8] sm:$0xff]
    %v126 = vld [vmem:[%s2] sm:$0x1]
    %v128 = vperm.slane %v126, 0
    %v130 = vadd.f32 %v124, %v128
    %v131 = vadd.f32 %v125, %v128
    %v132 = vld [vmem:[%s3] sm:$0xff]
    %v133 = vld [vmem:[%s3 + $0x8] sm:$0xff]
    %v134 = vadd.f32 %v130, %v132
    %v135 = vadd.f32 %v131, %v133
    %v136 = vlaneseq
    %v137 = vand.u32 %v136, 127
    %vm138 = vcmp.lt.s32.totalorder %v137, 32
    %v139 = vsel %vm138, 1, 0
    %v140 = vcvt.s32.f32 %v139
    %v141 = vmul.f32 %v134, %v140
    %v142 = vmul.f32 %v135, %v140
    %143 = vadd.xlane.f32.xlu0 %v141
    %v144 = vpop.xlane.xlu0 %143
    %145 = vadd.xlane.f32.xlu0 %v142
    %v146 = vpop.xlane.xlu0 %145
    %v147 = vrcp.pop 32.0
    %v148 = vmul.f32 32.0, %v147
    %v149 = vsub.f32 1.0, %v148
    %v150 = vmul.f32 %v147, %v149
    %v151 = vadd.f32 %v147, %v150
    %vm152 = vweird.f32 %v147
    %v153 = vsel %vm152, %v147, %v151
    %v154 = vmul.f32 %v144, %v153
    %v155 = vmul.f32 %v146, %v153
    %v156 = vsub.f32 %v134, %v154
    %v157 = vsub.f32 %v135, %v155
    %v158 = vmul.f32 %v156, %v140
    %v159 = vmul.f32 %v157, %v140
    %v160 = vmul.f32 %v158, %v158
    %v161 = vmul.f32 %v159, %v159
    %162 = vadd.xlane.f32.xlu0 %v160
    %v163 = vpop.xlane.xlu0 %162
    %164 = vadd.xlane.f32.xlu0 %v161
    %v165 = vpop.xlane.xlu0 %164
    %v166 = vmul.f32 %v163, %v153
    %v167 = vmul.f32 %v165, %v153
    %v168 = vadd.f32 %v166, 1e-05
    %v169 = vadd.f32 %v167, 1e-05
    %v170 = vrsqrt.pop %v168
    %v171 = vmul.f32 %v170, %v168
    %v172 = vmul.f32 %v171, %v170
    %v173 = vmul.f32 0.5, %v172
    %v174 = vsub.f32 1.5, %v173
    %v175 = vmul.f32 %v170, %v174
    %vm176 = vweird.f32 %v168
    %vm177 = vweird.f32 %v170
    %vm178 = vmor %vm176, %vm177
    %v179 = vsel %vm178, %v170, %v175
    %v180 = vrsqrt.pop %v169
    %v181 = vmul.f32 %v180, %v169
    %v182 = vmul.f32 %v181, %v180
    %v183 = vmul.f32 0.5, %v182
    %v184 = vsub.f32 1.5, %v183
    %v185 = vmul.f32 %v180, %v184
    %vm186 = vweird.f32 %v169
    %vm187 = vweird.f32 %v180
    %vm188 = vmor %vm186, %vm187
    %v189 = vsel %vm188, %v180, %v185
    %v190 = vmul.f32 %v158, %v179
    %v191 = vmul.f32 %v159, %v189
    %v192 = vld [vmem:[%s4] sm:$0x1]
    %v194 = vperm.slane %v192, 0
    %v196 = vmul.f32 %v190, %v194
    %v197 = vmul.f32 %v191, %v194
    %v198 = vld [vmem:[%s5] sm:$0x1]
    %v200 = vperm.slane %v198, 0
    %v202 = vadd.f32 %v196, %v200
    %v203 = vadd.f32 %v197, %v200
    %204 = vst [vmem:[%s6] sm:$0xff] %v202
    %205 = vst [vmem:[%s6 + $0x8] sm:$0xff] %v203
  $region33: #{transformer_captioning_forward.43} parent=0 // pred_fallthru
    _
  // Predicated region
  $region34: #{transformer_captioning_forward.43} parent=0 // pred_check
    _
  $region35: #{transformer_captioning_forward.43} parent=0 // pred_check_branch
    %207 = sbr.rel (0) target = $region37
  $region36: #{transformer_captioning_forward.43} parent=0 // pred_region
    _
  $region37: #{transformer_captioning_forward.43} parent=0 // pred_fallthru
    _
  // Predicated region
  $region38: #{transformer_captioning_forward.43} parent=0 // pred_check
    _
  $region39: #{transformer_captioning_forward.43} parent=0 // pred_check_branch
    %209 = sbr.rel (0) target = $region41
  $region40: #{transformer_captioning_forward.43} parent=0 // pred_region
    _
  $region41: #{transformer_captioning_forward.43} parent=0 // pred_fallthru
    _

// kernel: transformer_captioning_forward.42
$region0: #{transformer_captioning_forward.42}
  #allocation0 [shape = 'u32[]', space=smem, size = 0x4, offset = 0x4, fixed_abs, tag = 'smem constant byte address 0x4 - core index']
  #allocation1 [shape = 'u32[72,128]{1,0:T(1,128)}', space=vmem, size = 0x9000, scoped, tag = 'internal scratch']
  #allocation2 [shape = 'f32[4,8,1]{2,1,0:T(8,128)}', space=vmem, size = 0x4000, scoped, tag = 'scratch operand']
  #allocation3 [shape = 'f32[4,8,1]{2,1,0:T(8,128)}', space=vmem, size = 0x4000, scoped, tag = 'scratch operand']
  #allocation4 [shape = 'f32[4,8,8]{2,1,0:T(8,128)}', space=vmem, size = 0x4000, scoped, tag = 'scratch operand']
  %s0 = inlined_call_operand.vmem [shape: bf16[2,8,32], index: 0, kind: input, shape index: {}]
  %s1 = inlined_call_operand.vmem [shape: bf16[2,8,32], index: 1, kind: input, shape index: {}]
  %s2 = inlined_call_operand.vmem [shape: bf16[2,8,32], index: 2, kind: input, shape index: {}]
  %s3 = inlined_call_operand.vmem [shape: bf16[2,8,32], index: 3, kind: output, shape index: {}]
  %s4 = sld [smem:[#allocation0]]
  $region53: #{transformer_captioning_forward.42} parent=0
    _
  %s6 = ssub.s32 1, %s4
  %s7 = scalar_select 0, %s6, %s4
  loop: start=0, step=1, limit=4
  $region2: #{transformer_captioning_forward.42} parent=0 // loop_pre_header
    _
  $region3: #{transformer_captioning_forward.42} parent=0 // loop_header
    %s9 = sphi 0, %s13
    %p10 = scmp.ge.s32.totalorder %s9, 4
    %s16 = sphi 0, %s35
    %s17 = sphi 0, %s31
    %s18 = sphi 0, %s27
    %s19 = sphi 0, %s16
    %s20 = sphi 0, %s17
    %s21 = sphi 0, %s18
    %s22 = sphi 0, %s19
    %s23 = sphi 0, %s20
    %s24 = sphi 0, %s21
    %s40 = sphi 0, %s42
    %s43 = sphi 0, %s40
    %s44 = sphi 0, %s43
    %s60 = sphi 0, %s44
    %s68 = sphi 0, %s70
    %s71 = sphi 0, %s68
    %s72 = sphi 0, %s71
    %s88 = sphi 0, %s72
    %s96 = sphi 0, %s98
    %s99 = sphi 0, %s96
    %s100 = sphi 0, %s99
    %s116 = sphi 0, %s100
    %s124 = sphi 0, %s126
    %s127 = sphi 0, %s124
    %s128 = sphi 0, %s127
    %s144 = sphi 0, %s128
  $region4: #{transformer_captioning_forward.42} parent=0 // loop_header_branch
    %12 = sbr.rel (%p10) target = $region8
  $region5: #{transformer_captioning_forward.42} parent=0 // loop_body
    %s14 = ssub.s32 %s9, 1
    %s15 = ssub.s32 %s9, 2
    %s25 = sadd.s32 1, %s18
    %p26 = scmp.ge.s32.totalorder %s25, 1
    %s27 = scalar_select %p26, 0, %s25
    %s28 = sadd.s32 1, %s17
    %s29 = scalar_select %p26, %s28, %s17
    %p30 = scmp.ge.s32.totalorder %s29, 1
    %s31 = scalar_select %p30, 0, %s29
    %s32 = sadd.s32 1, %s16
    %s33 = scalar_select %p30, %s32, %s16
    %p34 = scmp.ge.s32.totalorder %s33, 2
    %s35 = scalar_select %p34, 0, %s33
    %s36 = ssub.s32 %s16, %s35
    %s37 = ssub.s32 %s17, %s31
    %s38 = sor.u32 %s36, %s37
    %p39 = scmp.eq.s32.totalorder %s38, 0
    %s41 = sadd.s32 %s40, 1
    %s42 = scalar_select %p39, %s40, %s41
    %p45 = pneg %p39
    %p46 = scmp.eq.s32.totalorder %s9, 1
    %p47 = por %p45, %p46
    %p48 = scmp.ne.s32.totalorder %s40, %s43
    %p49 = scmp.eq.s32.totalorder %s9, 0
    %p50 = por %p48, %p49
    %p51 = scmp.ne.s32.totalorder %s40, %s43
    %p52 = scmp.eq.s32.totalorder %s14, 1
    %p53 = por %p51, %p52
    %p54 = scmp.ne.s32.totalorder %s43, %s44
    %p55 = scmp.eq.s32.totalorder %s14, 0
    %p56 = por %p54, %p55
    %p57 = scmp.ne.s32.totalorder %s43, %s44
    %p58 = scmp.eq.s32.totalorder %s15, 1
    %p59 = por %p57, %p58
    %p61 = scmp.ne.s32.totalorder %s44, %s60
    %p62 = scmp.eq.s32.totalorder %s15, 0
    %p63 = por %p61, %p62
    %s64 = ssub.s32 %s16, %s35
    %s65 = ssub.s32 %s18, %s27
    %s66 = sor.u32 %s64, %s65
    %p67 = scmp.eq.s32.totalorder %s66, 0
    %s69 = sadd.s32 %s68, 1
    %s70 = scalar_select %p67, %s68, %s69
    %p73 = pneg %p67
    %p74 = scmp.eq.s32.totalorder %s9, 1
    %p75 = por %p73, %p74
    %p76 = scmp.ne.s32.totalorder %s68, %s71
    %p77 = scmp.eq.s32.totalorder %s9, 0
    %p78 = por %p76, %p77
    %p79 = scmp.ne.s32.totalorder %s68, %s71
    %p80 = scmp.eq.s32.totalorder %s14, 1
    %p81 = por %p79, %p80
    %p82 = scmp.ne.s32.totalorder %s71, %s72
    %p83 = scmp.eq.s32.totalorder %s14, 0
    %p84 = por %p82, %p83
    %p85 = scmp.ne.s32.totalorder %s71, %s72
    %p86 = scmp.eq.s32.totalorder %s15, 1
    %p87 = por %p85, %p86
    %p89 = scmp.ne.s32.totalorder %s72, %s88
    %p90 = scmp.eq.s32.totalorder %s15, 0
    %p91 = por %p89, %p90
    %s92 = ssub.s32 %s16, %s35
    %s93 = ssub.s32 %s18, %s27
    %s94 = sor.u32 %s92, %s93
    %p95 = scmp.eq.s32.totalorder %s94, 0
    %s97 = sadd.s32 %s96, 1
    %s98 = scalar_select %p95, %s96, %s97
    %p101 = pneg %p95
    %p102 = scmp.eq.s32.totalorder %s9, 1
    %p103 = por %p101, %p102
    %p104 = scmp.ne.s32.totalorder %s96, %s99
    %p105 = scmp.eq.s32.totalorder %s9, 0
    %p106 = por %p104, %p105
    %p107 = scmp.ne.s32.totalorder %s96, %s99
    %p108 = scmp.eq.s32.totalorder %s14, 1
    %p109 = por %p107, %p108
    %p110 = scmp.ne.s32.totalorder %s99, %s100
    %p111 = scmp.eq.s32.totalorder %s14, 0
    %p112 = por %p110, %p111
    %p113 = scmp.ne.s32.totalorder %s99, %s100
    %p114 = scmp.eq.s32.totalorder %s15, 1
    %p115 = por %p113, %p114
    %p117 = scmp.ne.s32.totalorder %s100, %s116
    %p118 = scmp.eq.s32.totalorder %s15, 0
    %p119 = por %p117, %p118
    %s120 = ssub.s32 %s16, %s35
    %s121 = ssub.s32 %s17, %s31
    %s122 = sor.u32 %s120, %s121
    %p123 = scmp.eq.s32.totalorder %s122, 0
    %s125 = sadd.s32 %s124, 1
    %s126 = scalar_select %p123, %s124, %s125
    %p129 = pneg %p123
    %p130 = scmp.eq.s32.totalorder %s9, 1
    %p131 = por %p129, %p130
    %p132 = scmp.ne.s32.totalorder %s124, %s127
    %p133 = scmp.eq.s32.totalorder %s9, 0
    %p134 = por %p132, %p133
    %p135 = scmp.ne.s32.totalorder %s124, %s127
    %p136 = scmp.eq.s32.totalorder %s14, 1
    %p137 = por %p135, %p136
    %p138 = scmp.ne.s32.totalorder %s127, %s128
    %p139 = scmp.eq.s32.totalorder %s14, 0
    %p140 = por %p138, %p139
    %p141 = scmp.ne.s32.totalorder %s127, %s128
    %p142 = scmp.eq.s32.totalorder %s15, 1
    %p143 = por %p141, %p142
    %p145 = scmp.ne.s32.totalorder %s128, %s144
    %p146 = scmp.eq.s32.totalorder %s15, 0
    %p147 = por %p145, %p146
    %p148 = scmp.le.s32.totalorder 1, %s9
    %p149 = scmp.lt.s32.totalorder %s9, 3
    %p150 = pnand %p148, %p149
    %p151 = pneg %p150
    // Predicated region
    $region9: #{transformer_captioning_forward.42} parent=5 // pred_check
      _
    $region10: #{transformer_captioning_forward.42} parent=5 // pred_check_branch
      %153 = sbr.rel (%p150) target = $region12
    $region11: #{transformer_captioning_forward.42} parent=5 // pred_region
      %s154 = ssub.s32 %s9, 1
    $region12: #{transformer_captioning_forward.42} parent=5 // pred_fallthru
      _
    %p155 = scmp.lt.s32.totalorder %s9, 2
    // Predicated region
    $region13: #{transformer_captioning_forward.42} parent=5 // pred_check
      %p156 = pneg %p155
    $region14: #{transformer_captioning_forward.42} parent=5 // pred_check_branch
      %158 = sbr.rel (%p156) target = $region16
    $region15: #{transformer_captioning_forward.42} parent=5 // pred_region
      // Predicated region
      $region17: #{transformer_captioning_forward.42} parent=15 // pred_check
        %p159 = pneg %p50
      $region18: #{transformer_captioning_forward.42} parent=15 // pred_check_branch
        %161 = sbr.rel (%p159) target = $region20
      $region19: #{transformer_captioning_forward.42} parent=15 // pred_region
        %p162 = scmp.lt.s32.totalorder %s16, 1
        %s163 = scalar_select %p162, %s16, 1
        %p164 = scmp.lt.s32.totalorder %s17, 0
        %s165 = scalar_select %p164, %s17, 0
        %s166 = sadd.s32 %s165, %s163
        %s167 = smul.addr %s166, 4
        %s168 = scalar_lea.vmem %s0, %s167
      $region20: #{transformer_captioning_forward.42} parent=15 // pred_fallthru
        _
      // Predicated region
      $region21: #{transformer_captioning_forward.42} parent=15 // pred_check
        %p169 = pneg %p78
      $region22: #{transformer_captioning_forward.42} parent=15 // pred_check_branch
        %171 = sbr.rel (%p169) target = $region24
      $region23: #{transformer_captioning_forward.42} parent=15 // pred_region
        %p172 = scmp.lt.s32.totalorder %s16, 1
        %s173 = scalar_select %p172, %s16, 1
        %p174 = scmp.lt.s32.totalorder %s18, 0
        %s175 = scalar_select %p174, %s18, 0
        %s176 = sadd.s32 %s175, %s173
        %s177 = smul.addr %s176, 4
        %s178 = scalar_lea.vmem %s1, %s177
      $region24: #{transformer_captioning_forward.42} parent=15 // pred_fallthru
        _
      // Predicated region
      $region25: #{transformer_captioning_forward.42} parent=15 // pred_check
        %p179 = pneg %p106
      $region26: #{transformer_captioning_forward.42} parent=15 // pred_check_branch
        %181 = sbr.rel (%p179) target = $region28
      $region27: #{transformer_captioning_forward.42} parent=15 // pred_region
        %p182 = scmp.lt.s32.totalorder %s16, 1
        %s183 = scalar_select %p182, %s16, 1
        %p184 = scmp.lt.s32.totalorder %s18, 0
        %s185 = scalar_select %p184, %s18, 0
        %s186 = sadd.s32 %s185, %s183
        %s187 = smul.addr %s186, 4
        %s188 = scalar_lea.vmem %s2, %s187
      $region28: #{transformer_captioning_forward.42} parent=15 // pred_fallthru
        _
    $region16: #{transformer_captioning_forward.42} parent=5 // pred_fallthru
      _
    %p189 = scmp.le.s32.totalorder 1, %s9
    %p190 = scmp.lt.s32.totalorder %s9, 3
    %p191 = pnand %p189, %p190
    %p192 = pneg %p191
    // Predicated region
    $region29: #{transformer_captioning_forward.42} parent=5 // pred_check
      _
    $region30: #{transformer_captioning_forward.42} parent=5 // pred_check_branch
      %194 = sbr.rel (%p191) target = $region32
    $region31: #{transformer_captioning_forward.42} parent=5 // pred_region
      %s195 = ssub.s32 %s9, 1
      %p196 = scmp.lt.s32.totalorder %s19, 1
      %s197 = scalar_select %p196, %s19, 1
      %p198 = scmp.lt.s32.totalorder %s20, 0
      %s199 = scalar_select %p198, %s20, 0
      %s200 = sadd.s32 %s199, %s197
      %s201 = smul.addr %s200, 4
      %s202 = scalar_lea.vmem %s0, %s201
      %p203 = pneg %p56
      %p204 = pneg %p53
      %p205 = scmp.lt.s32.totalorder %s19, 1
      %s206 = scalar_select %p205, %s19, 1
      %p207 = scmp.lt.s32.totalorder %s21, 0
      %s208 = scalar_select %p207, %s21, 0
      %s209 = sadd.s32 %s208, %s206
      %s210 = smul.addr %s209, 4
      %s211 = scalar_lea.vmem %s1, %s210
      %p212 = pneg %p84
      %p213 = pneg %p81
      %p214 = scmp.lt.s32.totalorder %s19, 1
      %s215 = scalar_select %p214, %s19, 1
      %p216 = scmp.lt.s32.totalorder %s21, 0
      %s217 = scalar_select %p216, %s21, 0
      %s218 = sadd.s32 %s217, %s215
      %s219 = smul.addr %s218, 4
      %s220 = scalar_lea.vmem %s2, %s219
      %p221 = pneg %p112
      %p222 = pneg %p109
      %p223 = pneg %p140
      %p224 = pneg %p137
      %p225 = scmp.lt.s32.totalorder %s19, 1
      %s226 = scalar_select %p225, %s19, 1
      %p227 = scmp.lt.s32.totalorder %s20, 0
      %s228 = scalar_select %p227, %s20, 0
      %s229 = sadd.s32 %s228, %s226
      %s230 = smul.addr %s229, 4
      %s231 = scalar_lea.vmem %s3, %s230
      %p232 = scmp.lt.s32.totalorder %s19, 1
      %s233 = scalar_select %p232, %s19, 1
      %p234 = scmp.lt.s32.totalorder %s20, 0
      %s235 = scalar_select %p234, %s20, 0
      %s236 = sadd.s32 %s235, %s233
      %s237 = smul.addr %s236, 4
      %s238 = scalar_lea.vmem %s0, %s237
      %p239 = scmp.lt.s32.totalorder %s19, 1
      %s240 = scalar_select %p239, %s19, 1
      %p241 = scmp.lt.s32.totalorder %s21, 0
      %s242 = scalar_select %p241, %s21, 0
      %s243 = sadd.s32 %s242, %s240
      %s244 = smul.addr %s243, 4
      %s245 = scalar_lea.vmem %s1, %s244
      %p246 = scmp.lt.s32.totalorder %s19, 1
      %s247 = scalar_select %p246, %s19, 1
      %p248 = scmp.lt.s32.totalorder %s21, 0
      %s249 = scalar_select %p248, %s21, 0
      %s250 = sadd.s32 %s249, %s247
      %s251 = smul.addr %s250, 4
      %s252 = scalar_lea.vmem %s2, %s251
      %p253 = scmp.lt.s32.totalorder %s19, 1
      %s254 = scalar_select %p253, %s19, 1
      %p255 = scmp.lt.s32.totalorder %s20, 0
      %s256 = scalar_select %p255, %s20, 0
      %s257 = sadd.s32 %s256, %s254
      %s258 = smul.addr %s257, 4
      %s259 = scalar_lea.vmem %s3, %s258
      %p261 = scmp.eq.s32.totalorder %s21, 0
      // Predicated region
      $region33: #{transformer_captioning_forward.42} parent=31 // pred_check
        %p262 = pneg %p261
      $region34: #{transformer_captioning_forward.42} parent=31 // pred_check_branch
        %264 = sbr.rel (%p262) target = $region36
      $region35: #{transformer_captioning_forward.42} parent=31 // pred_region
        %vm265 = vcmask 7168
        %266 = vst.msk [vmem:[#allocation2] sm:$0xff] %vm265, -inf
        %267 = vst.msk [vmem:[#allocation2 + $0x8] sm:$0xff] %vm265, -inf
        %268 = vst.msk [vmem:[#allocation2 + $0x10] sm:$0xff] %vm265, -inf
        %269 = vst.msk [vmem:[#allocation2 + $0x18] sm:$0xff] %vm265, -inf
        %270 = vst.msk [vmem:[#allocation3] sm:$0xff] %vm265, 0.0
        %271 = vst.msk [vmem:[#allocation3 + $0x8] sm:$0xff] %vm265, 0.0
        %272 = vst.msk [vmem:[#allocation3 + $0x10] sm:$0xff] %vm265, 0.0
        %273 = vst.msk [vmem:[#allocation3 + $0x18] sm:$0xff] %vm265, 0.0
        %vm274 = vcmask 64512
        %275 = vst.msk [vmem:[#allocation4] sm:$0xff] %vm274, 0.0
        %276 = vst.msk [vmem:[#allocation4 + $0x8] sm:$0xff] %vm274, 0.0
        %277 = vst.msk [vmem:[#allocation4 + $0x10] sm:$0xff] %vm274, 0.0
        %278 = vst.msk [vmem:[#allocation4 + $0x18] sm:$0xff] %vm274, 0.0
      $region36: #{transformer_captioning_forward.42} parent=31 // pred_fallthru
        _
      %v279 = vld [vmem:[%s238] sm:$0xf]
      %v280 = vld [vmem:[%s245] sm:$0xf]
      %v281 = vld [vmem:[%s252] sm:$0xf]
      %v282 = vlaneseq
      %v283 = vand.u32 %v282, 127
      %s284 = smul.u32 %s21, 8
      %v285 = vstv %s284
      %v286 = vadd.s32 %v283, %v285
      %vm287 = vcmp.lt.s32.totalorder %v286, 8
      %v288 = vlaneseq
      %v289 = vshrl.u32 %v288, 7
      %s290 = smul.u32 %s20, 8
      %v291 = vstv %s290
      %v292 = vadd.s32 %v289, %v291
      %vm293 = vcmp.le.s32.totalorder %v286, %v292
      %vm294 = vmand %vm287, %vm293
      %vm295 = vcmask 64512
      %v297 = vsel %vm295, %v279, 0
      %v300 = vsel %vm295, %v280, 0
      %302 = vmatpush.bf16.xpose.msra.mxu0 0
      %303 = vmatpush.bf16.xpose.msra.mxu0 0
      %304 = vmatpush.bf16.xpose.msra.mxu0 0
      %305 = vmatpush.bf16.xpose.msra.mxu0 0
      %306 = vmatpush.bf16.xpose.msra.mxu0 0
      %307 = vmatpush.bf16.xpose.msra.mxu0 0
      %308 = vmatpush.bf16.xpose.msra.mxu0 0
      %309 = vmatpush.bf16.xpose.msra.mxu0 %v300
      %310 = vmatmul.bf16.gmra.mxu0 %v297
      %v311 = vpop.f32.mrf.mxu0
      %v312 = vadd.f32 0.0, %v311
      %v313 = vpop.f32.mrf.mxu0
      %314 = vdwg.mxu0
      %v315 = vmul.f32 %v312, 0.35355338
      %v316 = vsel %vm294, %v315, -1e+30
      %v317 = vld [vmem:[#allocation2] sm:$0xff]
      %v318 = vsel %vm295, %v316, -inf
      %319 = vmax.xlane.f32.xlu0 %v318
      %v320 = vpop.xlane.xlu0 %319
      %v321 = vmax.f32 %v317, %v320
      %v322 = vsub.f32 %v317, %v321
      %v323 = vmul.f32 %v322, 1.442695
      %v324 = vpow.pop %v323
      %326 = vset.pattern.permute.xlu0 0
      %327 = vperm.xlu0 %326, %v321
      %v328 = vpop.permute.xlu0 %327
      %v330 = vsub.f32 %v316, %v328
      %v331 = vmul.f32 %v330, 1.442695
      %v332 = vpow.pop %v331
      %v333 = vld [vmem:[#allocation3] sm:$0xff]
      %v334 = vmul.f32 %v324, %v333
      %v335 = vsel %vm295, %v332, 0.0
      %336 = vadd.xlane.f32.xlu0 %v335
      %v337 = vpop.xlane.xlu0 %336
      %v338 = vadd.f32 %v334, %v337
      %vm339 = vcmask 7168
      %340 = vst.msk [vmem:[#allocation3] sm:$0xff] %vm339, %v338
      %v341 = vld [vmem:[#allocation4] sm:$0xff]
      %343 = vset.pattern.permute.xlu0 0
      %344 = vperm.xlu0 %343, %v324
      %v345 = vpop.permute.xlu0 %344
      %v347 = vmul.f32 %v345, %v341
      %v348 = vpack.c.bf16 %v332, %v332
      %v350 = vsel %vm295, %v348, 0
      %vm352 = vcmask 1043456
      %v354 = vsel %vm352, %v281, 0
      %356 = vmatpush.bf16.msra.mxu0 0
      %357 = vmatpush.bf16.msra.mxu0 0
      %358 = vmatpush.bf16.msra.mxu0 0
      %359 = vmatpush.bf16.msra.mxu0 0
      %360 = vmatpush.bf16.msra.mxu0 0
      %361 = vmatpush.bf16.msra.mxu0 0
      %362 = vmatpush.bf16.msra.mxu0 0
      %363 = vmatpush.bf16.msra.mxu0 %v354
      %364 = vmatmul.bf16.gmra.mxu0 %v350
      %v365 = vpop.f32.mrf.mxu0
      %v366 = vadd.f32 0.0, %v365
      %v367 = vpop.f32.mrf.mxu0
      %368 = vdwg.mxu0
      %v369 = vadd.f32 %v347, %v366
      %370 = vst.msk [vmem:[#allocation4] sm:$0xff] %vm295, %v369
      %371 = vst.msk [vmem:[#allocation2] sm:$0xff] %vm339, %v321
      %v373 = vunpack.c.l.b16 %v279
      %v374 = vpack.c.b16 %v373, %v373
      %375 = vrot.lane.b32.xlu0 %v374, 120
      %v376 = vpop.permute.xlu0 %375
      %v378 = vunpack.c.l.b16 %v280
      %v379 = vpack.c.b16 %v378, %v378
      %380 = vrot.lane.b32.xlu0 %v379, 120
      %v381 = vpop.permute.xlu0 %380
      %v383 = vsel %vm295, %v376, 0
      %v386 = vsel %vm295, %v381, 0
      %388 = vmatpush.bf16.xpose.msra.mxu0 0
      %389 = vmatpush.bf16.xpose.msra.mxu0 0
      %390 = vmatpush.bf16.xpose.msra.mxu0 0
      %391 = vmatpush.bf16.xpose.msra.mxu0 0
      %392 = vmatpush.bf16.xpose.msra.mxu0 0
      %393 = vmatpush.bf16.xpose.msra.mxu0 0
      %394 = vmatpush.bf16.xpose.msra.mxu0 0
      %395 = vmatpush.bf16.xpose.msra.mxu0 %v386
      %396 = vmatmul.bf16.gmra.mxu0 %v383
      %v397 = vpop.f32.mrf.mxu0
      %v398 = vadd.f32 0.0, %v397
      %v399 = vpop.f32.mrf.mxu0
      %400 = vdwg.mxu0
      %v401 = vmul.f32 %v398, 0.35355338
      %v402 = vsel %vm294, %v401, -1e+30
      %s403 = scalar_lea.vmem [#allocation2], 8
      %v404 = vld [vmem:[%s403] sm:$0xff]
      %v405 = vsel %vm295, %v402, -inf
      %406 = vmax.xlane.f32.xlu0 %v405
      %v407 = vpop.xlane.xlu0 %406
      %v408 = vmax.f32 %v404, %v407
      %v409 = vsub.f32 %v404, %v408
      %v410 = vmul.f32 %v409, 1.442695
      %v411 = vpow.pop %v410
      %413 = vset.pattern.permute.xlu0 0
      %414 = vperm.xlu0 %413, %v408
      %v415 = vpop.permute.xlu0 %414
      %v417 = vsub.f32 %v402, %v415
      %v418 = vmul.f32 %v417, 1.442695
      %v419 = vpow.pop %v418
      %s420 = scalar_lea.vmem [#allocation3], 8
      %v421 = vld [vmem:[%s420] sm:$0xff]
      %v422 = vmul.f32 %v411, %v421
      %v423 = vsel %vm295, %v419, 0.0
      %424 = vadd.xlane.f32.xlu0 %v423
      %v425 = vpop.xlane.xlu0 %424
      %v426 = vadd.f32 %v422, %v425
      %427 = vst.msk [vmem:[%s420] sm:$0xff] %vm339, %v426
      %s428 = scalar_lea.vmem [#allocation4], 8
      %v429 = vld [vmem:[%s428] sm:$0xff]
      %431 = vset.pattern.permute.xlu0 0
      %432 = vperm.xlu0 %431, %v411
      %v433 = vpop.permute.xlu0 %432
      %v435 = vmul.f32 %v433, %v429
      %v436 = vpack.c.bf16 %v419, %v419
      %v438 = vunpack.c.l.b16 %v281
      %v439 = vpack.c.b16 %v438, %v438
      %440 = vrot.lane.b32.xlu0 %v439, 120
      %v441 = vpop.permute.xlu0 %440
      %v443 = vsel %vm295, %v436, 0
      %v446 = vsel %vm352, %v441, 0
      %448 = vmatpush.bf16.msra.mxu0 0
      %449 = vmatpush.bf16.msra.mxu0 0
      %450 = vmatpush.bf16.msra.mxu0 0
      %451 = vmatpush.bf16.msra.mxu0 0
      %452 = vmatpush.bf16.msra.mxu0 0
      %453 = vmatpush.bf16.msra.mxu0 0
      %454 = vmatpush.bf16.msra.mxu0 0
      %455 = vmatpush.bf16.msra.mxu0 %v446
      %456 = vmatmul.bf16.gmra.mxu0 %v443
      %v457 = vpop.f32.mrf.mxu0
      %v458 = vadd.f32 0.0, %v457
      %v459 = vpop.f32.mrf.mxu0
      %460 = vdwg.mxu0
      %v461 = vadd.f32 %v435, %v458
      %462 = vst.msk [vmem:[%s428] sm:$0xff] %vm295, %v461
      %463 = vst.msk [vmem:[%s403] sm:$0xff] %vm339, %v408
      %464 = vrot.lane.b32.xlu0 %v374, 112
      %v465 = vpop.permute.xlu0 %464
      %466 = vrot.lane.b32.xlu0 %v379, 112
      %v467 = vpop.permute.xlu0 %466
      %v469 = vsel %vm295, %v465, 0
      %v472 = vsel %vm295, %v467, 0
      %474 = vmatpush.bf16.xpose.msra.mxu0 0
      %475 = vmatpush.bf16.xpose.msra.mxu0 0
      %476 = vmatpush.bf16.xpose.msra.mxu0 0
      %477 = vmatpush.bf16.xpose.msra.mxu0 0
      %478 = vmatpush.bf16.xpose.msra.mxu0 0
      %479 = vmatpush.bf16.xpose.msra.mxu0 0
      %480 = vmatpush.bf16.xpose.msra.mxu0 0
      %481 = vmatpush.bf16.xpose.msra.mxu0 %v472
      %482 = vmatmul.bf16.gmra.mxu0 %v469
      %v483 = vpop.f32.mrf.mxu0
      %v484 = vadd.f32 0.0, %v483
      %v485 = vpop.f32.mrf.mxu0
      %486 = vdwg.mxu0
      %v487 = vmul.f32 %v484, 0.35355338
      %v488 = vsel %vm294, %v487, -1e+30
      %s489 = scalar_lea.vmem [#allocation2], 16
      %v490 = vld [vmem:[%s489] sm:$0xff]
      %v491 = vsel %vm295, %v488, -inf
      %492 = vmax.xlane.f32.xlu0 %v491
      %v493 = vpop.xlane.xlu0 %492
      %v494 = vmax.f32 %v490, %v493
      %v495 = vsub.f32 %v490, %v494
      %v496 = vmul.f32 %v495, 1.442695
      %v497 = vpow.pop %v496
      %499 = vset.pattern.permute.xlu0 0
      %500 = vperm.xlu0 %499, %v494
      %v501 = vpop.permute.xlu0 %500
      %v503 = vsub.f32 %v488, %v501
      %v504 = vmul.f32 %v503, 1.442695
      %v505 = vpow.pop %v504
      %s506 = scalar_lea.vmem [#allocation3], 16
      %v507 = vld [vmem:[%s506] sm:$0xff]
      %v508 = vmul.f32 %v497, %v507
      %v509 = vsel %vm295, %v505, 0.0
      %510 = vadd.xlane.f32.xlu0 %v509
      %v511 = vpop.xlane.xlu0 %510
      %v512 = vadd.f32 %v508, %v511
      %513 = vst.msk [vmem:[%s506] sm:$0xff] %vm339, %v512
      %s514 = scalar_lea.vmem [#allocation4], 16
      %v515 = vld [vmem:[%s514] sm:$0xff]
      %517 = vset.pattern.permute.xlu0 0
      %518 = vperm.xlu0 %517, %v497
      %v519 = vpop.permute.xlu0 %518
      %v521 = vmul.f32 %v519, %v515
      %v522 = vpack.c.bf16 %v505, %v505
      %523 = vrot.lane.b32.xlu0 %v439, 112
      %v524 = vpop.permute.xlu0 %523
      %v526 = vsel %vm295, %v522, 0
      %v529 = vsel %vm352, %v524, 0
      %531 = vmatpush.bf16.msra.mxu0 0
      %532 = vmatpush.bf16.msra.mxu0 0
      %533 = vmatpush.bf16.msra.mxu0 0
      %534 = vmatpush.bf16.msra.mxu0 0
      %535 = vmatpush.bf16.msra.mxu0 0
      %536 = vmatpush.bf16.msra.mxu0 0
      %537 = vmatpush.bf16.msra.mxu0 0
      %538 = vmatpush.bf16.msra.mxu0 %v529
      %539 = vmatmul.bf16.gmra.mxu0 %v526
      %v540 = vpop.f32.mrf.mxu0
      %v541 = vadd.f32 0.0, %v540
      %v542 = vpop.f32.mrf.mxu0
      %543 = vdwg.mxu0
      %v544 = vadd.f32 %v521, %v541
      %545 = vst.msk [vmem:[%s514] sm:$0xff] %vm295, %v544
      %546 = vst.msk [vmem:[%s489] sm:$0xff] %vm339, %v494
      %547 = vrot.lane.b32.xlu0 %v374, 104
      %v548 = vpop.permute.xlu0 %547
      %549 = vrot.lane.b32.xlu0 %v379, 104
      %v550 = vpop.permute.xlu0 %549
      %v552 = vsel %vm295, %v548, 0
      %v555 = vsel %vm295, %v550, 0
      %557 = vmatpush.bf16.xpose.msra.mxu0 0
      %558 = vmatpush.bf16.xpose.msra.mxu0 0
      %559 = vmatpush.bf16.xpose.msra.mxu0 0
      %560 = vmatpush.bf16.xpose.msra.mxu0 0
      %561 = vmatpush.bf16.xpose.msra.mxu0 0
      %562 = vmatpush.bf16.xpose.msra.mxu0 0
      %563 = vmatpush.bf16.xpose.msra.mxu0 0
      %564 = vmatpush.bf16.xpose.msra.mxu0 %v555
      %565 = vmatmul.bf16.gmra.mxu0 %v552
      %v566 = vpop.f32.mrf.mxu0
      %v567 = vadd.f32 0.0, %v566
      %v568 = vpop.f32.mrf.mxu0
      %569 = vdwg.mxu0
      %v570 = vmul.f32 %v567, 0.35355338
      %v571 = vsel %vm294, %v570, -1e+30
      %s572 = scalar_lea.vmem [#allocation2], 24
      %v573 = vld [vmem:[%s572] sm:$0xff]
      %v574 = vsel %vm295, %v571, -inf
      %575 = vmax.xlane.f32.xlu0 %v574
      %v576 = vpop.xlane.xlu0 %575
      %v577 = vmax.f32 %v573, %v576
      %v578 = vsub.f32 %v573, %v577
      %v579 = vmul.f32 %v578, 1.442695
      %v580 = vpow.pop %v579
      %582 = vset.pattern.permute.xlu0 0
      %583 = vperm.xlu0 %582, %v577
      %v584 = vpop.permute.xlu0 %583
      %v586 = vsub.f32 %v571, %v584
      %v587 = vmul.f32 %v586, 1.442695
      %v588 = vpow.pop %v587
      %s589 = scalar_lea.vmem [#allocation3], 24
      %v590 = vld [vmem:[%s589] sm:$0xff]
      %v591 = vmul.f32 %v580, %v590
      %v592 = vsel %vm295, %v588, 0.0
      %593 = vadd.xlane.f32.xlu0 %v592
      %v594 = vpop.xlane.xlu0 %593
      %v595 = vadd.f32 %v591, %v594
      %596 = vst.msk [vmem:[%s589] sm:$0xff] %vm339, %v595
      %s597 = scalar_lea.vmem [#allocation4], 24
      %v598 = vld [vmem:[%s597] sm:$0xff]
      %600 = vset.pattern.permute.xlu0 0
      %601 = vperm.xlu0 %600, %v580
      %v602 = vpop.permute.xlu0 %601
      %v604 = vmul.f32 %v602, %v598
      %v605 = vpack.c.bf16 %v588, %v588
      %606 = vrot.lane.b32.xlu0 %v439, 104
      %v607 = vpop.permute.xlu0 %606
      %v609 = vsel %vm295, %v605, 0
      %v612 = vsel %vm352, %v607, 0
      %614 = vmatpush.bf16.msra.mxu0 0
      %615 = vmatpush.bf16.msra.mxu0 0
      %616 = vmatpush.bf16.msra.mxu0 0
      %617 = vmatpush.bf16.msra.mxu0 0
      %618 = vmatpush.bf16.msra.mxu0 0
      %619 = vmatpush.bf16.msra.mxu0 0
      %620 = vmatpush.bf16.msra.mxu0 0
      %621 = vmatpush.bf16.msra.mxu0 %v612
      %622 = vmatmul.bf16.gmra.mxu0 %v609
      %v623 = vpop.f32.mrf.mxu0
      %v624 = vadd.f32 0.0, %v623
      %v625 = vpop.f32.mrf.mxu0
      %626 = vdwg.mxu0
      %v627 = vadd.f32 %v604, %v624
      %628 = vst.msk [vmem:[%s597] sm:$0xff] %vm295, %v627
      %629 = vst.msk [vmem:[%s572] sm:$0xff] %vm339, %v577
      // Predicated region
      $region37: #{transformer_captioning_forward.42} parent=31 // pred_check
        %p630 = pneg %p261
      $region38: #{transformer_captioning_forward.42} parent=31 // pred_check_branch
        %632 = sbr.rel (%p630) target = $region40
      $region39: #{transformer_captioning_forward.42} parent=31 // pred_region
        %v633 = vld [vmem:[#allocation3] sm:$0xff]
        %v634 = vrcp.pop %v633
        %v635 = vld [vmem:[#allocation4] sm:$0xff]
        %637 = vset.pattern.permute.xlu0 0
        %638 = vperm.xlu0 %637, %v634
        %v639 = vpop.permute.xlu0 %638
        %v641 = vmul.f32 %v635, %v639
        %v642 = vpack.c.bf16 %v641, %v641
        %vm643 = vcmask 60416
        %644 = vst.msk [vmem:[%s259] sm:$0xf] %vm643, %v642
        %v645 = vld [vmem:[%s420] sm:$0xff]
        %v646 = vrcp.pop %v645
        %v647 = vld [vmem:[%s428] sm:$0xff]
        %649 = vset.pattern.permute.xlu0 0
        %650 = vperm.xlu0 %649, %v646
        %v651 = vpop.permute.xlu0 %650
        %v653 = vmul.f32 %v647, %v651
        %v654 = vpack.c.bf16 %v653, %v653
        %656 = vrot.lane.b32.xlu0 %v654, 8
        %v657 = vpop.permute.xlu0 %656
        %vm659 = vcmask 126016
        %660 = vst.msk [vmem:[%s259] sm:$0xf] %vm659, %v657
        %v661 = vld [vmem:[%s506] sm:$0xff]
        %v662 = vrcp.pop %v661
        %v663 = vld [vmem:[%s514] sm:$0xff]
        %665 = vset.pattern.permute.xlu0 0
        %666 = vperm.xlu0 %665, %v662
        %v667 = vpop.permute.xlu0 %666
        %v669 = vmul.f32 %v663, %v667
        %v670 = vpack.c.bf16 %v669, %v669
        %672 = vrot.lane.b32.xlu0 %v670, 16
        %v673 = vpop.permute.xlu0 %672
        %vm675 = vcmask 191616
        %676 = vst.msk [vmem:[%s259] sm:$0xf] %vm675, %v673
        %v677 = vld [vmem:[%s589] sm:$0xff]
        %v678 = vrcp.pop %v677
        %v679 = vld [vmem:[%s597] sm:$0xff]
        %681 = vset.pattern.permute.xlu0 0
        %682 = vperm.xlu0 %681, %v678
        %v683 = vpop.permute.xlu0 %682
        %v685 = vmul.f32 %v679, %v683
        %v686 = vpack.c.bf16 %v685, %v685
        %688 = vrot.lane.b32.xlu0 %v686, 24
        %v689 = vpop.permute.xlu0 %688
        %vm691 = vcmask 257216
        %692 = vst.msk [vmem:[%s259] sm:$0xf] %vm691, %v689
      $region40: #{transformer_captioning_forward.42} parent=31 // pred_fallthru
        _
      %p693 = scmp.lt.s32.totalorder %s19, 1
      %s694 = scalar_select %p693, %s19, 1
      %p695 = scmp.lt.s32.totalorder %s20, 0
      %s696 = scalar_select %p695, %s20, 0
      %s697 = sadd.s32 %s696, %s694
      %s698 = smul.addr %s697, 4
      %s699 = scalar_lea.vmem %s3, %s698
      // Predicated region
      $region41: #{transformer_captioning_forward.42} parent=31 // pred_check
        %p700 = pneg %p137
      $region42: #{transformer_captioning_forward.42} parent=31 // pred_check_branch
        %702 = sbr.rel (%p700) target = $region44
      $region43: #{transformer_captioning_forward.42} parent=31 // pred_region
        _
      $region44: #{transformer_captioning_forward.42} parent=31 // pred_fallthru
        _
    $region32: #{transformer_captioning_forward.42} parent=5 // pred_fallthru
      _
    %p703 = scmp.le.s32.totalorder 2, %s9
    // Predicated region
    $region45: #{transformer_captioning_forward.42} parent=5 // pred_check
      %p704 = pneg %p703
    $region46: #{transformer_captioning_forward.42} parent=5 // pred_check_branch
      %706 = sbr.rel (%p704) target = $region48
    $region47: #{transformer_captioning_forward.42} parent=5 // pred_region
      %s707 = ssub.s32 %s9, 2
      // Predicated region
      $region49: #{transformer_captioning_forward.42} parent=47 // pred_check
        %p708 = pneg %p143
      $region50: #{transformer_captioning_forward.42} parent=47 // pred_check_branch
        %710 = sbr.rel (%p708) target = $region52
      $region51: #{transformer_captioning_forward.42} parent=47 // pred_region
        %p711 = scmp.lt.s32.totalorder %s22, 1
        %s712 = scalar_select %p711, %s22, 1
        %p713 = scmp.lt.s32.totalorder %s23, 0
        %s714 = scalar_select %p713, %s23, 0
        %s715 = sadd.s32 %s714, %s712
        %s716 = smul.addr %s715, 4
        %s717 = scalar_lea.vmem %s3, %s716
      $region52: #{transformer_captioning_forward.42} parent=47 // pred_fallthru
        _
    $region48: #{transformer_captioning_forward.42} parent=5 // pred_fallthru
      _
  $region6: #{transformer_captioning_forward.42} parent=0 // loop_footer
    %s13 = sadd.s32 1, %s9
  $region7: #{transformer_captioning_forward.42} parent=0 // loop_footer_branch
    %8 = sbr.rel target = $region3
  $region8: #{transformer_captioning_forward.42} parent=0 // loop_exit
    _

// kernel: transformer_captioning_forward.32
$region0: #{transformer_captioning_forward.32}
  #allocation0 [shape = 'u32[]', space=smem, size = 0x4, offset = 0x4, fixed_abs, tag = 'smem constant byte address 0x4 - core index']
  #allocation1 [shape = 'u32[72,128]{1,0:T(1,128)}', space=vmem, size = 0x9000, scoped, tag = 'internal scratch']
  #allocation2 [shape = 'f32[4,8,1]{2,1,0:T(8,128)}', space=vmem, size = 0x4000, scoped, tag = 'scratch operand']
  #allocation3 [shape = 'f32[4,8,1]{2,1,0:T(8,128)}', space=vmem, size = 0x4000, scoped, tag = 'scratch operand']
  #allocation4 [shape = 'f32[4,8,8]{2,1,0:T(8,128)}', space=vmem, size = 0x4000, scoped, tag = 'scratch operand']
  %s0 = inlined_call_operand.vmem [shape: bf16[2,8,32], index: 0, kind: input, shape index: {}]
  %s1 = inlined_call_operand.vmem [shape: bf16[2,8,32], index: 1, kind: input, shape index: {}]
  %s2 = inlined_call_operand.vmem [shape: bf16[2,8,32], index: 2, kind: input, shape index: {}]
  %s3 = inlined_call_operand.vmem [shape: bf16[2,8,32], index: 3, kind: output, shape index: {}]
  %s4 = sld [smem:[#allocation0]]
  $region53: #{transformer_captioning_forward.32} parent=0
    _
  %s6 = ssub.s32 1, %s4
  %s7 = scalar_select 0, %s6, %s4
  loop: start=0, step=1, limit=4
  $region2: #{transformer_captioning_forward.32} parent=0 // loop_pre_header
    _
  $region3: #{transformer_captioning_forward.32} parent=0 // loop_header
    %s9 = sphi 0, %s13
    %p10 = scmp.ge.s32.totalorder %s9, 4
    %s16 = sphi 0, %s35
    %s17 = sphi 0, %s31
    %s18 = sphi 0, %s27
    %s19 = sphi 0, %s16
    %s20 = sphi 0, %s17
    %s21 = sphi 0, %s18
    %s22 = sphi 0, %s19
    %s23 = sphi 0, %s20
    %s24 = sphi 0, %s21
    %s40 = sphi 0, %s42
    %s43 = sphi 0, %s40
    %s44 = sphi 0, %s43
    %s60 = sphi 0, %s44
    %s68 = sphi 0, %s70
    %s71 = sphi 0, %s68
    %s72 = sphi 0, %s71
    %s88 = sphi 0, %s72
    %s96 = sphi 0, %s98
    %s99 = sphi 0, %s96
    %s100 = sphi 0, %s99
    %s116 = sphi 0, %s100
    %s124 = sphi 0, %s126
    %s127 = sphi 0, %s124
    %s128 = sphi 0, %s127
    %s144 = sphi 0, %s128
  $region4: #{transformer_captioning_forward.32} parent=0 // loop_header_branch
    %12 = sbr.rel (%p10) target = $region8
  $region5: #{transformer_captioning_forward.32} parent=0 // loop_body
    %s14 = ssub.s32 %s9, 1
    %s15 = ssub.s32 %s9, 2
    %s25 = sadd.s32 1, %s18
    %p26 = scmp.ge.s32.totalorder %s25, 1
    %s27 = scalar_select %p26, 0, %s25
    %s28 = sadd.s32 1, %s17
    %s29 = scalar_select %p26, %s28, %s17
    %p30 = scmp.ge.s32.totalorder %s29, 1
    %s31 = scalar_select %p30, 0, %s29
    %s32 = sadd.s32 1, %s16
    %s33 = scalar_select %p30, %s32, %s16
    %p34 = scmp.ge.s32.totalorder %s33, 2
    %s35 = scalar_select %p34, 0, %s33
    %s36 = ssub.s32 %s16, %s35
    %s37 = ssub.s32 %s17, %s31
    %s38 = sor.u32 %s36, %s37
    %p39 = scmp.eq.s32.totalorder %s38, 0
    %s41 = sadd.s32 %s40, 1
    %s42 = scalar_select %p39, %s40, %s41
    %p45 = pneg %p39
    %p46 = scmp.eq.s32.totalorder %s9, 1
    %p47 = por %p45, %p46
    %p48 = scmp.ne.s32.totalorder %s40, %s43
    %p49 = scmp.eq.s32.totalorder %s9, 0
    %p50 = por %p48, %p49
    %p51 = scmp.ne.s32.totalorder %s40, %s43
    %p52 = scmp.eq.s32.totalorder %s14, 1
    %p53 = por %p51, %p52
    %p54 = scmp.ne.s32.totalorder %s43, %s44
    %p55 = scmp.eq.s32.totalorder %s14, 0
    %p56 = por %p54, %p55
    %p57 = scmp.ne.s32.totalorder %s43, %s44
    %p58 = scmp.eq.s32.totalorder %s15, 1
    %p59 = por %p57, %p58
    %p61 = scmp.ne.s32.totalorder %s44, %s60
    %p62 = scmp.eq.s32.totalorder %s15, 0
    %p63 = por %p61, %p62
    %s64 = ssub.s32 %s16, %s35
    %s65 = ssub.s32 %s18, %s27
    %s66 = sor.u32 %s64, %s65
    %p67 = scmp.eq.s32.totalorder %s66, 0
    %s69 = sadd.s32 %s68, 1
    %s70 = scalar_select %p67, %s68, %s69
    %p73 = pneg %p67
    %p74 = scmp.eq.s32.totalorder %s9, 1
    %p75 = por %p73, %p74
    %p76 = scmp.ne.s32.totalorder %s68, %s71
    %p77 = scmp.eq.s32.totalorder %s9, 0
    %p78 = por %p76, %p77
    %p79 = scmp.ne.s32.totalorder %s68, %s71
    %p80 = scmp.eq.s32.totalorder %s14, 1
    %p81 = por %p79, %p80
    %p82 = scmp.ne.s32.totalorder %s71, %s72
    %p83 = scmp.eq.s32.totalorder %s14, 0
    %p84 = por %p82, %p83
    %p85 = scmp.ne.s32.totalorder %s71, %s72
    %p86 = scmp.eq.s32.totalorder %s15, 1
    %p87 = por %p85, %p86
    %p89 = scmp.ne.s32.totalorder %s72, %s88
    %p90 = scmp.eq.s32.totalorder %s15, 0
    %p91 = por %p89, %p90
    %s92 = ssub.s32 %s16, %s35
    %s93 = ssub.s32 %s18, %s27
    %s94 = sor.u32 %s92, %s93
    %p95 = scmp.eq.s32.totalorder %s94, 0
    %s97 = sadd.s32 %s96, 1
    %s98 = scalar_select %p95, %s96, %s97
    %p101 = pneg %p95
    %p102 = scmp.eq.s32.totalorder %s9, 1
    %p103 = por %p101, %p102
    %p104 = scmp.ne.s32.totalorder %s96, %s99
    %p105 = scmp.eq.s32.totalorder %s9, 0
    %p106 = por %p104, %p105
    %p107 = scmp.ne.s32.totalorder %s96, %s99
    %p108 = scmp.eq.s32.totalorder %s14, 1
    %p109 = por %p107, %p108
    %p110 = scmp.ne.s32.totalorder %s99, %s100
    %p111 = scmp.eq.s32.totalorder %s14, 0
    %p112 = por %p110, %p111
    %p113 = scmp.ne.s32.totalorder %s99, %s100
    %p114 = scmp.eq.s32.totalorder %s15, 1
    %p115 = por %p113, %p114
    %p117 = scmp.ne.s32.totalorder %s100, %s116
    %p118 = scmp.eq.s32.totalorder %s15, 0
    %p119 = por %p117, %p118
    %s120 = ssub.s32 %s16, %s35
    %s121 = ssub.s32 %s17, %s31
    %s122 = sor.u32 %s120, %s121
    %p123 = scmp.eq.s32.totalorder %s122, 0
    %s125 = sadd.s32 %s124, 1
    %s126 = scalar_select %p123, %s124, %s125
    %p129 = pneg %p123
    %p130 = scmp.eq.s32.totalorder %s9, 1
    %p131 = por %p129, %p130
    %p132 = scmp.ne.s32.totalorder %s124, %s127
    %p133 = scmp.eq.s32.totalorder %s9, 0
    %p134 = por %p132, %p133
    %p135 = scmp.ne.s32.totalorder %s124, %s127
    %p136 = scmp.eq.s32.totalorder %s14, 1
    %p137 = por %p135, %p136
    %p138 = scmp.ne.s32.totalorder %s127, %s128
    %p139 = scmp.eq.s32.totalorder %s14, 0
    %p140 = por %p138, %p139
    %p141 = scmp.ne.s32.totalorder %s127, %s128
    %p142 = scmp.eq.s32.totalorder %s15, 1
    %p143 = por %p141, %p142
    %p145 = scmp.ne.s32.totalorder %s128, %s144
    %p146 = scmp.eq.s32.totalorder %s15, 0
    %p147 = por %p145, %p146
    %p148 = scmp.le.s32.totalorder 1, %s9
    %p149 = scmp.lt.s32.totalorder %s9, 3
    %p150 = pnand %p148, %p149
    %p151 = pneg %p150
    // Predicated region
    $region9: #{transformer_captioning_forward.32} parent=5 // pred_check
      _
    $region10: #{transformer_captioning_forward.32} parent=5 // pred_check_branch
      %153 = sbr.rel (%p150) target = $region12
    $region11: #{transformer_captioning_forward.32} parent=5 // pred_region
      %s154 = ssub.s32 %s9, 1
    $region12: #{transformer_captioning_forward.32} parent=5 // pred_fallthru
      _
    %p155 = scmp.lt.s32.totalorder %s9, 2
    // Predicated region
    $region13: #{transformer_captioning_forward.32} parent=5 // pred_check
      %p156 = pneg %p155
    $region14: #{transformer_captioning_forward.32} parent=5 // pred_check_branch
      %158 = sbr.rel (%p156) target = $region16
    $region15: #{transformer_captioning_forward.32} parent=5 // pred_region
      // Predicated region
      $region17: #{transformer_captioning_forward.32} parent=15 // pred_check
        %p159 = pneg %p50
      $region18: #{transformer_captioning_forward.32} parent=15 // pred_check_branch
        %161 = sbr.rel (%p159) target = $region20
      $region19: #{transformer_captioning_forward.32} parent=15 // pred_region
        %p162 = scmp.lt.s32.totalorder %s16, 1
        %s163 = scalar_select %p162, %s16, 1
        %p164 = scmp.lt.s32.totalorder %s17, 0
        %s165 = scalar_select %p164, %s17, 0
        %s166 = sadd.s32 %s165, %s163
        %s167 = smul.addr %s166, 4
        %s168 = scalar_lea.vmem %s0, %s167
      $region20: #{transformer_captioning_forward.32} parent=15 // pred_fallthru
        _
      // Predicated region
      $region21: #{transformer_captioning_forward.32} parent=15 // pred_check
        %p169 = pneg %p78
      $region22: #{transformer_captioning_forward.32} parent=15 // pred_check_branch
        %171 = sbr.rel (%p169) target = $region24
      $region23: #{transformer_captioning_forward.32} parent=15 // pred_region
        %p172 = scmp.lt.s32.totalorder %s16, 1
        %s173 = scalar_select %p172, %s16, 1
        %p174 = scmp.lt.s32.totalorder %s18, 0
        %s175 = scalar_select %p174, %s18, 0
        %s176 = sadd.s32 %s175, %s173
        %s177 = smul.addr %s176, 4
        %s178 = scalar_lea.vmem %s1, %s177
      $region24: #{transformer_captioning_forward.32} parent=15 // pred_fallthru
        _
      // Predicated region
      $region25: #{transformer_captioning_forward.32} parent=15 // pred_check
        %p179 = pneg %p106
      $region26: #{transformer_captioning_forward.32} parent=15 // pred_check_branch
        %181 = sbr.rel (%p179) target = $region28
      $region27: #{transformer_captioning_forward.32} parent=15 // pred_region
        %p182 = scmp.lt.s32.totalorder %s16, 1
        %s183 = scalar_select %p182, %s16, 1
        %p184 = scmp.lt.s32.totalorder %s18, 0
        %s185 = scalar_select %p184, %s18, 0
        %s186 = sadd.s32 %s185, %s183
        %s187 = smul.addr %s186, 4
        %s188 = scalar_lea.vmem %s2, %s187
      $region28: #{transformer_captioning_forward.32} parent=15 // pred_fallthru
        _
    $region16: #{transformer_captioning_forward.32} parent=5 // pred_fallthru
      _
    %p189 = scmp.le.s32.totalorder 1, %s9
    %p190 = scmp.lt.s32.totalorder %s9, 3
    %p191 = pnand %p189, %p190
    %p192 = pneg %p191
    // Predicated region
    $region29: #{transformer_captioning_forward.32} parent=5 // pred_check
      _
    $region30: #{transformer_captioning_forward.32} parent=5 // pred_check_branch
      %194 = sbr.rel (%p191) target = $region32
    $region31: #{transformer_captioning_forward.32} parent=5 // pred_region
      %s195 = ssub.s32 %s9, 1
      %p196 = scmp.lt.s32.totalorder %s19, 1
      %s197 = scalar_select %p196, %s19, 1
      %p198 = scmp.lt.s32.totalorder %s20, 0
      %s199 = scalar_select %p198, %s20, 0
      %s200 = sadd.s32 %s199, %s197
      %s201 = smul.addr %s200, 4
      %s202 = scalar_lea.vmem %s0, %s201
      %p203 = pneg %p56
      %p204 = pneg %p53
      %p205 = scmp.lt.s32.totalorder %s19, 1
      %s206 = scalar_select %p205, %s19, 1
      %p207 = scmp.lt.s32.totalorder %s21, 0
      %s208 = scalar_select %p207, %s21, 0
      %s209 = sadd.s32 %s208, %s206
      %s210 = smul.addr %s209, 4
      %s211 = scalar_lea.vmem %s1, %s210
      %p212 = pneg %p84
      %p213 = pneg %p81
      %p214 = scmp.lt.s32.totalorder %s19, 1
      %s215 = scalar_select %p214, %s19, 1
      %p216 = scmp.lt.s32.totalorder %s21, 0
      %s217 = scalar_select %p216, %s21, 0
      %s218 = sadd.s32 %s217, %s215
      %s219 = smul.addr %s218, 4
      %s220 = scalar_lea.vmem %s2, %s219
      %p221 = pneg %p112
      %p222 = pneg %p109
      %p223 = pneg %p140
      %p224 = pneg %p137
      %p225 = scmp.lt.s32.totalorder %s19, 1
      %s226 = scalar_select %p225, %s19, 1
      %p227 = scmp.lt.s32.totalorder %s20, 0
      %s228 = scalar_select %p227, %s20, 0
      %s229 = sadd.s32 %s228, %s226
      %s230 = smul.addr %s229, 4
      %s231 = scalar_lea.vmem %s3, %s230
      %p232 = scmp.lt.s32.totalorder %s19, 1
      %s233 = scalar_select %p232, %s19, 1
      %p234 = scmp.lt.s32.totalorder %s20, 0
      %s235 = scalar_select %p234, %s20, 0
      %s236 = sadd.s32 %s235, %s233
      %s237 = smul.addr %s236, 4
      %s238 = scalar_lea.vmem %s0, %s237
      %p239 = scmp.lt.s32.totalorder %s19, 1
      %s240 = scalar_select %p239, %s19, 1
      %p241 = scmp.lt.s32.totalorder %s21, 0
      %s242 = scalar_select %p241, %s21, 0
      %s243 = sadd.s32 %s242, %s240
      %s244 = smul.addr %s243, 4
      %s245 = scalar_lea.vmem %s1, %s244
      %p246 = scmp.lt.s32.totalorder %s19, 1
      %s247 = scalar_select %p246, %s19, 1
      %p248 = scmp.lt.s32.totalorder %s21, 0
      %s249 = scalar_select %p248, %s21, 0
      %s250 = sadd.s32 %s249, %s247
      %s251 = smul.addr %s250, 4
      %s252 = scalar_lea.vmem %s2, %s251
      %p253 = scmp.lt.s32.totalorder %s19, 1
      %s254 = scalar_select %p253, %s19, 1
      %p255 = scmp.lt.s32.totalorder %s20, 0
      %s256 = scalar_select %p255, %s20, 0
      %s257 = sadd.s32 %s256, %s254
      %s258 = smul.addr %s257, 4
      %s259 = scalar_lea.vmem %s3, %s258
      %p261 = scmp.eq.s32.totalorder %s21, 0
      // Predicated region
      $region33: #{transformer_captioning_forward.32} parent=31 // pred_check
        %p262 = pneg %p261
      $region34: #{transformer_captioning_forward.32} parent=31 // pred_check_branch
        %264 = sbr.rel (%p262) target = $region36
      $region35: #{transformer_captioning_forward.32} parent=31 // pred_region
        %vm265 = vcmask 7168
        %266 = vst.msk [vmem:[#allocation2] sm:$0xff] %vm265, -inf
        %267 = vst.msk [vmem:[#allocation2 + $0x8] sm:$0xff] %vm265, -inf
        %268 = vst.msk [vmem:[#allocation2 + $0x10] sm:$0xff] %vm265, -inf
        %269 = vst.msk [vmem:[#allocation2 + $0x18] sm:$0xff] %vm265, -inf
        %270 = vst.msk [vmem:[#allocation3] sm:$0xff] %vm265, 0.0
        %271 = vst.msk [vmem:[#allocation3 + $0x8] sm:$0xff] %vm265, 0.0
        %272 = vst.msk [vmem:[#allocation3 + $0x10] sm:$0xff] %vm265, 0.0
        %273 = vst.msk [vmem:[#allocation3 + $0x18] sm:$0xff] %vm265, 0.0
        %vm274 = vcmask 64512
        %275 = vst.msk [vmem:[#allocation4] sm:$0xff] %vm274, 0.0
        %276 = vst.msk [vmem:[#allocation4 + $0x8] sm:$0xff] %vm274, 0.0
        %277 = vst.msk [vmem:[#allocation4 + $0x10] sm:$0xff] %vm274, 0.0
        %278 = vst.msk [vmem:[#allocation4 + $0x18] sm:$0xff] %vm274, 0.0
      $region36: #{transformer_captioning_forward.32} parent=31 // pred_fallthru
        _
      %v279 = vld [vmem:[%s238] sm:$0xf]
      %v280 = vld [vmem:[%s245] sm:$0xf]
      %v281 = vld [vmem:[%s252] sm:$0xf]
      %vm282 = vcmask 64512
      %v284 = vsel %vm282, %v279, 0
      %v287 = vsel %vm282, %v280, 0
      %289 = vmatpush.bf16.xpose.msra.mxu0 0
      %290 = vmatpush.bf16.xpose.msra.mxu0 0
      %291 = vmatpush.bf16.xpose.msra.mxu0 0
      %292 = vmatpush.bf16.xpose.msra.mxu0 0
      %293 = vmatpush.bf16.xpose.msra.mxu0 0
      %294 = vmatpush.bf16.xpose.msra.mxu0 0
      %295 = vmatpush.bf16.xpose.msra.mxu0 0
      %296 = vmatpush.bf16.xpose.msra.mxu0 %v287
      %297 = vmatmul.bf16.gmra.mxu0 %v284
      %v298 = vpop.f32.mrf.mxu0
      %v299 = vadd.f32 0.0, %v298
      %v300 = vpop.f32.mrf.mxu0
      %301 = vdwg.mxu0
      %v302 = vmul.f32 %v299, 0.35355338
      %v303 = vld [vmem:[#allocation2] sm:$0xff]
      %v304 = vsel %vm282, %v302, -inf
      %305 = vmax.xlane.f32.xlu0 %v304
      %v306 = vpop.xlane.xlu0 %305
      %v307 = vmax.f32 %v303, %v306
      %v308 = vsub.f32 %v303, %v307
      %v309 = vmul.f32 %v308, 1.442695
      %v310 = vpow.pop %v309
      %312 = vset.pattern.permute.xlu0 0
      %313 = vperm.xlu0 %312, %v307
      %v314 = vpop.permute.xlu0 %313
      %v316 = vsub.f32 %v302, %v314
      %v317 = vmul.f32 %v316, 1.442695
      %v318 = vpow.pop %v317
      %v319 = vld [vmem:[#allocation3] sm:$0xff]
      %v320 = vmul.f32 %v310, %v319
      %v321 = vsel %vm282, %v318, 0.0
      %322 = vadd.xlane.f32.xlu0 %v321
      %v323 = vpop.xlane.xlu0 %322
      %v324 = vadd.f32 %v320, %v323
      %vm325 = vcmask 7168
      %326 = vst.msk [vmem:[#allocation3] sm:$0xff] %vm325, %v324
      %v327 = vld [vmem:[#allocation4] sm:$0xff]
      %329 = vset.pattern.permute.xlu0 0
      %330 = vperm.xlu0 %329, %v310
      %v331 = vpop.permute.xlu0 %330
      %v333 = vmul.f32 %v331, %v327
      %v334 = vpack.c.bf16 %v318, %v318
      %v336 = vsel %vm282, %v334, 0
      %vm338 = vcmask 1043456
      %v340 = vsel %vm338, %v281, 0
      %342 = vmatpush.bf16.msra.mxu0 0
      %343 = vmatpush.bf16.msra.mxu0 0
      %344 = vmatpush.bf16.msra.mxu0 0
      %345 = vmatpush.bf16.msra.mxu0 0
      %346 = vmatpush.bf16.msra.mxu0 0
      %347 = vmatpush.bf16.msra.mxu0 0
      %348 = vmatpush.bf16.msra.mxu0 0
      %349 = vmatpush.bf16.msra.mxu0 %v340
      %350 = vmatmul.bf16.gmra.mxu0 %v336
      %v351 = vpop.f32.mrf.mxu0
      %v352 = vadd.f32 0.0, %v351
      %v353 = vpop.f32.mrf.mxu0
      %354 = vdwg.mxu0
      %v355 = vadd.f32 %v333, %v352
      %356 = vst.msk [vmem:[#allocation4] sm:$0xff] %vm282, %v355
      %357 = vst.msk [vmem:[#allocation2] sm:$0xff] %vm325, %v307
      %v359 = vunpack.c.l.b16 %v279
      %v360 = vpack.c.b16 %v359, %v359
      %361 = vrot.lane.b32.xlu0 %v360, 120
      %v362 = vpop.permute.xlu0 %361
      %v364 = vunpack.c.l.b16 %v280
      %v365 = vpack.c.b16 %v364, %v364
      %366 = vrot.lane.b32.xlu0 %v365, 120
      %v367 = vpop.permute.xlu0 %366
      %v369 = vsel %vm282, %v362, 0
      %v372 = vsel %vm282, %v367, 0
      %374 = vmatpush.bf16.xpose.msra.mxu0 0
      %375 = vmatpush.bf16.xpose.msra.mxu0 0
      %376 = vmatpush.bf16.xpose.msra.mxu0 0
      %377 = vmatpush.bf16.xpose.msra.mxu0 0
      %378 = vmatpush.bf16.xpose.msra.mxu0 0
      %379 = vmatpush.bf16.xpose.msra.mxu0 0
      %380 = vmatpush.bf16.xpose.msra.mxu0 0
      %381 = vmatpush.bf16.xpose.msra.mxu0 %v372
      %382 = vmatmul.bf16.gmra.mxu0 %v369
      %v383 = vpop.f32.mrf.mxu0
      %v384 = vadd.f32 0.0, %v383
      %v385 = vpop.f32.mrf.mxu0
      %386 = vdwg.mxu0
      %v387 = vmul.f32 %v384, 0.35355338
      %s388 = scalar_lea.vmem [#allocation2], 8
      %v389 = vld [vmem:[%s388] sm:$0xff]
      %v390 = vsel %vm282, %v387, -inf
      %391 = vmax.xlane.f32.xlu0 %v390
      %v392 = vpop.xlane.xlu0 %391
      %v393 = vmax.f32 %v389, %v392
      %v394 = vsub.f32 %v389, %v393
      %v395 = vmul.f32 %v394, 1.442695
      %v396 = vpow.pop %v395
      %398 = vset.pattern.permute.xlu0 0
      %399 = vperm.xlu0 %398, %v393
      %v400 = vpop.permute.xlu0 %399
      %v402 = vsub.f32 %v387, %v400
      %v403 = vmul.f32 %v402, 1.442695
      %v404 = vpow.pop %v403
      %s405 = scalar_lea.vmem [#allocation3], 8
      %v406 = vld [vmem:[%s405] sm:$0xff]
      %v407 = vmul.f32 %v396, %v406
      %v408 = vsel %vm282, %v404, 0.0
      %409 = vadd.xlane.f32.xlu0 %v408
      %v410 = vpop.xlane.xlu0 %409
      %v411 = vadd.f32 %v407, %v410
      %412 = vst.msk [vmem:[%s405] sm:$0xff] %vm325, %v411
      %s413 = scalar_lea.vmem [#allocation4], 8
      %v414 = vld [vmem:[%s413] sm:$0xff]
      %416 = vset.pattern.permute.xlu0 0
      %417 = vperm.xlu0 %416, %v396
      %v418 = vpop.permute.xlu0 %417
      %v420 = vmul.f32 %v418, %v414
      %v421 = vpack.c.bf16 %v404, %v404
      %v423 = vunpack.c.l.b16 %v281
      %v424 = vpack.c.b16 %v423, %v423
      %425 = vrot.lane.b32.xlu0 %v424, 120
      %v426 = vpop.permute.xlu0 %425
      %v428 = vsel %vm282, %v421, 0
      %v431 = vsel %vm338, %v426, 0
      %433 = vmatpush.bf16.msra.mxu0 0
      %434 = vmatpush.bf16.msra.mxu0 0
      %435 = vmatpush.bf16.msra.mxu0 0
      %436 = vmatpush.bf16.msra.mxu0 0
      %437 = vmatpush.bf16.msra.mxu0 0
      %438 = vmatpush.bf16.msra.mxu0 0
      %439 = vmatpush.bf16.msra.mxu0 0
      %440 = vmatpush.bf16.msra.mxu0 %v431
      %441 = vmatmul.bf16.gmra.mxu0 %v428
      %v442 = vpop.f32.mrf.mxu0
      %v443 = vadd.f32 0.0, %v442
      %v444 = vpop.f32.mrf.mxu0
      %445 = vdwg.mxu0
      %v446 = vadd.f32 %v420, %v443
      %447 = vst.msk [vmem:[%s413] sm:$0xff] %vm282, %v446
      %448 = vst.msk [vmem:[%s388] sm:$0xff] %vm325, %v393
      %449 = vrot.lane.b32.xlu0 %v360, 112
      %v450 = vpop.permute.xlu0 %449
      %451 = vrot.lane.b32.xlu0 %v365, 112
      %v452 = vpop.permute.xlu0 %451
      %v454 = vsel %vm282, %v450, 0
      %v457 = vsel %vm282, %v452, 0
      %459 = vmatpush.bf16.xpose.msra.mxu0 0
      %460 = vmatpush.bf16.xpose.msra.mxu0 0
      %461 = vmatpush.bf16.xpose.msra.mxu0 0
      %462 = vmatpush.bf16.xpose.msra.mxu0 0
      %463 = vmatpush.bf16.xpose.msra.mxu0 0
      %464 = vmatpush.bf16.xpose.msra.mxu0 0
      %465 = vmatpush.bf16.xpose.msra.mxu0 0
      %466 = vmatpush.bf16.xpose.msra.mxu0 %v457
      %467 = vmatmul.bf16.gmra.mxu0 %v454
      %v468 = vpop.f32.mrf.mxu0
      %v469 = vadd.f32 0.0, %v468
      %v470 = vpop.f32.mrf.mxu0
      %471 = vdwg.mxu0
      %v472 = vmul.f32 %v469, 0.35355338
      %s473 = scalar_lea.vmem [#allocation2], 16
      %v474 = vld [vmem:[%s473] sm:$0xff]
      %v475 = vsel %vm282, %v472, -inf
      %476 = vmax.xlane.f32.xlu0 %v475
      %v477 = vpop.xlane.xlu0 %476
      %v478 = vmax.f32 %v474, %v477
      %v479 = vsub.f32 %v474, %v478
      %v480 = vmul.f32 %v479, 1.442695
      %v481 = vpow.pop %v480
      %483 = vset.pattern.permute.xlu0 0
      %484 = vperm.xlu0 %483, %v478
      %v485 = vpop.permute.xlu0 %484
      %v487 = vsub.f32 %v472, %v485
      %v488 = vmul.f32 %v487, 1.442695
      %v489 = vpow.pop %v488
      %s490 = scalar_lea.vmem [#allocation3], 16
      %v491 = vld [vmem:[%s490] sm:$0xff]
      %v492 = vmul.f32 %v481, %v491
      %v493 = vsel %vm282, %v489, 0.0
      %494 = vadd.xlane.f32.xlu0 %v493
      %v495 = vpop.xlane.xlu0 %494
      %v496 = vadd.f32 %v492, %v495
      %497 = vst.msk [vmem:[%s490] sm:$0xff] %vm325, %v496
      %s498 = scalar_lea.vmem [#allocation4], 16
      %v499 = vld [vmem:[%s498] sm:$0xff]
      %501 = vset.pattern.permute.xlu0 0
      %502 = vperm.xlu0 %501, %v481
      %v503 = vpop.permute.xlu0 %502
      %v505 = vmul.f32 %v503, %v499
      %v506 = vpack.c.bf16 %v489, %v489
      %507 = vrot.lane.b32.xlu0 %v424, 112
      %v508 = vpop.permute.xlu0 %507
      %v510 = vsel %vm282, %v506, 0
      %v513 = vsel %vm338, %v508, 0
      %515 = vmatpush.bf16.msra.mxu0 0
      %516 = vmatpush.bf16.msra.mxu0 0
      %517 = vmatpush.bf16.msra.mxu0 0
      %518 = vmatpush.bf16.msra.mxu0 0
      %519 = vmatpush.bf16.msra.mxu0 0
      %520 = vmatpush.bf16.msra.mxu0 0
      %521 = vmatpush.bf16.msra.mxu0 0
      %522 = vmatpush.bf16.msra.mxu0 %v513
      %523 = vmatmul.bf16.gmra.mxu0 %v510
      %v524 = vpop.f32.mrf.mxu0
      %v525 = vadd.f32 0.0, %v524
      %v526 = vpop.f32.mrf.mxu0
      %527 = vdwg.mxu0
      %v528 = vadd.f32 %v505, %v525
      %529 = vst.msk [vmem:[%s498] sm:$0xff] %vm282, %v528
      %530 = vst.msk [vmem:[%s473] sm:$0xff] %vm325, %v478
      %531 = vrot.lane.b32.xlu0 %v360, 104
      %v532 = vpop.permute.xlu0 %531
      %533 = vrot.lane.b32.xlu0 %v365, 104
      %v534 = vpop.permute.xlu0 %533
      %v536 = vsel %vm282, %v532, 0
      %v539 = vsel %vm282, %v534, 0
      %541 = vmatpush.bf16.xpose.msra.mxu0 0
      %542 = vmatpush.bf16.xpose.msra.mxu0 0
      %543 = vmatpush.bf16.xpose.msra.mxu0 0
      %544 = vmatpush.bf16.xpose.msra.mxu0 0
      %545 = vmatpush.bf16.xpose.msra.mxu0 0
      %546 = vmatpush.bf16.xpose.msra.mxu0 0
      %547 = vmatpush.bf16.xpose.msra.mxu0 0
      %548 = vmatpush.bf16.xpose.msra.mxu0 %v539
      %549 = vmatmul.bf16.gmra.mxu0 %v536
      %v550 = vpop.f32.mrf.mxu0
      %v551 = vadd.f32 0.0, %v550
      %v552 = vpop.f32.mrf.mxu0
      %553 = vdwg.mxu0
      %v554 = vmul.f32 %v551, 0.35355338
      %s555 = scalar_lea.vmem [#allocation2], 24
      %v556 = vld [vmem:[%s555] sm:$0xff]
      %v557 = vsel %vm282, %v554, -inf
      %558 = vmax.xlane.f32.xlu0 %v557
      %v559 = vpop.xlane.xlu0 %558
      %v560 = vmax.f32 %v556, %v559
      %v561 = vsub.f32 %v556, %v560
      %v562 = vmul.f32 %v561, 1.442695
      %v563 = vpow.pop %v562
      %565 = vset.pattern.permute.xlu0 0
      %566 = vperm.xlu0 %565, %v560
      %v567 = vpop.permute.xlu0 %566
      %v569 = vsub.f32 %v554, %v567
      %v570 = vmul.f32 %v569, 1.442695
      %v571 = vpow.pop %v570
      %s572 = scalar_lea.vmem [#allocation3], 24
      %v573 = vld [vmem:[%s572] sm:$0xff]
      %v574 = vmul.f32 %v563, %v573
      %v575 = vsel %vm282, %v571, 0.0
      %576 = vadd.xlane.f32.xlu0 %v575
      %v577 = vpop.xlane.xlu0 %576
      %v578 = vadd.f32 %v574, %v577
      %579 = vst.msk [vmem:[%s572] sm:$0xff] %vm325, %v578
      %s580 = scalar_lea.vmem [#allocation4], 24
      %v581 = vld [vmem:[%s580] sm:$0xff]
      %583 = vset.pattern.permute.xlu0 0
      %584 = vperm.xlu0 %583, %v563
      %v585 = vpop.permute.xlu0 %584
      %v587 = vmul.f32 %v585, %v581
      %v588 = vpack.c.bf16 %v571, %v571
      %589 = vrot.lane.b32.xlu0 %v424, 104
      %v590 = vpop.permute.xlu0 %589
      %v592 = vsel %vm282, %v588, 0
      %v595 = vsel %vm338, %v590, 0
      %597 = vmatpush.bf16.msra.mxu0 0
      %598 = vmatpush.bf16.msra.mxu0 0
      %599 = vmatpush.bf16.msra.mxu0 0
      %600 = vmatpush.bf16.msra.mxu0 0
      %601 = vmatpush.bf16.msra.mxu0 0
      %602 = vmatpush.bf16.msra.mxu0 0
      %603 = vmatpush.bf16.msra.mxu0 0
      %604 = vmatpush.bf16.msra.mxu0 %v595
      %605 = vmatmul.bf16.gmra.mxu0 %v592
      %v606 = vpop.f32.mrf.mxu0
      %v607 = vadd.f32 0.0, %v606
      %v608 = vpop.f32.mrf.mxu0
      %609 = vdwg.mxu0
      %v610 = vadd.f32 %v587, %v607
      %611 = vst.msk [vmem:[%s580] sm:$0xff] %vm282, %v610
      %612 = vst.msk [vmem:[%s555] sm:$0xff] %vm325, %v560
      // Predicated region
      $region37: #{transformer_captioning_forward.32} parent=31 // pred_check
        %p613 = pneg %p261
      $region38: #{transformer_captioning_forward.32} parent=31 // pred_check_branch
        %615 = sbr.rel (%p613) target = $region40
      $region39: #{transformer_captioning_forward.32} parent=31 // pred_region
        %v616 = vld [vmem:[#allocation3] sm:$0xff]
        %v617 = vrcp.pop %v616
        %v618 = vld [vmem:[#allocation4] sm:$0xff]
        %620 = vset.pattern.permute.xlu0 0
        %621 = vperm.xlu0 %620, %v617
        %v622 = vpop.permute.xlu0 %621
        %v624 = vmul.f32 %v618, %v622
        %v625 = vpack.c.bf16 %v624, %v624
        %vm626 = vcmask 60416
        %627 = vst.msk [vmem:[%s259] sm:$0xf] %vm626, %v625
        %v628 = vld [vmem:[%s405] sm:$0xff]
        %v629 = vrcp.pop %v628
        %v630 = vld [vmem:[%s413] sm:$0xff]
        %632 = vset.pattern.permute.xlu0 0
        %633 = vperm.xlu0 %632, %v629
        %v634 = vpop.permute.xlu0 %633
        %v636 = vmul.f32 %v630, %v634
        %v637 = vpack.c.bf16 %v636, %v636
        %639 = vrot.lane.b32.xlu0 %v637, 8
        %v640 = vpop.permute.xlu0 %639
        %vm642 = vcmask 126016
        %643 = vst.msk [vmem:[%s259] sm:$0xf] %vm642, %v640
        %v644 = vld [vmem:[%s490] sm:$0xff]
        %v645 = vrcp.pop %v644
        %v646 = vld [vmem:[%s498] sm:$0xff]
        %648 = vset.pattern.permute.xlu0 0
        %649 = vperm.xlu0 %648, %v645
        %v650 = vpop.permute.xlu0 %649
        %v652 = vmul.f32 %v646, %v650
        %v653 = vpack.c.bf16 %v652, %v652
        %655 = vrot.lane.b32.xlu0 %v653, 16
        %v656 = vpop.permute.xlu0 %655
        %vm658 = vcmask 191616
        %659 = vst.msk [vmem:[%s259] sm:$0xf] %vm658, %v656
        %v660 = vld [vmem:[%s572] sm:$0xff]
        %v661 = vrcp.pop %v660
        %v662 = vld [vmem:[%s580] sm:$0xff]
        %664 = vset.pattern.permute.xlu0 0
        %665 = vperm.xlu0 %664, %v661
        %v666 = vpop.permute.xlu0 %665
        %v668 = vmul.f32 %v662, %v666
        %v669 = vpack.c.bf16 %v668, %v668
        %671 = vrot.lane.b32.xlu0 %v669, 24
        %v672 = vpop.permute.xlu0 %671
        %vm674 = vcmask 257216
        %675 = vst.msk [vmem:[%s259] sm:$0xf] %vm674, %v672
      $region40: #{transformer_captioning_forward.32} parent=31 // pred_fallthru
        _
      %p676 = scmp.lt.s32.totalorder %s19, 1
      %s677 = scalar_select %p676, %s19, 1
      %p678 = scmp.lt.s32.totalorder %s20, 0
      %s679 = scalar_select %p678, %s20, 0
      %s680 = sadd.s32 %s679, %s677
      %s681 = smul.addr %s680, 4
      %s682 = scalar_lea.vmem %s3, %s681
      // Predicated region
      $region41: #{transformer_captioning_forward.32} parent=31 // pred_check
        %p683 = pneg %p137
      $region42: #{transformer_captioning_forward.32} parent=31 // pred_check_branch
        %685 = sbr.rel (%p683) target = $region44
      $region43: #{transformer_captioning_forward.32} parent=31 // pred_region
        _
      $region44: #{transformer_captioning_forward.32} parent=31 // pred_fallthru
        _
    $region32: #{transformer_captioning_forward.32} parent=5 // pred_fallthru
      _
    %p686 = scmp.le.s32.totalorder 2, %s9
    // Predicated region
    $region45: #{transformer_captioning_forward.32} parent=5 // pred_check
      %p687 = pneg %p686
    $region46: #{transformer_captioning_forward.32} parent=5 // pred_check_branch
      %689 = sbr.rel (%p687) target = $region48
    $region47: #{transformer_captioning_forward.32} parent=5 // pred_region
      %s690 = ssub.s32 %s9, 2
      // Predicated region
      $region49: #{transformer_captioning_forward.32} parent=47 // pred_check
        %p691 = pneg %p143
      $region50: #{transformer_captioning_forward.32} parent=47 // pred_check_branch
        %693 = sbr.rel (%p691) target = $region52
      $region51: #{transformer_captioning_forward.32} parent=47 // pred_region
        %p694 = scmp.lt.s32.totalorder %s22, 1
        %s695 = scalar_select %p694, %s22, 1
        %p696 = scmp.lt.s32.totalorder %s23, 0
        %s697 = scalar_select %p696, %s23, 0
        %s698 = sadd.s32 %s697, %s695
        %s699 = smul.addr %s698, 4
        %s700 = scalar_lea.vmem %s3, %s699
      $region52: #{transformer_captioning_forward.32} parent=47 // pred_fallthru
        _
    $region48: #{transformer_captioning_forward.32} parent=5 // pred_fallthru
      _
  $region6: #{transformer_captioning_forward.32} parent=0 // loop_footer
    %s13 = sadd.s32 1, %s9
  $region7: #{transformer_captioning_forward.32} parent=0 // loop_footer_branch
    %8 = sbr.rel target = $region3
  $region8: #{transformer_captioning_forward.32} parent=0 // loop_exit
    _

// kernel: transformer_captioning_forward.34
$region0: #{transformer_captioning_forward.34}
  #allocation0 [shape = 'u32[]', space=smem, size = 0x4, offset = 0x4, fixed_abs, tag = 'smem constant byte address 0x4 - core index']
  #allocation1 [shape = 'u32[72,128]{1,0:T(1,128)}', space=vmem, size = 0x9000, scoped, tag = 'internal scratch']
  #allocation2 [shape = 'f32[16,128]{1,0:T(8,128)}', space=vmem, size = 0x2000, scoped, tag = 'scratch operand']
  %s0 = inlined_call_operand.vmem [shape: bf16[16,128], index: 0, kind: input, shape index: {}]
  %s1 = inlined_call_operand.vmem [shape: bf16[128,128], index: 1, kind: input, shape index: {}]
  %s2 = inlined_call_operand.vmem [shape: f32[1,128], index: 2, kind: input, shape index: {}]
  %s3 = inlined_call_operand.vmem [shape: bf16[16,128], index: 3, kind: output, shape index: {}]
  %s4 = sld [smem:[#allocation0]]
  $region30: #{transformer_captioning_forward.34} parent=0
    _
  %s6 = ssub.s32 1, %s4
  %s7 = scalar_select 0, %s6, %s4
  // Predicated region
  $region2: #{transformer_captioning_forward.34} parent=0 // pred_check
    _
  $region3: #{transformer_captioning_forward.34} parent=0 // pred_check_branch
    %9 = sbr.rel (0) target = $region5
  $region4: #{transformer_captioning_forward.34} parent=0 // pred_region
    _
  $region5: #{transformer_captioning_forward.34} parent=0 // pred_fallthru
    _
  // Predicated region
  $region6: #{transformer_captioning_forward.34} parent=0 // pred_check
    _
  $region7: #{transformer_captioning_forward.34} parent=0 // pred_check_branch
    %11 = sbr.rel (0) target = $region9
  $region8: #{transformer_captioning_forward.34} parent=0 // pred_region
    _
  $region9: #{transformer_captioning_forward.34} parent=0 // pred_fallthru
    _
  // Predicated region
  $region10: #{transformer_captioning_forward.34} parent=0 // pred_check
    _
  $region11: #{transformer_captioning_forward.34} parent=0 // pred_check_branch
    %13 = sbr.rel (0) target = $region13
  $region12: #{transformer_captioning_forward.34} parent=0 // pred_region
    _
  $region13: #{transformer_captioning_forward.34} parent=0 // pred_fallthru
    _
  %p14 = scmp.eq.s32.totalorder 0, 0
  // Predicated region
  $region14: #{transformer_captioning_forward.34} parent=0 // pred_check
    %p15 = pneg %p14
  $region15: #{transformer_captioning_forward.34} parent=0 // pred_check_branch
    %17 = sbr.rel (%p15) target = $region17
  $region16: #{transformer_captioning_forward.34} parent=0 // pred_region
    %18 = vst [vmem:[#allocation2] sm:$0xff] 0.0
    %19 = vst [vmem:[#allocation2 + $0x8] sm:$0xff] 0.0
  $region17: #{transformer_captioning_forward.34} parent=0 // pred_fallthru
    _
  %v20 = vld [vmem:[#allocation2] sm:$0xff]
  %v21 = vld [vmem:[#allocation2 + $0x8] sm:$0xff]
  %v22 = vld [vmem:[%s0] sm:$0xf]
  %v23 = vld [vmem:[%s0 + $0x4] sm:$0xf]
  %v24 = vld [vmem:[%s1] sm:$0xf]
  %v25 = vld [vmem:[%s1 + $0x4] sm:$0xf]
  %v26 = vld [vmem:[%s1 + $0x8] sm:$0xf]
  %v27 = vld [vmem:[%s1 + $0xc] sm:$0xf]
  %v28 = vld [vmem:[%s1 + $0x10] sm:$0xf]
  %v29 = vld [vmem:[%s1 + $0x14] sm:$0xf]
  %v30 = vld [vmem:[%s1 + $0x18] sm:$0xf]
  %v31 = vld [vmem:[%s1 + $0x1c] sm:$0xf]
  %v32 = vld [vmem:[%s1 + $0x20] sm:$0xf]
  %v33 = vld [vmem:[%s1 + $0x24] sm:$0xf]
  %v34 = vld [vmem:[%s1 + $0x28] sm:$0xf]
  %v35 = vld [vmem:[%s1 + $0x2c] sm:$0xf]
  %v36 = vld [vmem:[%s1 + $0x30] sm:$0xf]
  %v37 = vld [vmem:[%s1 + $0x34] sm:$0xf]
  %v38 = vld [vmem:[%s1 + $0x38] sm:$0xf]
  %v39 = vld [vmem:[%s1 + $0x3c] sm:$0xf]
  %v42 = vunpack.c.l.b16 %v22
  %v43 = vunpack.c.l.b16 %v23
  %v44 = vpack.c.b16 %v43, %v42
  %v62 = vunpack.c.l.b16 %v24
  %v63 = vunpack.c.l.b16 %v25
  %v64 = vunpack.c.l.b16 %v26
  %v65 = vunpack.c.l.b16 %v27
  %v66 = vunpack.c.l.b16 %v28
  %v67 = vunpack.c.l.b16 %v29
  %v68 = vunpack.c.l.b16 %v30
  %v69 = vunpack.c.l.b16 %v31
  %v70 = vunpack.c.l.b16 %v32
  %v71 = vunpack.c.l.b16 %v33
  %v72 = vunpack.c.l.b16 %v34
  %v73 = vunpack.c.l.b16 %v35
  %v74 = vunpack.c.l.b16 %v36
  %v75 = vunpack.c.l.b16 %v37
  %v76 = vunpack.c.l.b16 %v38
  %v77 = vunpack.c.l.b16 %v39
  %v78 = vpack.c.b16 %v63, %v62
  %v79 = vpack.c.b16 %v65, %v64
  %v80 = vpack.c.b16 %v67, %v66
  %v81 = vpack.c.b16 %v69, %v68
  %v82 = vpack.c.b16 %v71, %v70
  %v83 = vpack.c.b16 %v73, %v72
  %v84 = vpack.c.b16 %v75, %v74
  %v85 = vpack.c.b16 %v77, %v76
  %94 = vmatpush.bf16.msra.mxu0 %v85
  %95 = vmatpush.bf16.msra.mxu0 %v84
  %96 = vmatpush.bf16.msra.mxu0 %v83
  %97 = vmatpush.bf16.msra.mxu0 %v82
  %98 = vmatpush.bf16.msra.mxu0 %v81
  %99 = vmatpush.bf16.msra.mxu0 %v80
  %100 = vmatpush.bf16.msra.mxu0 %v79
  %101 = vmatpush.bf16.msra.mxu0 %v78
  %102 = vmatmul.bf16.gmra.mxu0 %v44
  %v103 = vpop.f32.mrf.mxu0
  %v104 = vadd.f32 0.0, %v103
  %v105 = vpop.f32.mrf.mxu0
  %v106 = vadd.f32 0.0, %v105
  %107 = vdwg.mxu0
  %v108 = vadd.f32 %v20, %v104
  %v109 = vadd.f32 %v21, %v106
  %110 = vst [vmem:[#allocation2] sm:$0xff] %v108
  %111 = vst [vmem:[#allocation2 + $0x8] sm:$0xff] %v109
  // Predicated region
  $region18: #{transformer_captioning_forward.34} parent=0 // pred_check
    %p112 = pneg %p14
  $region19: #{transformer_captioning_forward.34} parent=0 // pred_check_branch
    %114 = sbr.rel (%p112) target = $region21
  $region20: #{transformer_captioning_forward.34} parent=0 // pred_region
    %v115 = vld [vmem:[#allocation2] sm:$0xff]
    %v116 = vld [vmem:[#allocation2 + $0x8] sm:$0xff]
    %v117 = vld [vmem:[%s2] sm:$0x1]
    %v119 = vperm.slane %v117, 0
    %v121 = vadd.f32 %v115, %v119
    %v122 = vadd.f32 %v116, %v119
    %v123 = vmax.f32 %v121, 0.0
    %v124 = vmax.f32 %v122, 0.0
    %v125 = vpack.c.bf16 %v123, %v123
    %v126 = vpack.c.bf16 %v124, %v124
    %127 = vst [vmem:[%s3] sm:$0xf] %v125
    %128 = vst [vmem:[%s3 + $0x4] sm:$0xf] %v126
  $region21: #{transformer_captioning_forward.34} parent=0 // pred_fallthru
    _
  // Predicated region
  $region22: #{transformer_captioning_forward.34} parent=0 // pred_check
    _
  $region23: #{transformer_captioning_forward.34} parent=0 // pred_check_branch
    %130 = sbr.rel (0) target = $region25
  $region24: #{transformer_captioning_forward.34} parent=0 // pred_region
    _
  $region25: #{transformer_captioning_forward.34} parent=0 // pred_fallthru
    _
  // Predicated region
  $region26: #{transformer_captioning_forward.34} parent=0 // pred_check
    _
  $region27: #{transformer_captioning_forward.34} parent=0 // pred_check_branch
    %132 = sbr.rel (0) target = $region29
  $region28: #{transformer_captioning_forward.34} parent=0 // pred_region
    _
  $region29: #{transformer_captioning_forward.34} parent=0 // pred_fallthru
    _

</llo_original>
